<compile_context>
chip_gen: v6e
topology: v6e:2x2x1
jax: 0.10.0
libtpu: 0.0.40
codegen_flags: <defaults>
</compile_context>

<pallas_src>
import functools

import numpy as np
import jax
import jax.numpy as jnp
from jax.experimental import pallas as pl
from jax.experimental.pallas import tpu as pltpu


def _round_up(x, m):
    return ((x + m - 1) // m) * m


def _full_spec(shape):
    """Whole-array block (grid=(1,)), so the (8,128) divisibility rule is waived."""
    n = len(shape)
    return pl.BlockSpec(shape, lambda *args: (0,) * n)


def _col(b):
    return b.reshape(-1, 1).astype(jnp.float32)


# ----------------------------------------------------------------------------
# Kernel 1: encoder MLP (points on lanes) + masked segment mean + latent head.
# ----------------------------------------------------------------------------
def _encoder_kernel(xy_ref, segw_ref,
                    w1_ref, b1_ref, w2_ref, b2_ref, w3_ref, b3_ref,
                    wl1_ref, bl1_ref, wmu_ref, bmu_ref, wsg_ref, bsg_ref,
                    mu_ref, sg_ref):
    f32 = jnp.float32
    x = xy_ref[...]                                                 # (Fp, Mp)
    h = jnp.dot(w1_ref[...], x, preferred_element_type=f32) + b1_ref[...]
    h = jnp.maximum(h, 0.0)
    h = jnp.dot(w2_ref[...], h, preferred_element_type=f32) + b2_ref[...]
    h = jnp.maximum(h, 0.0)
    r = jnp.dot(w3_ref[...], h, preferred_element_type=f32) + b3_ref[...]  # (enc_out, Mp)

    # Segmented mean over points: seg_w holds 1/count for each (point, segment)
    # pair and 0 for padded points, so padding is masked out of the mean.
    r_mean = jnp.dot(r, segw_ref[...], preferred_element_type=f32)  # (enc_out, n_seg)

    # Latent head (fused finalize).
    hl = jnp.dot(wl1_ref[...], r_mean, preferred_element_type=f32) + bl1_ref[...]
    hl = jnp.maximum(hl, 0.0)
    mu = jnp.dot(wmu_ref[...], hl, preferred_element_type=f32) + bmu_ref[...]
    pre = jnp.dot(wsg_ref[...], hl, preferred_element_type=f32) + bsg_ref[...]
    sig = 1.0 / (1.0 + jnp.exp(-pre))                                # sigmoid
    mu_ref[...] = mu
    sg_ref[...] = 0.1 + 0.9 * sig


def _encoder_call(xy_t, seg_w, enc_w, lat_w, n_seg, z_dim):
    args = (xy_t, seg_w) + tuple(enc_w) + tuple(lat_w)
    in_specs = [_full_spec(tuple(a.shape)) for a in args]
    out_shape = (jax.ShapeDtypeStruct((z_dim, n_seg), jnp.float32),
                 jax.ShapeDtypeStruct((z_dim, n_seg), jnp.float32))
    out_specs = (_full_spec((z_dim, n_seg)), _full_spec((z_dim, n_seg)))
    return pl.pallas_call(
        _encoder_kernel,
        out_shape=out_shape,
        grid_spec=pltpu.PrefetchScalarGridSpec(
            num_scalar_prefetch=0, grid=(1,),
            in_specs=in_specs, out_specs=out_specs),
        compiler_params=pltpu.CompilerParams(
            dimension_semantics=("arbitrary",)),
    )(*args)


# ----------------------------------------------------------------------------
# Kernel 2: decoder MLP (points on lanes) with in-kernel z sample + broadcast.
# ----------------------------------------------------------------------------
def _decoder_kernel(xt_ref, pmu_ref, psg_ref, eps_ref, oneh_ref,
                    w1x_ref, w1z_ref, b1_ref, w2_ref, b2_ref, w3_ref, b3_ref,
                    muy_ref, sgy_ref):
    f32 = jnp.float32
    # Reparameterized latent sample per batch (padded batch columns are zero).
    z = pmu_ref[...] + psg_ref[...] * eps_ref[...]                   # (z_dim, Bp)
    zc = jnp.dot(w1z_ref[...], z, preferred_element_type=f32)        # (H, Bp)
    zb = jnp.dot(zc, oneh_ref[...], preferred_element_type=f32)      # (H, Mp)  broadcast-to-points

    h = jnp.dot(w1x_ref[...], xt_ref[...], preferred_element_type=f32) + zb + b1_ref[...]
    h = jnp.maximum(h, 0.0)
    h = jnp.dot(w2_ref[...], h, preferred_element_type=f32) + b2_ref[...]
    h = jnp.maximum(h, 0.0)
    out = jnp.dot(w3_ref[...], h, preferred_element_type=f32) + b3_ref[...]   # (2*y_dim, Mp)

    y_dim = muy_ref.shape[0]
    pre_s = out[y_dim:, :]
    # Numerically-stable softplus with basic ops only.
    sp = jnp.where(pre_s > 20.0, pre_s, jnp.log(1.0 + jnp.exp(jnp.minimum(pre_s, 20.0))))
    muy_ref[...] = out[:y_dim, :]
    sgy_ref[...] = 0.1 + 0.9 * sp


def _decoder_call(xt_t, pmu, psg, eps, oneh, dec_w, y_dim, mtp):
    args = (xt_t, pmu, psg, eps, oneh) + tuple(dec_w)
    in_specs = [_full_spec(tuple(a.shape)) for a in args]
    out_shape = (jax.ShapeDtypeStruct((y_dim, mtp), jnp.float32),
                 jax.ShapeDtypeStruct((y_dim, mtp), jnp.float32))
    out_specs = (_full_spec((y_dim, mtp)), _full_spec((y_dim, mtp)))
    return pl.pallas_call(
        _decoder_kernel,
        out_shape=out_shape,
        grid_spec=pltpu.PrefetchScalarGridSpec(
            num_scalar_prefetch=0, grid=(1,),
            in_specs=in_specs, out_specs=out_specs),
        compiler_params=pltpu.CompilerParams(
            dimension_semantics=("arbitrary",)),
    )(*args)


# ----------------------------------------------------------------------------
# Parameter construction (deterministic, shapes dictated by __init__ args).
# ----------------------------------------------------------------------------
def init_np_params(key, in_features, encoder_out, decoder_out, h_size, x_dim):
    def dense(k, fan_in, fan_out):
        kw, kb = jax.random.split(k)
        scale = 1.0 / jnp.sqrt(jnp.float32(fan_in))
        w = jax.random.normal(kw, (fan_in, fan_out), jnp.float32) * scale
        b = jax.random.normal(kb, (fan_out,), jnp.float32) * 0.01
        return w, b

    ks = jax.random.split(key, 10)
    z_dim = encoder_out
    params = {
        # encoder MLP: in_features -> h -> h -> encoder_out
        "enc1": dense(ks[0], in_features, h_size),
        "enc2": dense(ks[1], h_size, h_size),
        "enc3": dense(ks[2], h_size, encoder_out),
        # latent head: encoder_out -> h -> (mu, pre_sigma) each z_dim
        "lat1": dense(ks[3], encoder_out, h_size),
        "lat_mu": dense(ks[4], h_size, z_dim),
        "lat_sg": dense(ks[5], h_size, z_dim),
        # decoder MLP: (x_dim + z_dim) -> h -> h -> decoder_out
        "dec1": dense(ks[6], x_dim + z_dim, h_size),
        "dec2": dense(ks[7], h_size, h_size),
        "dec3": dense(ks[8], h_size, decoder_out),
    }
    return params


def _prep_encoder_weights(params, feat_pad, in_features):
    w1, b1 = params["enc1"]
    w2, b2 = params["enc2"]
    w3, b3 = params["enc3"]
    w1t = jnp.pad(w1.T, ((0, 0), (0, feat_pad - in_features)))
    return (w1t, _col(b1), w2.T, _col(b2), w3.T, _col(b3))


def _prep_latent_weights(params):
    wl1, bl1 = params["lat1"]
    wm, bm = params["lat_mu"]
    ws, bs = params["lat_sg"]
    return (wl1.T, _col(bl1), wm.T, _col(bm), ws.T, _col(bs))


def _prep_decoder_weights(params, x_dim, xfeat_pad):
    w1, b1 = params["dec1"]
    w2, b2 = params["dec2"]
    w3, b3 = params["dec3"]
    w1x = jnp.pad(w1[:x_dim].T, ((0, 0), (0, xfeat_pad - x_dim)))    # (H, xfeat_pad)
    w1z = w1[x_dim:].T                                               # (H, z_dim)
    return (w1x, w1z, _col(b1), w2.T, _col(b2), w3.T, _col(b3))


# ----------------------------------------------------------------------------
# ImgNeuralProcess forward.
# ----------------------------------------------------------------------------
def img_neural_process_forward(params, context_x, context_y, target_x,
                               target_y=None, *, sample_key=None):
    f32 = jnp.float32
    B, Nc, x_dim = context_x.shape
    _, Nt, _ = target_x.shape
    y_dim = context_y.shape[-1]
    in_features = x_dim + y_dim
    z_dim = params["lat_mu"][0].shape[1]

    feat_pad = _round_up(in_features, 8)
    xpad = _round_up(x_dim, 8)
    bpad = _round_up(B, 8)

    # -------- Encoder (context and, when training, target in ONE launch) ----
    ctx_xy = jnp.concatenate([context_x, context_y], -1).reshape(B * Nc, in_features)
    if target_y is not None:
        tgt_xy = jnp.concatenate([target_x, target_y], -1).reshape(B * Nt, in_features)
        rows = jnp.concatenate([ctx_xy, tgt_xy], axis=0)
        n_seg = 2 * B
    else:
        rows = ctx_xy
        n_seg = B
    m_tot = rows.shape[0]
    mp = _round_up(m_tot, 128)
    xy_t = jnp.pad(rows.astype(f32),
                   ((0, mp - m_tot), (0, feat_pad - in_features))).T        # (feat_pad, mp)

    # Segment-mean weight matrix (compile-time constant; zeros on padded rows).
    seg_w = np.zeros((mp, n_seg), np.float32)
    for b in range(B):
        seg_w[b * Nc:(b + 1) * Nc, b] = 1.0 / Nc
    if target_y is not None:
        off = B * Nc
        for b in range(B):
            seg_w[off + b * Nt:off + (b + 1) * Nt, B + b] = 1.0 / Nt
    seg_w = jnp.asarray(seg_w)

    enc_w = _prep_encoder_weights(params, feat_pad, in_features)
    lat_w = _prep_latent_weights(params)
    enc_mu, enc_sg = _encoder_call(xy_t, seg_w, enc_w, lat_w, n_seg, z_dim)

    prior_mu, prior_sigma = enc_mu[:, :B].T, enc_sg[:, :B].T
    if target_y is not None:
        post_mu_t, post_sg_t = enc_mu[:, B:], enc_sg[:, B:]
    else:
        post_mu_t, post_sg_t = enc_mu[:, :B], enc_sg[:, :B]
    post_mu, post_sigma = post_mu_t.T, post_sg_t.T

    # -------- Decoder over all target points (single launch) ----------------
    if sample_key is None:
        sample_key = jax.random.PRNGKey(42)
    eps = jax.random.normal(sample_key, (B, z_dim), f32)

    pad_b = ((0, 0), (0, bpad - B))
    pmu_p = jnp.pad(post_mu_t, pad_b)
    psg_p = jnp.pad(post_sg_t, pad_b)
    eps_p = jnp.pad(eps.T, pad_b)

    mt = B * Nt
    mtp = _round_up(mt, 128)
    xt_t = jnp.pad(target_x.astype(f32).reshape(mt, x_dim),
                   ((0, mtp - mt), (0, xpad - x_dim))).T                    # (xpad, mtp)

    oneh = np.zeros((bpad, mtp), np.float32)
    for b in range(B):
        oneh[b, b * Nt:(b + 1) * Nt] = 1.0
    oneh = jnp.asarray(oneh)

    dec_w = _prep_decoder_weights(params, x_dim, xpad)
    muy_t, sgy_t = _decoder_call(xt_t, pmu_p, psg_p, eps_p, oneh, dec_w, y_dim, mtp)

    mu = muy_t[:, :mt].T.reshape(B, Nt, y_dim)
    sigma = sgy_t[:, :mt].T.reshape(B, Nt, y_dim)

    predict_distr = (mu, sigma)                     # Normal(mu, sigma) params
    return (mu, sigma, predict_distr), ((prior_mu, prior_sigma),
                                        (post_mu, post_sigma))


# ----------------------------------------------------------------------------
# Pure-JAX reference (for correctness cross-check only).
# ----------------------------------------------------------------------------
def img_neural_process_reference(params, context_x, context_y, target_x,
                                 target_y=None, *, sample_key=None):
    def mlp3(x, p1, p2, p3):
        h = jax.nn.relu(x @ p1[0] + p1[1])
        h = jax.nn.relu(h @ p2[0] + p2[1])
        return h @ p3[0] + p3[1]

    def encode(x, y):
        xy = jnp.concatenate([x, y], -1)
        return jnp.mean(mlp3(xy, params["enc1"], params["enc2"], params["enc3"]), axis=1)

    def latent(r):
        h = jax.nn.relu(r @ params["lat1"][0] + params["lat1"][1])
        mu = h @ params["lat_mu"][0] + params["lat_mu"][1]
        sg = 0.1 + 0.9 * jax.nn.sigmoid(h @ params["lat_sg"][0] + params["lat_sg"][1])
        return mu, sg

    B, Nt, _ = target_x.shape
    prior = latent(encode(context_x, context_y))
    post = latent(encode(target_x, target_y)) if target_y is not None else prior
    if sample_key is None:
        sample_key = jax.random.PRNGKey(42)
    eps = jax.random.normal(sample_key, post[0].shape, jnp.float32)
    z = post[0] + post[1] * eps
    zb = jnp.broadcast_to(z[:, None, :], (B, Nt, z.shape[-1]))
    out = mlp3(jnp.concatenate([target_x, zb], -1),
               params["dec1"], params["dec2"], params["dec3"])
    y_dim = out.shape[-1] // 2
    mu = out[..., :y_dim]
    sigma = 0.1 + 0.9 * jax.nn.softplus(out[..., y_dim:])
    return (mu, sigma, (mu, sigma)), (prior, post)


# ----------------------------------------------------------------------------
if __name__ == "__main__":
    # Module hyper-parameters implied by the MNIST image-completion setup:
    #   x = 2-D pixel coordinate, y = 1 gray value  -> in_features = 3
    #   decoder emits (mu, pre_sigma) for y          -> decoder_out = 2
    x_dim, y_dim = 2, 1
    in_features = x_dim + y_dim
    encoder_out = 32
    decoder_out = 2 * y_dim
    h_size = 32

    B = 2
    Himg = Wimg = 16
    Nt = Himg * Wimg          # all pixels are targets
    Nc = 100                  # observed context pixels

    key = jax.random.PRNGKey(0)
    kp, kx, ky, kidx, ks = jax.random.split(key, 5)

    params = init_np_params(kp, in_features, encoder_out, decoder_out,
                            h_size, x_dim)

    ys, xs = jnp.meshgrid(
        jnp.linspace(-1.0, 1.0, Himg), jnp.linspace(-1.0, 1.0, Wimg),
        indexing="ij")
    grid_xy = jnp.stack([ys.ravel(), xs.ravel()], axis=-1)        # (Nt, 2)
    target_x = jnp.broadcast_to(grid_xy, (B, Nt, 2)).astype(jnp.float32)
    target_y = jax.random.uniform(ky, (B, Nt, y_dim), jnp.float32)

    ctx_idx = jax.random.permutation(kidx, Nt)[:Nc]
    context_x = target_x[:, ctx_idx, :]
    context_y = target_y[:, ctx_idx, :]

    # Training path (context + target -> prior & posterior).
    fwd_train = jax.jit(functools.partial(img_neural_process_forward, params,
                                          sample_key=ks))
    (mu, sigma, predict_distr), (prior, posterior) = fwd_train(
        context_x, context_y, target_x, target_y)
    jax.block_until_ready((mu, sigma, prior, posterior))

    # Inference path (no target_y -> posterior falls back to the prior).
    fwd_test = jax.jit(functools.partial(img_neural_process_forward, params,
                                         target_y=None, sample_key=ks))
    (mu_i, sigma_i, _), (prior_i, posterior_i) = fwd_test(
        context_x, context_y, target_x)
    jax.block_until_ready((mu_i, sigma_i))

    assert mu.shape == (B, Nt, y_dim)
    assert sigma.shape == (B, Nt, y_dim)
    assert prior[0].shape == (B, encoder_out)
    assert posterior[0].shape == (B, encoder_out)
    assert bool(jnp.all(sigma > 0.0))
    assert bool(jnp.all(jnp.isfinite(mu)))
    assert mu_i.shape == (B, Nt, y_dim)
    assert bool(jnp.allclose(prior_i[0], posterior_i[0]))

    # Cross-check against the pure-JAX reference (loose tol: MXU precision).
    with jax.default_matmul_precision("highest"):
        (mu_r, sg_r, _), (pr_r, po_r) = img_neural_process_reference(
            params, context_x, context_y, target_x, target_y, sample_key=ks)
    for a, b in ((mu, mu_r), (sigma, sg_r),
                 (prior[0], pr_r[0]), (prior[1], pr_r[1]),
                 (posterior[0], po_r[0]), (posterior[1], po_r[1])):
        err = float(jnp.max(jnp.abs(a - b)))
        assert err < 5e-2, f"mismatch vs reference: {err}"

    print("KERNEL_OK")
</pallas_src>

<mosaic_0001>
module attributes {stable_mosaic.version = 11 : i64} {
  func.func @_encoder_kernel(%arg0: i32, %arg1: memref<8x768xf32, #tpu.memory_space<vmem>>, %arg2: memref<768x4xf32, #tpu.memory_space<vmem>>, %arg3: memref<32x8xf32, #tpu.memory_space<vmem>>, %arg4: memref<32x1xf32, #tpu.memory_space<vmem>>, %arg5: memref<32x32xf32, #tpu.memory_space<vmem>>, %arg6: memref<32x1xf32, #tpu.memory_space<vmem>>, %arg7: memref<32x32xf32, #tpu.memory_space<vmem>>, %arg8: memref<32x1xf32, #tpu.memory_space<vmem>>, %arg9: memref<32x32xf32, #tpu.memory_space<vmem>>, %arg10: memref<32x1xf32, #tpu.memory_space<vmem>>, %arg11: memref<32x32xf32, #tpu.memory_space<vmem>>, %arg12: memref<32x1xf32, #tpu.memory_space<vmem>>, %arg13: memref<32x32xf32, #tpu.memory_space<vmem>>, %arg14: memref<32x1xf32, #tpu.memory_space<vmem>>, %arg15: memref<32x4xf32, #tpu.memory_space<vmem>>, %arg16: memref<32x4xf32, #tpu.memory_space<vmem>>) attributes {dimension_semantics = [#tpu.dimension_semantics<arbitrary>], iteration_bounds = array<i64: 1>, scalar_prefetch = 0 : i64, scratch_operands = 0 : i64, tpu.core_type = #tpu.core_type<tc>, window_params = [{pipeline_mode = #tpu.pipeline_mode<synchronous>, transform_indices = @transform_0, window_bounds = array<i64: 8, 768>}, {pipeline_mode = #tpu.pipeline_mode<synchronous>, transform_indices = @transform_1, window_bounds = array<i64: 768, 4>}, {pipeline_mode = #tpu.pipeline_mode<synchronous>, transform_indices = @transform_2, window_bounds = array<i64: 32, 8>}, {pipeline_mode = #tpu.pipeline_mode<synchronous>, transform_indices = @transform_3, window_bounds = array<i64: 32, 1>}, {pipeline_mode = #tpu.pipeline_mode<synchronous>, transform_indices = @transform_4, window_bounds = array<i64: 32, 32>}, {pipeline_mode = #tpu.pipeline_mode<synchronous>, transform_indices = @transform_5, window_bounds = array<i64: 32, 1>}, {pipeline_mode = #tpu.pipeline_mode<synchronous>, transform_indices = @transform_6, window_bounds = array<i64: 32, 32>}, {pipeline_mode = #tpu.pipeline_mode<synchronous>, transform_indices = @transform_7, window_bounds = array<i64: 32, 1>}, {pipeline_mode = #tpu.pipeline_mode<synchronous>, transform_indices = @transform_8, window_bounds = array<i64: 32, 32>}, {pipeline_mode = #tpu.pipeline_mode<synchronous>, transform_indices = @transform_9, window_bounds = array<i64: 32, 1>}, {pipeline_mode = #tpu.pipeline_mode<synchronous>, transform_indices = @transform_10, window_bounds = array<i64: 32, 32>}, {pipeline_mode = #tpu.pipeline_mode<synchronous>, transform_indices = @transform_11, window_bounds = array<i64: 32, 1>}, {pipeline_mode = #tpu.pipeline_mode<synchronous>, transform_indices = @transform_12, window_bounds = array<i64: 32, 32>}, {pipeline_mode = #tpu.pipeline_mode<synchronous>, transform_indices = @transform_13, window_bounds = array<i64: 32, 1>}, {pipeline_mode = #tpu.pipeline_mode<synchronous>, transform_indices = @transform_14, window_bounds = array<i64: 32, 4>}, {pipeline_mode = #tpu.pipeline_mode<synchronous>, transform_indices = @transform_15, window_bounds = array<i64: 32, 4>}]} {
    %c0 = arith.constant 0 : index
    %c0_0 = arith.constant 0 : index
    %0 = vector.load %arg1[%c0, %c0_0] : memref<8x768xf32, #tpu.memory_space<vmem>>, vector<8x768xf32>
    %c0_1 = arith.constant 0 : index
    %c0_2 = arith.constant 0 : index
    %1 = vector.load %arg3[%c0_1, %c0_2] : memref<32x8xf32, #tpu.memory_space<vmem>>, vector<32x8xf32>
    %cst = arith.constant dense<0.000000e+00> : vector<32x768xf32>
    %2 = tpu.matmul %1, %0, %cst {dimension_numbers = #tpu.dot_dimension_numbers<[1], [0], [0], [1], [0, 0, 1, 1], [], []>} : vector<32x8xf32>, vector<8x768xf32>, vector<32x768xf32> -> vector<32x768xf32>
    %c0_3 = arith.constant 0 : index
    %c0_4 = arith.constant 0 : index
    %3 = vector.load %arg4[%c0_3, %c0_4] : memref<32x1xf32, #tpu.memory_space<vmem>>, vector<32x1xf32>
    %4 = vector.broadcast %3 : vector<32x1xf32> to vector<32x768xf32>
    %5 = arith.addf %2, %4 : vector<32x768xf32>
    %cst_5 = arith.constant 0.000000e+00 : f32
    %6 = vector.broadcast %cst_5 : f32 to vector<32x768xf32>
    %7 = arith.maximumf %5, %6 : vector<32x768xf32>
    %c0_6 = arith.constant 0 : index
    %c0_7 = arith.constant 0 : index
    %8 = vector.load %arg5[%c0_6, %c0_7] : memref<32x32xf32, #tpu.memory_space<vmem>>, vector<32x32xf32>
    %cst_8 = arith.constant dense<0.000000e+00> : vector<32x768xf32>
    %9 = tpu.matmul %8, %7, %cst_8 {dimension_numbers = #tpu.dot_dimension_numbers<[1], [0], [0], [1], [0, 0, 1, 1], [], []>} : vector<32x32xf32>, vector<32x768xf32>, vector<32x768xf32> -> vector<32x768xf32>
    %c0_9 = arith.constant 0 : index
    %c0_10 = arith.constant 0 : index
    %10 = vector.load %arg6[%c0_9, %c0_10] : memref<32x1xf32, #tpu.memory_space<vmem>>, vector<32x1xf32>
    %11 = vector.broadcast %10 : vector<32x1xf32> to vector<32x768xf32>
    %12 = arith.addf %9, %11 : vector<32x768xf32>
    %cst_11 = arith.constant 0.000000e+00 : f32
    %13 = vector.broadcast %cst_11 : f32 to vector<32x768xf32>
    %14 = arith.maximumf %12, %13 : vector<32x768xf32>
    %c0_12 = arith.constant 0 : index
    %c0_13 = arith.constant 0 : index
    %15 = vector.load %arg7[%c0_12, %c0_13] : memref<32x32xf32, #tpu.memory_space<vmem>>, vector<32x32xf32>
    %cst_14 = arith.constant dense<0.000000e+00> : vector<32x768xf32>
    %16 = tpu.matmul %15, %14, %cst_14 {dimension_numbers = #tpu.dot_dimension_numbers<[1], [0], [0], [1], [0, 0, 1, 1], [], []>} : vector<32x32xf32>, vector<32x768xf32>, vector<32x768xf32> -> vector<32x768xf32>
    %c0_15 = arith.constant 0 : index
    %c0_16 = arith.constant 0 : index
    %17 = vector.load %arg8[%c0_15, %c0_16] : memref<32x1xf32, #tpu.memory_space<vmem>>, vector<32x1xf32>
    %18 = vector.broadcast %17 : vector<32x1xf32> to vector<32x768xf32>
    %19 = arith.addf %16, %18 : vector<32x768xf32>
    %c0_17 = arith.constant 0 : index
    %c0_18 = arith.constant 0 : index
    %20 = vector.load %arg2[%c0_17, %c0_18] : memref<768x4xf32, #tpu.memory_space<vmem>>, vector<768x4xf32>
    %cst_19 = arith.constant dense<0.000000e+00> : vector<32x4xf32>
    %21 = tpu.matmul %19, %20, %cst_19 {dimension_numbers = #tpu.dot_dimension_numbers<[1], [0], [0], [1], [0, 0, 1, 1], [], []>} : vector<32x768xf32>, vector<768x4xf32>, vector<32x4xf32> -> vector<32x4xf32>
    %c0_20 = arith.constant 0 : index
    %c0_21 = arith.constant 0 : index
    %22 = vector.load %arg9[%c0_20, %c0_21] : memref<32x32xf32, #tpu.memory_space<vmem>>, vector<32x32xf32>
    %cst_22 = arith.constant dense<0.000000e+00> : vector<32x4xf32>
    %23 = tpu.matmul %22, %21, %cst_22 {dimension_numbers = #tpu.dot_dimension_numbers<[1], [0], [0], [1], [0, 0, 1, 1], [], []>} : vector<32x32xf32>, vector<32x4xf32>, vector<32x4xf32> -> vector<32x4xf32>
    %c0_23 = arith.constant 0 : index
    %c0_24 = arith.constant 0 : index
    %24 = vector.load %arg10[%c0_23, %c0_24] : memref<32x1xf32, #tpu.memory_space<vmem>>, vector<32x1xf32>
    %25 = vector.broadcast %24 : vector<32x1xf32> to vector<32x4xf32>
    %26 = arith.addf %23, %25 : vector<32x4xf32>
    %cst_25 = arith.constant 0.000000e+00 : f32
    %27 = vector.broadcast %cst_25 : f32 to vector<32x4xf32>
    %28 = arith.maximumf %26, %27 : vector<32x4xf32>
    %c0_26 = arith.constant 0 : index
    %c0_27 = arith.constant 0 : index
    %29 = vector.load %arg11[%c0_26, %c0_27] : memref<32x32xf32, #tpu.memory_space<vmem>>, vector<32x32xf32>
    %cst_28 = arith.constant dense<0.000000e+00> : vector<32x4xf32>
    %30 = tpu.matmul %29, %28, %cst_28 {dimension_numbers = #tpu.dot_dimension_numbers<[1], [0], [0], [1], [0, 0, 1, 1], [], []>} : vector<32x32xf32>, vector<32x4xf32>, vector<32x4xf32> -> vector<32x4xf32>
    %c0_29 = arith.constant 0 : index
    %c0_30 = arith.constant 0 : index
    %31 = vector.load %arg12[%c0_29, %c0_30] : memref<32x1xf32, #tpu.memory_space<vmem>>, vector<32x1xf32>
    %32 = vector.broadcast %31 : vector<32x1xf32> to vector<32x4xf32>
    %33 = arith.addf %30, %32 : vector<32x4xf32>
    %c0_31 = arith.constant 0 : index
    %c0_32 = arith.constant 0 : index
    %34 = vector.load %arg13[%c0_31, %c0_32] : memref<32x32xf32, #tpu.memory_space<vmem>>, vector<32x32xf32>
    %cst_33 = arith.constant dense<0.000000e+00> : vector<32x4xf32>
    %35 = tpu.matmul %34, %28, %cst_33 {dimension_numbers = #tpu.dot_dimension_numbers<[1], [0], [0], [1], [0, 0, 1, 1], [], []>} : vector<32x32xf32>, vector<32x4xf32>, vector<32x4xf32> -> vector<32x4xf32>
    %c0_34 = arith.constant 0 : index
    %c0_35 = arith.constant 0 : index
    %36 = vector.load %arg14[%c0_34, %c0_35] : memref<32x1xf32, #tpu.memory_space<vmem>>, vector<32x1xf32>
    %37 = vector.broadcast %36 : vector<32x1xf32> to vector<32x4xf32>
    %38 = arith.addf %35, %37 : vector<32x4xf32>
    %cst_36 = arith.constant 0.000000e+00 : f32
    %39 = vector.broadcast %cst_36 : f32 to vector<32x4xf32>
    %40 = arith.subf %39, %38 : vector<32x4xf32>
    %41 = math.exp %40 : vector<32x4xf32>
    %cst_37 = arith.constant 1.000000e+00 : f32
    %42 = vector.broadcast %cst_37 : f32 to vector<32x4xf32>
    %43 = arith.addf %42, %41 : vector<32x4xf32>
    %cst_38 = arith.constant 1.000000e+00 : f32
    %44 = vector.broadcast %cst_38 : f32 to vector<32x4xf32>
    %45 = arith.divf %44, %43 : vector<32x4xf32>
    %c0_39 = arith.constant 0 : index
    %c0_40 = arith.constant 0 : index
    %46 = vector.load %arg15[%c0_39, %c0_40] : memref<32x4xf32, #tpu.memory_space<vmem>>, vector<32x4xf32>
    tpu.vector_store %arg15[%c0_39, %c0_40], %33 {strides = array<i32>} : memref<32x4xf32, #tpu.memory_space<vmem>>, vector<32x4xf32>,
    %cst_41 = arith.constant 0.899999976 : f32
    %47 = vector.broadcast %cst_41 : f32 to vector<32x4xf32>
    %48 = arith.mulf %47, %45 : vector<32x4xf32>
    %cst_42 = arith.constant 1.000000e-01 : f32
    %49 = vector.broadcast %cst_42 : f32 to vector<32x4xf32>
    %50 = arith.addf %49, %48 : vector<32x4xf32>
    %c0_43 = arith.constant 0 : index
    %c0_44 = arith.constant 0 : index
    %51 = vector.load %arg16[%c0_43, %c0_44] : memref<32x4xf32, #tpu.memory_space<vmem>>, vector<32x4xf32>
    tpu.vector_store %arg16[%c0_43, %c0_44], %50 {strides = array<i32>} : memref<32x4xf32, #tpu.memory_space<vmem>>, vector<32x4xf32>,
    return
  }
  func.func @transform_0(%arg0: i32) -> (i32, i32) {
    %c0_i32 = arith.constant 0 : i32
    %c0_i32_0 = arith.constant 0 : i32
    %c0_i32_1 = arith.constant 0 : i32
    return %c0_i32, %c0_i32_0 : i32, i32
  }
  func.func @transform_1(%arg0: i32) -> (i32, i32) {
    %c0_i32 = arith.constant 0 : i32
    %c0_i32_0 = arith.constant 0 : i32
    %c0_i32_1 = arith.constant 0 : i32
    return %c0_i32, %c0_i32_0 : i32, i32
  }
  func.func @transform_2(%arg0: i32) -> (i32, i32) {
    %c0_i32 = arith.constant 0 : i32
    %c0_i32_0 = arith.constant 0 : i32
    %c0_i32_1 = arith.constant 0 : i32
    return %c0_i32, %c0_i32_0 : i32, i32
  }
  func.func @transform_3(%arg0: i32) -> (i32, i32) {
    %c0_i32 = arith.constant 0 : i32
    %c0_i32_0 = arith.constant 0 : i32
    %c0_i32_1 = arith.constant 0 : i32
    return %c0_i32, %c0_i32_0 : i32, i32
  }
  func.func @transform_4(%arg0: i32) -> (i32, i32) {
    %c0_i32 = arith.constant 0 : i32
    %c0_i32_0 = arith.constant 0 : i32
    %c0_i32_1 = arith.constant 0 : i32
    return %c0_i32, %c0_i32_0 : i32, i32
  }
  func.func @transform_5(%arg0: i32) -> (i32, i32) {
    %c0_i32 = arith.constant 0 : i32
    %c0_i32_0 = arith.constant 0 : i32
    %c0_i32_1 = arith.constant 0 : i32
    return %c0_i32, %c0_i32_0 : i32, i32
  }
  func.func @transform_6(%arg0: i32) -> (i32, i32) {
    %c0_i32 = arith.constant 0 : i32
    %c0_i32_0 = arith.constant 0 : i32
    %c0_i32_1 = arith.constant 0 : i32
    return %c0_i32, %c0_i32_0 : i32, i32
  }
  func.func @transform_7(%arg0: i32) -> (i32, i32) {
    %c0_i32 = arith.constant 0 : i32
    %c0_i32_0 = arith.constant 0 : i32
    %c0_i32_1 = arith.constant 0 : i32
    return %c0_i32, %c0_i32_0 : i32, i32
  }
  func.func @transform_8(%arg0: i32) -> (i32, i32) {
    %c0_i32 = arith.constant 0 : i32
    %c0_i32_0 = arith.constant 0 : i32
    %c0_i32_1 = arith.constant 0 : i32
    return %c0_i32, %c0_i32_0 : i32, i32
  }
  func.func @transform_9(%arg0: i32) -> (i32, i32) {
    %c0_i32 = arith.constant 0 : i32
    %c0_i32_0 = arith.constant 0 : i32
    %c0_i32_1 = arith.constant 0 : i32
    return %c0_i32, %c0_i32_0 : i32, i32
  }
  func.func @transform_10(%arg0: i32) -> (i32, i32) {
    %c0_i32 = arith.constant 0 : i32
    %c0_i32_0 = arith.constant 0 : i32
    %c0_i32_1 = arith.constant 0 : i32
    return %c0_i32, %c0_i32_0 : i32, i32
  }
  func.func @transform_11(%arg0: i32) -> (i32, i32) {
    %c0_i32 = arith.constant 0 : i32
    %c0_i32_0 = arith.constant 0 : i32
    %c0_i32_1 = arith.constant 0 : i32
    return %c0_i32, %c0_i32_0 : i32, i32
  }
  func.func @transform_12(%arg0: i32) -> (i32, i32) {
    %c0_i32 = arith.constant 0 : i32
    %c0_i32_0 = arith.constant 0 : i32
    %c0_i32_1 = arith.constant 0 : i32
    return %c0_i32, %c0_i32_0 : i32, i32
  }
  func.func @transform_13(%arg0: i32) -> (i32, i32) {
    %c0_i32 = arith.constant 0 : i32
    %c0_i32_0 = arith.constant 0 : i32
    %c0_i32_1 = arith.constant 0 : i32
    return %c0_i32, %c0_i32_0 : i32, i32
  }
  func.func @transform_14(%arg0: i32) -> (i32, i32) {
    %c0_i32 = arith.constant 0 : i32
    %c0_i32_0 = arith.constant 0 : i32
    %c0_i32_1 = arith.constant 0 : i32
    return %c0_i32, %c0_i32_0 : i32, i32
  }
  func.func @transform_15(%arg0: i32) -> (i32, i32) {
    %c0_i32 = arith.constant 0 : i32
    %c0_i32_0 = arith.constant 0 : i32
    %c0_i32_1 = arith.constant 0 : i32
    return %c0_i32, %c0_i32_0 : i32, i32
  }
}

module attributes {stable_mosaic.version = 11 : i64} {
  func.func @_decoder_kernel(%arg0: i32, %arg1: memref<8x512xf32, #tpu.memory_space<vmem>>, %arg2: memref<32x8xf32, #tpu.memory_space<vmem>>, %arg3: memref<32x8xf32, #tpu.memory_space<vmem>>, %arg4: memref<32x8xf32, #tpu.memory_space<vmem>>, %arg5: memref<8x512xf32, #tpu.memory_space<vmem>>, %arg6: memref<32x8xf32, #tpu.memory_space<vmem>>, %arg7: memref<32x32xf32, #tpu.memory_space<vmem>>, %arg8: memref<32x1xf32, #tpu.memory_space<vmem>>, %arg9: memref<32x32xf32, #tpu.memory_space<vmem>>, %arg10: memref<32x1xf32, #tpu.memory_space<vmem>>, %arg11: memref<2x32xf32, #tpu.memory_space<vmem>>, %arg12: memref<2x1xf32, #tpu.memory_space<vmem>>, %arg13: memref<1x512xf32, #tpu.memory_space<vmem>>, %arg14: memref<1x512xf32, #tpu.memory_space<vmem>>) attributes {dimension_semantics = [#tpu.dimension_semantics<arbitrary>], iteration_bounds = array<i64: 1>, scalar_prefetch = 0 : i64, scratch_operands = 0 : i64, tpu.core_type = #tpu.core_type<tc>, window_params = [{pipeline_mode = #tpu.pipeline_mode<synchronous>, transform_indices = @transform_0, window_bounds = array<i64: 8, 512>}, {pipeline_mode = #tpu.pipeline_mode<synchronous>, transform_indices = @transform_1, window_bounds = array<i64: 32, 8>}, {pipeline_mode = #tpu.pipeline_mode<synchronous>, transform_indices = @transform_2, window_bounds = array<i64: 32, 8>}, {pipeline_mode = #tpu.pipeline_mode<synchronous>, transform_indices = @transform_3, window_bounds = array<i64: 32, 8>}, {pipeline_mode = #tpu.pipeline_mode<synchronous>, transform_indices = @transform_4, window_bounds = array<i64: 8, 512>}, {pipeline_mode = #tpu.pipeline_mode<synchronous>, transform_indices = @transform_5, window_bounds = array<i64: 32, 8>}, {pipeline_mode = #tpu.pipeline_mode<synchronous>, transform_indices = @transform_6, window_bounds = array<i64: 32, 32>}, {pipeline_mode = #tpu.pipeline_mode<synchronous>, transform_indices = @transform_7, window_bounds = array<i64: 32, 1>}, {pipeline_mode = #tpu.pipeline_mode<synchronous>, transform_indices = @transform_8, window_bounds = array<i64: 32, 32>}, {pipeline_mode = #tpu.pipeline_mode<synchronous>, transform_indices = @transform_9, window_bounds = array<i64: 32, 1>}, {pipeline_mode = #tpu.pipeline_mode<synchronous>, transform_indices = @transform_10, window_bounds = array<i64: 2, 32>}, {pipeline_mode = #tpu.pipeline_mode<synchronous>, transform_indices = @transform_11, window_bounds = array<i64: 2, 1>}, {pipeline_mode = #tpu.pipeline_mode<synchronous>, transform_indices = @transform_12, window_bounds = array<i64: 1, 512>}, {pipeline_mode = #tpu.pipeline_mode<synchronous>, transform_indices = @transform_13, window_bounds = array<i64: 1, 512>}]} {
    %c0 = arith.constant 0 : index
    %c0_0 = arith.constant 0 : index
    %0 = vector.load %arg2[%c0, %c0_0] : memref<32x8xf32, #tpu.memory_space<vmem>>, vector<32x8xf32>
    %c0_1 = arith.constant 0 : index
    %c0_2 = arith.constant 0 : index
    %1 = vector.load %arg3[%c0_1, %c0_2] : memref<32x8xf32, #tpu.memory_space<vmem>>, vector<32x8xf32>
    %c0_3 = arith.constant 0 : index
    %c0_4 = arith.constant 0 : index
    %2 = vector.load %arg4[%c0_3, %c0_4] : memref<32x8xf32, #tpu.memory_space<vmem>>, vector<32x8xf32>
    %3 = arith.mulf %1, %2 : vector<32x8xf32>
    %4 = arith.addf %0, %3 : vector<32x8xf32>
    %c0_5 = arith.constant 0 : index
    %c0_6 = arith.constant 0 : index
    %5 = vector.load %arg7[%c0_5, %c0_6] : memref<32x32xf32, #tpu.memory_space<vmem>>, vector<32x32xf32>
    %cst = arith.constant dense<0.000000e+00> : vector<32x8xf32>
    %6 = tpu.matmul %5, %4, %cst {dimension_numbers = #tpu.dot_dimension_numbers<[1], [0], [0], [1], [0, 0, 1, 1], [], []>} : vector<32x32xf32>, vector<32x8xf32>, vector<32x8xf32> -> vector<32x8xf32>
    %c0_7 = arith.constant 0 : index
    %c0_8 = arith.constant 0 : index
    %7 = vector.load %arg5[%c0_7, %c0_8] : memref<8x512xf32, #tpu.memory_space<vmem>>, vector<8x512xf32>
    %cst_9 = arith.constant dense<0.000000e+00> : vector<32x512xf32>
    %8 = tpu.matmul %6, %7, %cst_9 {dimension_numbers = #tpu.dot_dimension_numbers<[1], [0], [0], [1], [0, 0, 1, 1], [], []>} : vector<32x8xf32>, vector<8x512xf32>, vector<32x512xf32> -> vector<32x512xf32>
    %c0_10 = arith.constant 0 : index
    %c0_11 = arith.constant 0 : index
    %9 = vector.load %arg6[%c0_10, %c0_11] : memref<32x8xf32, #tpu.memory_space<vmem>>, vector<32x8xf32>
    %c0_12 = arith.constant 0 : index
    %c0_13 = arith.constant 0 : index
    %10 = vector.load %arg1[%c0_12, %c0_13] : memref<8x512xf32, #tpu.memory_space<vmem>>, vector<8x512xf32>
    %cst_14 = arith.constant dense<0.000000e+00> : vector<32x512xf32>
    %11 = tpu.matmul %9, %10, %cst_14 {dimension_numbers = #tpu.dot_dimension_numbers<[1], [0], [0], [1], [0, 0, 1, 1], [], []>} : vector<32x8xf32>, vector<8x512xf32>, vector<32x512xf32> -> vector<32x512xf32>
    %12 = arith.addf %11, %8 : vector<32x512xf32>
    %c0_15 = arith.constant 0 : index
    %c0_16 = arith.constant 0 : index
    %13 = vector.load %arg8[%c0_15, %c0_16] : memref<32x1xf32, #tpu.memory_space<vmem>>, vector<32x1xf32>
    %14 = vector.broadcast %13 : vector<32x1xf32> to vector<32x512xf32>
    %15 = arith.addf %12, %14 : vector<32x512xf32>
    %cst_17 = arith.constant 0.000000e+00 : f32
    %16 = vector.broadcast %cst_17 : f32 to vector<32x512xf32>
    %17 = arith.maximumf %15, %16 : vector<32x512xf32>
    %c0_18 = arith.constant 0 : index
    %c0_19 = arith.constant 0 : index
    %18 = vector.load %arg9[%c0_18, %c0_19] : memref<32x32xf32, #tpu.memory_space<vmem>>, vector<32x32xf32>
    %cst_20 = arith.constant dense<0.000000e+00> : vector<32x512xf32>
    %19 = tpu.matmul %18, %17, %cst_20 {dimension_numbers = #tpu.dot_dimension_numbers<[1], [0], [0], [1], [0, 0, 1, 1], [], []>} : vector<32x32xf32>, vector<32x512xf32>, vector<32x512xf32> -> vector<32x512xf32>
    %c0_21 = arith.constant 0 : index
    %c0_22 = arith.constant 0 : index
    %20 = vector.load %arg10[%c0_21, %c0_22] : memref<32x1xf32, #tpu.memory_space<vmem>>, vector<32x1xf32>
    %21 = vector.broadcast %20 : vector<32x1xf32> to vector<32x512xf32>
    %22 = arith.addf %19, %21 : vector<32x512xf32>
    %cst_23 = arith.constant 0.000000e+00 : f32
    %23 = vector.broadcast %cst_23 : f32 to vector<32x512xf32>
    %24 = arith.maximumf %22, %23 : vector<32x512xf32>
    %c0_24 = arith.constant 0 : index
    %c0_25 = arith.constant 0 : index
    %25 = vector.load %arg11[%c0_24, %c0_25] : memref<2x32xf32, #tpu.memory_space<vmem>>, vector<2x32xf32>
    %cst_26 = arith.constant dense<0.000000e+00> : vector<2x512xf32>
    %26 = tpu.matmul %25, %24, %cst_26 {dimension_numbers = #tpu.dot_dimension_numbers<[1], [0], [0], [1], [0, 0, 1, 1], [], []>} : vector<2x32xf32>, vector<32x512xf32>, vector<2x512xf32> -> vector<2x512xf32>
    %c0_27 = arith.constant 0 : index
    %c0_28 = arith.constant 0 : index
    %27 = vector.load %arg12[%c0_27, %c0_28] : memref<2x1xf32, #tpu.memory_space<vmem>>, vector<2x1xf32>
    %28 = vector.broadcast %27 : vector<2x1xf32> to vector<2x512xf32>
    %29 = arith.addf %26, %28 : vector<2x512xf32>
    %30 = vector.extract_strided_slice %29 {offsets = [1, 0], sizes = [1, 512], strides = [1, 1]} : vector<2x512xf32> to vector<1x512xf32>
    %cst_29 = arith.constant 2.000000e+01 : f32
    %31 = vector.broadcast %cst_29 : f32 to vector<1x512xf32>
    %32 = arith.cmpf ogt, %30, %31 : vector<1x512xf32>
    %cst_30 = arith.constant 2.000000e+01 : f32
    %33 = vector.broadcast %cst_30 : f32 to vector<1x512xf32>
    %34 = arith.minimumf %30, %33 : vector<1x512xf32>
    %35 = math.exp %34 : vector<1x512xf32>
    %cst_31 = arith.constant 1.000000e+00 : f32
    %36 = vector.broadcast %cst_31 : f32 to vector<1x512xf32>
    %37 = arith.addf %36, %35 : vector<1x512xf32>
    %38 = math.log %37 : vector<1x512xf32>
    %39 = arith.select %32, %30, %38 : vector<1x512xi1>, vector<1x512xf32>
    %40 = vector.extract_strided_slice %29 {offsets = [0, 0], sizes = [1, 512], strides = [1, 1]} : vector<2x512xf32> to vector<1x512xf32>
    %c0_32 = arith.constant 0 : index
    %c0_33 = arith.constant 0 : index
    %41 = vector.load %arg13[%c0_32, %c0_33] : memref<1x512xf32, #tpu.memory_space<vmem>>, vector<1x512xf32>
    tpu.vector_store %arg13[%c0_32, %c0_33], %40 {strides = array<i32>} : memref<1x512xf32, #tpu.memory_space<vmem>>, vector<1x512xf32>,
    %cst_34 = arith.constant 0.899999976 : f32
    %42 = vector.broadcast %cst_34 : f32 to vector<1x512xf32>
    %43 = arith.mulf %42, %39 : vector<1x512xf32>
    %cst_35 = arith.constant 1.000000e-01 : f32
    %44 = vector.broadcast %cst_35 : f32 to vector<1x512xf32>
    %45 = arith.addf %44, %43 : vector<1x512xf32>
    %c0_36 = arith.constant 0 : index
    %c0_37 = arith.constant 0 : index
    %46 = vector.load %arg14[%c0_36, %c0_37] : memref<1x512xf32, #tpu.memory_space<vmem>>, vector<1x512xf32>
    tpu.vector_store %arg14[%c0_36, %c0_37], %45 {strides = array<i32>} : memref<1x512xf32, #tpu.memory_space<vmem>>, vector<1x512xf32>,
    return
  }
  func.func @transform_0(%arg0: i32) -> (i32, i32) {
    %c0_i32 = arith.constant 0 : i32
    %c0_i32_0 = arith.constant 0 : i32
    %c0_i32_1 = arith.constant 0 : i32
    return %c0_i32, %c0_i32_0 : i32, i32
  }
  func.func @transform_1(%arg0: i32) -> (i32, i32) {
    %c0_i32 = arith.constant 0 : i32
    %c0_i32_0 = arith.constant 0 : i32
    %c0_i32_1 = arith.constant 0 : i32
    return %c0_i32, %c0_i32_0 : i32, i32
  }
  func.func @transform_2(%arg0: i32) -> (i32, i32) {
    %c0_i32 = arith.constant 0 : i32
    %c0_i32_0 = arith.constant 0 : i32
    %c0_i32_1 = arith.constant 0 : i32
    return %c0_i32, %c0_i32_0 : i32, i32
  }
  func.func @transform_3(%arg0: i32) -> (i32, i32) {
    %c0_i32 = arith.constant 0 : i32
    %c0_i32_0 = arith.constant 0 : i32
    %c0_i32_1 = arith.constant 0 : i32
    return %c0_i32, %c0_i32_0 : i32, i32
  }
  func.func @transform_4(%arg0: i32) -> (i32, i32) {
    %c0_i32 = arith.constant 0 : i32
    %c0_i32_0 = arith.constant 0 : i32
    %c0_i32_1 = arith.constant 0 : i32
    return %c0_i32, %c0_i32_0 : i32, i32
  }
  func.func @transform_5(%arg0: i32) -> (i32, i32) {
    %c0_i32 = arith.constant 0 : i32
    %c0_i32_0 = arith.constant 0 : i32
    %c0_i32_1 = arith.constant 0 : i32
    return %c0_i32, %c0_i32_0 : i32, i32
  }
  func.func @transform_6(%arg0: i32) -> (i32, i32) {
    %c0_i32 = arith.constant 0 : i32
    %c0_i32_0 = arith.constant 0 : i32
    %c0_i32_1 = arith.constant 0 : i32
    return %c0_i32, %c0_i32_0 : i32, i32
  }
  func.func @transform_7(%arg0: i32) -> (i32, i32) {
    %c0_i32 = arith.constant 0 : i32
    %c0_i32_0 = arith.constant 0 : i32
    %c0_i32_1 = arith.constant 0 : i32
    return %c0_i32, %c0_i32_0 : i32, i32
  }
  func.func @transform_8(%arg0: i32) -> (i32, i32) {
    %c0_i32 = arith.constant 0 : i32
    %c0_i32_0 = arith.constant 0 : i32
    %c0_i32_1 = arith.constant 0 : i32
    return %c0_i32, %c0_i32_0 : i32, i32
  }
  func.func @transform_9(%arg0: i32) -> (i32, i32) {
    %c0_i32 = arith.constant 0 : i32
    %c0_i32_0 = arith.constant 0 : i32
    %c0_i32_1 = arith.constant 0 : i32
    return %c0_i32, %c0_i32_0 : i32, i32
  }
  func.func @transform_10(%arg0: i32) -> (i32, i32) {
    %c0_i32 = arith.constant 0 : i32
    %c0_i32_0 = arith.constant 0 : i32
    %c0_i32_1 = arith.constant 0 : i32
    return %c0_i32, %c0_i32_0 : i32, i32
  }
  func.func @transform_11(%arg0: i32) -> (i32, i32) {
    %c0_i32 = arith.constant 0 : i32
    %c0_i32_0 = arith.constant 0 : i32
    %c0_i32_1 = arith.constant 0 : i32
    return %c0_i32, %c0_i32_0 : i32, i32
  }
  func.func @transform_12(%arg0: i32) -> (i32, i32) {
    %c0_i32 = arith.constant 0 : i32
    %c0_i32_0 = arith.constant 0 : i32
    %c0_i32_1 = arith.constant 0 : i32
    return %c0_i32, %c0_i32_0 : i32, i32
  }
  func.func @transform_13(%arg0: i32) -> (i32, i32) {
    %c0_i32 = arith.constant 0 : i32
    %c0_i32_0 = arith.constant 0 : i32
    %c0_i32_1 = arith.constant 0 : i32
    return %c0_i32, %c0_i32_0 : i32, i32
  }
}

</mosaic_0001>

<llo_original>
// kernel: img_neural_process_forward.3
$region0: #{img_neural_process_forward.3}
  #allocation0 [shape = 'u32[]', space=smem, size = 0x4, offset = 0x4, fixed_abs, tag = 'smem constant byte address 0x4 - core index']
  #allocation1 [shape = 'u32[144,128]{1,0:T(1,128)}', space=vmem, size = 0x12000, scoped, tag = 'internal scratch']
  %s0 = inlined_call_operand.vmem [shape: f32[8,512], index: 0, kind: input, shape index: {}]
  %s1 = inlined_call_operand.vmem [shape: f32[32,8], index: 1, kind: input, shape index: {}]
  %s2 = inlined_call_operand.vmem [shape: f32[32,8], index: 2, kind: input, shape index: {}]
  %s3 = inlined_call_operand.vmem [shape: f32[32,8], index: 3, kind: input, shape index: {}]
  %s4 = inlined_call_operand.vmem [shape: f32[8,512], index: 4, kind: input, shape index: {}]
  %s5 = inlined_call_operand.vmem [shape: f32[32,8], index: 5, kind: input, shape index: {}]
  %s6 = inlined_call_operand.vmem [shape: f32[32,32], index: 6, kind: input, shape index: {}]
  %s7 = inlined_call_operand.vmem [shape: f32[32,1], index: 7, kind: input, shape index: {}]
  %s8 = inlined_call_operand.vmem [shape: f32[32,32], index: 8, kind: input, shape index: {}]
  %s9 = inlined_call_operand.vmem [shape: f32[32,1], index: 9, kind: input, shape index: {}]
  %s10 = inlined_call_operand.vmem [shape: f32[2,32], index: 10, kind: input, shape index: {}]
  %s11 = inlined_call_operand.vmem [shape: f32[2,1], index: 11, kind: input, shape index: {}]
  %s12 = inlined_call_operand.vmem [shape: f32[1,512], index: 12, kind: output, shape index: {0}]
  %s13 = inlined_call_operand.vmem [shape: f32[1,512], index: 13, kind: output, shape index: {1}]
  %14 = xla_tuple %s12, %s13
  %s15 = sld [smem:[#allocation0]]
  $region66: #{img_neural_process_forward.3} parent=0
    _
  %s17 = ssub.s32 1, %s15
  %s18 = scalar_select 0, %s17, %s15
  // Predicated region
  $region2: #{img_neural_process_forward.3} parent=0 // pred_check
    _
  $region3: #{img_neural_process_forward.3} parent=0 // pred_check_branch
    %20 = sbr.rel (0) target = $region5
  $region4: #{img_neural_process_forward.3} parent=0 // pred_region
    _
  $region5: #{img_neural_process_forward.3} parent=0 // pred_fallthru
    _
  // Predicated region
  $region6: #{img_neural_process_forward.3} parent=0 // pred_check
    _
  $region7: #{img_neural_process_forward.3} parent=0 // pred_check_branch
    %22 = sbr.rel (0) target = $region9
  $region8: #{img_neural_process_forward.3} parent=0 // pred_region
    _
  $region9: #{img_neural_process_forward.3} parent=0 // pred_fallthru
    _
  // Predicated region
  $region10: #{img_neural_process_forward.3} parent=0 // pred_check
    _
  $region11: #{img_neural_process_forward.3} parent=0 // pred_check_branch
    %24 = sbr.rel (0) target = $region13
  $region12: #{img_neural_process_forward.3} parent=0 // pred_region
    _
  $region13: #{img_neural_process_forward.3} parent=0 // pred_fallthru
    _
  // Predicated region
  $region14: #{img_neural_process_forward.3} parent=0 // pred_check
    _
  $region15: #{img_neural_process_forward.3} parent=0 // pred_check_branch
    %26 = sbr.rel (0) target = $region17
  $region16: #{img_neural_process_forward.3} parent=0 // pred_region
    _
  $region17: #{img_neural_process_forward.3} parent=0 // pred_fallthru
    _
  // Predicated region
  $region18: #{img_neural_process_forward.3} parent=0 // pred_check
    _
  $region19: #{img_neural_process_forward.3} parent=0 // pred_check_branch
    %28 = sbr.rel (0) target = $region21
  $region20: #{img_neural_process_forward.3} parent=0 // pred_region
    _
  $region21: #{img_neural_process_forward.3} parent=0 // pred_fallthru
    _
  // Predicated region
  $region22: #{img_neural_process_forward.3} parent=0 // pred_check
    _
  $region23: #{img_neural_process_forward.3} parent=0 // pred_check_branch
    %30 = sbr.rel (0) target = $region25
  $region24: #{img_neural_process_forward.3} parent=0 // pred_region
    _
  $region25: #{img_neural_process_forward.3} parent=0 // pred_fallthru
    _
  // Predicated region
  $region26: #{img_neural_process_forward.3} parent=0 // pred_check
    _
  $region27: #{img_neural_process_forward.3} parent=0 // pred_check_branch
    %32 = sbr.rel (0) target = $region29
  $region28: #{img_neural_process_forward.3} parent=0 // pred_region
    _
  $region29: #{img_neural_process_forward.3} parent=0 // pred_fallthru
    _
  // Predicated region
  $region30: #{img_neural_process_forward.3} parent=0 // pred_check
    _
  $region31: #{img_neural_process_forward.3} parent=0 // pred_check_branch
    %34 = sbr.rel (0) target = $region33
  $region32: #{img_neural_process_forward.3} parent=0 // pred_region
    _
  $region33: #{img_neural_process_forward.3} parent=0 // pred_fallthru
    _
  // Predicated region
  $region34: #{img_neural_process_forward.3} parent=0 // pred_check
    _
  $region35: #{img_neural_process_forward.3} parent=0 // pred_check_branch
    %36 = sbr.rel (0) target = $region37
  $region36: #{img_neural_process_forward.3} parent=0 // pred_region
    _
  $region37: #{img_neural_process_forward.3} parent=0 // pred_fallthru
    _
  // Predicated region
  $region38: #{img_neural_process_forward.3} parent=0 // pred_check
    _
  $region39: #{img_neural_process_forward.3} parent=0 // pred_check_branch
    %38 = sbr.rel (0) target = $region41
  $region40: #{img_neural_process_forward.3} parent=0 // pred_region
    _
  $region41: #{img_neural_process_forward.3} parent=0 // pred_fallthru
    _
  // Predicated region
  $region42: #{img_neural_process_forward.3} parent=0 // pred_check
    _
  $region43: #{img_neural_process_forward.3} parent=0 // pred_check_branch
    %40 = sbr.rel (0) target = $region45
  $region44: #{img_neural_process_forward.3} parent=0 // pred_region
    _
  $region45: #{img_neural_process_forward.3} parent=0 // pred_fallthru
    _
  // Predicated region
  $region46: #{img_neural_process_forward.3} parent=0 // pred_check
    _
  $region47: #{img_neural_process_forward.3} parent=0 // pred_check_branch
    %42 = sbr.rel (0) target = $region49
  $region48: #{img_neural_process_forward.3} parent=0 // pred_region
    _
  $region49: #{img_neural_process_forward.3} parent=0 // pred_fallthru
    _
  %v43 = vld [vmem:[%s1] sm:$0xff]
  %v44 = vld [vmem:[%s1 + $0x8] sm:$0xff]
  %v45 = vld [vmem:[%s1 + $0x10] sm:$0xff]
  %v46 = vld [vmem:[%s1 + $0x18] sm:$0xff]
  %v47 = vld [vmem:[%s2] sm:$0xff]
  %v48 = vld [vmem:[%s2 + $0x8] sm:$0xff]
  %v49 = vld [vmem:[%s2 + $0x10] sm:$0xff]
  %v50 = vld [vmem:[%s2 + $0x18] sm:$0xff]
  %v51 = vld [vmem:[%s3] sm:$0xff]
  %v52 = vld [vmem:[%s3 + $0x8] sm:$0xff]
  %v53 = vld [vmem:[%s3 + $0x10] sm:$0xff]
  %v54 = vld [vmem:[%s3 + $0x18] sm:$0xff]
  %v55 = vmul.f32 %v47, %v51
  %v56 = vmul.f32 %v48, %v52
  %v57 = vmul.f32 %v49, %v53
  %v58 = vmul.f32 %v50, %v54
  %v59 = vadd.f32 %v43, %v55
  %v60 = vadd.f32 %v44, %v56
  %v61 = vadd.f32 %v45, %v57
  %v62 = vadd.f32 %v46, %v58
  %v63 = vld [vmem:[%s6] sm:$0xff]
  %v64 = vld [vmem:[%s6 + $0x8] sm:$0xff]
  %v65 = vld [vmem:[%s6 + $0x10] sm:$0xff]
  %v66 = vld [vmem:[%s6 + $0x18] sm:$0xff]
  %vm67 = vcmask 261120
  %v69 = vsel %vm67, %v63, 0
  %v72 = vsel %vm67, %v64, 0
  %v75 = vsel %vm67, %v65, 0
  %v78 = vsel %vm67, %v66, 0
  %80 = vmatprep.subr.mxu0 0.0
  %81 = vmatpush1.msra.mxu0 0.0
  %82 = vmatprep.subr.mxu0 0.0
  %83 = vmatpush1.msra.mxu0 0.0
  %84 = vmatprep.subr.mxu0 0.0
  %85 = vmatpush1.msra.mxu0 0.0
  %86 = vmatprep.subr.mxu0 0.0
  %87 = vmatpush1.msra.mxu0 0.0
  %88 = vmatprep.subr.mxu0 0.0
  %89 = vmatpush1.msra.mxu0 0.0
  %90 = vmatprep.subr.mxu0 0.0
  %91 = vmatpush1.msra.mxu0 0.0
  %92 = vmatprep.subr.mxu0 0.0
  %93 = vmatpush1.msra.mxu0 0.0
  %94 = vmatprep.subr.mxu0 0.0
  %95 = vmatpush1.msra.mxu0 0.0
  %96 = vmatprep.subr.mxu0 0.0
  %97 = vmatpush1.msra.mxu0 0.0
  %98 = vmatprep.subr.mxu0 0.0
  %99 = vmatpush1.msra.mxu0 0.0
  %100 = vmatprep.subr.mxu0 0.0
  %101 = vmatpush1.msra.mxu0 0.0
  %102 = vmatprep.subr.mxu0 0.0
  %103 = vmatpush1.msra.mxu0 0.0
  %104 = vmatprep.subr.mxu0 0.0
  %105 = vmatpush1.msra.mxu0 %v62
  %106 = vmatprep.subr.mxu0 0.0
  %107 = vmatpush1.msra.mxu0 %v61
  %108 = vmatprep.subr.mxu0 0.0
  %109 = vmatpush1.msra.mxu0 %v60
  %110 = vmatprep.subr.mxu0 0.0
  %111 = vmatpush1.msra.mxu0 %v59
  %112 = vmatprep.subr.mxu0 0.0
  %113 = vmatpush2.msra.mxu0 0.0
  %114 = vmatprep.subr.mxu0 0.0
  %115 = vmatpush2.msra.mxu0 0.0
  %116 = vmatprep.subr.mxu0 0.0
  %117 = vmatpush2.msra.mxu0 0.0
  %118 = vmatprep.subr.mxu0 0.0
  %119 = vmatpush2.msra.mxu0 0.0
  %120 = vmatprep.subr.mxu0 0.0
  %121 = vmatpush2.msra.mxu0 0.0
  %122 = vmatprep.subr.mxu0 0.0
  %123 = vmatpush2.msra.mxu0 0.0
  %124 = vmatprep.subr.mxu0 0.0
  %125 = vmatpush2.msra.mxu0 0.0
  %126 = vmatprep.subr.mxu0 0.0
  %127 = vmatpush2.msra.mxu0 0.0
  %128 = vmatprep.subr.mxu0 0.0
  %129 = vmatpush2.msra.mxu0 0.0
  %130 = vmatprep.subr.mxu0 0.0
  %131 = vmatpush2.msra.mxu0 0.0
  %132 = vmatprep.subr.mxu0 0.0
  %133 = vmatpush2.msra.mxu0 0.0
  %134 = vmatprep.subr.mxu0 0.0
  %135 = vmatpush2.msra.mxu0 0.0
  %136 = vmatprep.subr.mxu0 0.0
  %137 = vmatpush2.msra.mxu0 0.0
  %138 = vmatprep.subr.mxu0 0.0
  %139 = vmatpush2.msra.mxu0 0.0
  %140 = vmatprep.subr.mxu0 0.0
  %141 = vmatpush2.msra.mxu0 0.0
  %142 = vmatprep.subr.mxu0 0.0
  %143 = vmatpush2.msra.mxu0 0.0
  %144 = vmatprep.mubr.f32.mxu0 0.0
  %145 = vmatmul.mubr.f32.gmra.mxu0 %v69
  %v146 = vpop.f32.mrf.mxu0
  %v147 = vadd.f32 0.0, %v146
  %v148 = vpop.f32.mrf.mxu0
  %149 = vmatprep.mubr.f32.mxu0 0.0
  %150 = vmatmul.mubr.f32.gmra.mxu0 %v72
  %v151 = vpop.f32.mrf.mxu0
  %v152 = vadd.f32 0.0, %v151
  %v153 = vpop.f32.mrf.mxu0
  %154 = vmatprep.mubr.f32.mxu0 0.0
  %155 = vmatmul.mubr.f32.gmra.mxu0 %v75
  %v156 = vpop.f32.mrf.mxu0
  %v157 = vadd.f32 0.0, %v156
  %v158 = vpop.f32.mrf.mxu0
  %159 = vmatprep.mubr.f32.mxu0 0.0
  %160 = vmatmul.mubr.f32.gmra.mxu0 %v78
  %v161 = vpop.f32.mrf.mxu0
  %v162 = vadd.f32 0.0, %v161
  %v163 = vpop.f32.mrf.mxu0
  %164 = vdwg.mxu0
  %v165 = vld [vmem:[%s4] sm:$0xff]
  %v166 = vld [vmem:[%s4 + $0x8] sm:$0xff]
  %v167 = vld [vmem:[%s4 + $0x10] sm:$0xff]
  %v168 = vld [vmem:[%s4 + $0x18] sm:$0xff]
  %vm169 = vcmask 64512
  %v171 = vsel %vm169, %v147, 0
  %v174 = vsel %vm169, %v152, 0
  %v177 = vsel %vm169, %v157, 0
  %v180 = vsel %vm169, %v162, 0
  %182 = vmatprep.subr.mxu0 0.0
  %183 = vmatpush1.msra.mxu0 0.0
  %184 = vmatprep.subr.mxu0 0.0
  %185 = vmatpush1.msra.mxu0 0.0
  %186 = vmatprep.subr.mxu0 0.0
  %187 = vmatpush1.msra.mxu0 0.0
  %188 = vmatprep.subr.mxu0 0.0
  %189 = vmatpush1.msra.mxu0 0.0
  %190 = vmatprep.subr.mxu0 0.0
  %191 = vmatpush1.msra.mxu0 0.0
  %192 = vmatprep.subr.mxu0 0.0
  %193 = vmatpush1.msra.mxu0 0.0
  %194 = vmatprep.subr.mxu0 0.0
  %195 = vmatpush1.msra.mxu0 0.0
  %196 = vmatprep.subr.mxu0 0.0
  %197 = vmatpush1.msra.mxu0 0.0
  %198 = vmatprep.subr.mxu0 0.0
  %199 = vmatpush1.msra.mxu0 0.0
  %200 = vmatprep.subr.mxu0 0.0
  %201 = vmatpush1.msra.mxu0 0.0
  %202 = vmatprep.subr.mxu0 0.0
  %203 = vmatpush1.msra.mxu0 0.0
  %204 = vmatprep.subr.mxu0 0.0
  %205 = vmatpush1.msra.mxu0 0.0
  %206 = vmatprep.subr.mxu0 0.0
  %207 = vmatpush1.msra.mxu0 0.0
  %208 = vmatprep.subr.mxu0 0.0
  %209 = vmatpush1.msra.mxu0 0.0
  %210 = vmatprep.subr.mxu0 0.0
  %211 = vmatpush1.msra.mxu0 0.0
  %212 = vmatprep.subr.mxu0 %v166
  %213 = vmatpush1.msra.mxu0 %v165
  %214 = vmatprep.subr.mxu0 0.0
  %215 = vmatpush2.msra.mxu0 0.0
  %216 = vmatprep.subr.mxu0 0.0
  %217 = vmatpush2.msra.mxu0 0.0
  %218 = vmatprep.subr.mxu0 0.0
  %219 = vmatpush2.msra.mxu0 0.0
  %220 = vmatprep.subr.mxu0 0.0
  %221 = vmatpush2.msra.mxu0 0.0
  %222 = vmatprep.subr.mxu0 0.0
  %223 = vmatpush2.msra.mxu0 0.0
  %224 = vmatprep.subr.mxu0 0.0
  %225 = vmatpush2.msra.mxu0 0.0
  %226 = vmatprep.subr.mxu0 0.0
  %227 = vmatpush2.msra.mxu0 0.0
  %228 = vmatprep.subr.mxu0 0.0
  %229 = vmatpush2.msra.mxu0 0.0
  %230 = vmatprep.subr.mxu0 0.0
  %231 = vmatpush2.msra.mxu0 0.0
  %232 = vmatprep.subr.mxu0 0.0
  %233 = vmatpush2.msra.mxu0 0.0
  %234 = vmatprep.subr.mxu0 0.0
  %235 = vmatpush2.msra.mxu0 0.0
  %236 = vmatprep.subr.mxu0 0.0
  %237 = vmatpush2.msra.mxu0 0.0
  %238 = vmatprep.subr.mxu0 0.0
  %239 = vmatpush2.msra.mxu0 0.0
  %240 = vmatprep.subr.mxu0 0.0
  %241 = vmatpush2.msra.mxu0 0.0
  %242 = vmatprep.subr.mxu0 0.0
  %243 = vmatpush2.msra.mxu0 0.0
  %244 = vmatprep.subr.mxu0 0.0
  %245 = vmatpush2.msra.mxu0 0.0
  %246 = vmatprep.mubr.f32.mxu0 0.0
  %247 = vmatmul.mubr.f32.gmra.mxu0 %v171
  %v248 = vpop.f32.mrf.mxu0
  %v249 = vadd.f32 0.0, %v248
  %v250 = vpop.f32.mrf.mxu0
  %v251 = vadd.f32 0.0, %v250
  %252 = vmatprep.mubr.f32.mxu0 0.0
  %253 = vmatmul.mubr.f32.gmra.mxu0 %v174
  %v254 = vpop.f32.mrf.mxu0
  %v255 = vadd.f32 0.0, %v254
  %v256 = vpop.f32.mrf.mxu0
  %v257 = vadd.f32 0.0, %v256
  %258 = vmatprep.mubr.f32.mxu0 0.0
  %259 = vmatmul.mubr.f32.gmra.mxu0 %v177
  %v260 = vpop.f32.mrf.mxu0
  %v261 = vadd.f32 0.0, %v260
  %v262 = vpop.f32.mrf.mxu0
  %v263 = vadd.f32 0.0, %v262
  %264 = vmatprep.mubr.f32.mxu0 0.0
  %265 = vmatmul.mubr.f32.gmra.mxu0 %v180
  %v266 = vpop.f32.mrf.mxu0
  %v267 = vadd.f32 0.0, %v266
  %v268 = vpop.f32.mrf.mxu0
  %v269 = vadd.f32 0.0, %v268
  %270 = vdwg.mxu0
  %271 = vmatprep.subr.mxu0 0.0
  %272 = vmatpush1.msra.mxu0 0.0
  %273 = vmatprep.subr.mxu0 0.0
  %274 = vmatpush1.msra.mxu0 0.0
  %275 = vmatprep.subr.mxu0 0.0
  %276 = vmatpush1.msra.mxu0 0.0
  %277 = vmatprep.subr.mxu0 0.0
  %278 = vmatpush1.msra.mxu0 0.0
  %279 = vmatprep.subr.mxu0 0.0
  %280 = vmatpush1.msra.mxu0 0.0
  %281 = vmatprep.subr.mxu0 0.0
  %282 = vmatpush1.msra.mxu0 0.0
  %283 = vmatprep.subr.mxu0 0.0
  %284 = vmatpush1.msra.mxu0 0.0
  %285 = vmatprep.subr.mxu0 0.0
  %286 = vmatpush1.msra.mxu0 0.0
  %287 = vmatprep.subr.mxu0 0.0
  %288 = vmatpush1.msra.mxu0 0.0
  %289 = vmatprep.subr.mxu0 0.0
  %290 = vmatpush1.msra.mxu0 0.0
  %291 = vmatprep.subr.mxu0 0.0
  %292 = vmatpush1.msra.mxu0 0.0
  %293 = vmatprep.subr.mxu0 0.0
  %294 = vmatpush1.msra.mxu0 0.0
  %295 = vmatprep.subr.mxu0 0.0
  %296 = vmatpush1.msra.mxu0 0.0
  %297 = vmatprep.subr.mxu0 0.0
  %298 = vmatpush1.msra.mxu0 0.0
  %299 = vmatprep.subr.mxu0 0.0
  %300 = vmatpush1.msra.mxu0 0.0
  %301 = vmatprep.subr.mxu0 %v168
  %302 = vmatpush1.msra.mxu0 %v167
  %303 = vmatprep.subr.mxu0 0.0
  %304 = vmatpush2.msra.mxu0 0.0
  %305 = vmatprep.subr.mxu0 0.0
  %306 = vmatpush2.msra.mxu0 0.0
  %307 = vmatprep.subr.mxu0 0.0
  %308 = vmatpush2.msra.mxu0 0.0
  %309 = vmatprep.subr.mxu0 0.0
  %310 = vmatpush2.msra.mxu0 0.0
  %311 = vmatprep.subr.mxu0 0.0
  %312 = vmatpush2.msra.mxu0 0.0
  %313 = vmatprep.subr.mxu0 0.0
  %314 = vmatpush2.msra.mxu0 0.0
  %315 = vmatprep.subr.mxu0 0.0
  %316 = vmatpush2.msra.mxu0 0.0
  %317 = vmatprep.subr.mxu0 0.0
  %318 = vmatpush2.msra.mxu0 0.0
  %319 = vmatprep.subr.mxu0 0.0
  %320 = vmatpush2.msra.mxu0 0.0
  %321 = vmatprep.subr.mxu0 0.0
  %322 = vmatpush2.msra.mxu0 0.0
  %323 = vmatprep.subr.mxu0 0.0
  %324 = vmatpush2.msra.mxu0 0.0
  %325 = vmatprep.subr.mxu0 0.0
  %326 = vmatpush2.msra.mxu0 0.0
  %327 = vmatprep.subr.mxu0 0.0
  %328 = vmatpush2.msra.mxu0 0.0
  %329 = vmatprep.subr.mxu0 0.0
  %330 = vmatpush2.msra.mxu0 0.0
  %331 = vmatprep.subr.mxu0 0.0
  %332 = vmatpush2.msra.mxu0 0.0
  %333 = vmatprep.subr.mxu0 0.0
  %334 = vmatpush2.msra.mxu0 0.0
  %335 = vmatprep.mubr.f32.mxu0 0.0
  %336 = vmatmul.mubr.f32.gmra.mxu0 %v171
  %v337 = vpop.f32.mrf.mxu0
  %v338 = vadd.f32 0.0, %v337
  %v339 = vpop.f32.mrf.mxu0
  %v340 = vadd.f32 0.0, %v339
  %341 = vmatprep.mubr.f32.mxu0 0.0
  %342 = vmatmul.mubr.f32.gmra.mxu0 %v174
  %v343 = vpop.f32.mrf.mxu0
  %v344 = vadd.f32 0.0, %v343
  %v345 = vpop.f32.mrf.mxu0
  %v346 = vadd.f32 0.0, %v345
  %347 = vmatprep.mubr.f32.mxu0 0.0
  %348 = vmatmul.mubr.f32.gmra.mxu0 %v177
  %v349 = vpop.f32.mrf.mxu0
  %v350 = vadd.f32 0.0, %v349
  %v351 = vpop.f32.mrf.mxu0
  %v352 = vadd.f32 0.0, %v351
  %353 = vmatprep.mubr.f32.mxu0 0.0
  %354 = vmatmul.mubr.f32.gmra.mxu0 %v180
  %v355 = vpop.f32.mrf.mxu0
  %v356 = vadd.f32 0.0, %v355
  %v357 = vpop.f32.mrf.mxu0
  %v358 = vadd.f32 0.0, %v357
  %359 = vdwg.mxu0
  %v360 = vld [vmem:[%s5] sm:$0xff]
  %v361 = vld [vmem:[%s5 + $0x8] sm:$0xff]
  %v362 = vld [vmem:[%s5 + $0x10] sm:$0xff]
  %v363 = vld [vmem:[%s5 + $0x18] sm:$0xff]
  %v364 = vld [vmem:[%s0] sm:$0xff]
  %v365 = vld [vmem:[%s0 + $0x8] sm:$0xff]
  %v366 = vld [vmem:[%s0 + $0x10] sm:$0xff]
  %v367 = vld [vmem:[%s0 + $0x18] sm:$0xff]
  %v369 = vsel %vm169, %v360, 0
  %v372 = vsel %vm169, %v361, 0
  %v375 = vsel %vm169, %v362, 0
  %v378 = vsel %vm169, %v363, 0
  %380 = vmatprep.subr.mxu0 0.0
  %381 = vmatpush1.msra.mxu0 0.0
  %382 = vmatprep.subr.mxu0 0.0
  %383 = vmatpush1.msra.mxu0 0.0
  %384 = vmatprep.subr.mxu0 0.0
  %385 = vmatpush1.msra.mxu0 0.0
  %386 = vmatprep.subr.mxu0 0.0
  %387 = vmatpush1.msra.mxu0 0.0
  %388 = vmatprep.subr.mxu0 0.0
  %389 = vmatpush1.msra.mxu0 0.0
  %390 = vmatprep.subr.mxu0 0.0
  %391 = vmatpush1.msra.mxu0 0.0
  %392 = vmatprep.subr.mxu0 0.0
  %393 = vmatpush1.msra.mxu0 0.0
  %394 = vmatprep.subr.mxu0 0.0
  %395 = vmatpush1.msra.mxu0 0.0
  %396 = vmatprep.subr.mxu0 0.0
  %397 = vmatpush1.msra.mxu0 0.0
  %398 = vmatprep.subr.mxu0 0.0
  %399 = vmatpush1.msra.mxu0 0.0
  %400 = vmatprep.subr.mxu0 0.0
  %401 = vmatpush1.msra.mxu0 0.0
  %402 = vmatprep.subr.mxu0 0.0
  %403 = vmatpush1.msra.mxu0 0.0
  %404 = vmatprep.subr.mxu0 0.0
  %405 = vmatpush1.msra.mxu0 0.0
  %406 = vmatprep.subr.mxu0 0.0
  %407 = vmatpush1.msra.mxu0 0.0
  %408 = vmatprep.subr.mxu0 0.0
  %409 = vmatpush1.msra.mxu0 0.0
  %410 = vmatprep.subr.mxu0 %v365
  %411 = vmatpush1.msra.mxu0 %v364
  %412 = vmatprep.subr.mxu0 0.0
  %413 = vmatpush2.msra.mxu0 0.0
  %414 = vmatprep.subr.mxu0 0.0
  %415 = vmatpush2.msra.mxu0 0.0
  %416 = vmatprep.subr.mxu0 0.0
  %417 = vmatpush2.msra.mxu0 0.0
  %418 = vmatprep.subr.mxu0 0.0
  %419 = vmatpush2.msra.mxu0 0.0
  %420 = vmatprep.subr.mxu0 0.0
  %421 = vmatpush2.msra.mxu0 0.0
  %422 = vmatprep.subr.mxu0 0.0
  %423 = vmatpush2.msra.mxu0 0.0
  %424 = vmatprep.subr.mxu0 0.0
  %425 = vmatpush2.msra.mxu0 0.0
  %426 = vmatprep.subr.mxu0 0.0
  %427 = vmatpush2.msra.mxu0 0.0
  %428 = vmatprep.subr.mxu0 0.0
  %429 = vmatpush2.msra.mxu0 0.0
  %430 = vmatprep.subr.mxu0 0.0
  %431 = vmatpush2.msra.mxu0 0.0
  %432 = vmatprep.subr.mxu0 0.0
  %433 = vmatpush2.msra.mxu0 0.0
  %434 = vmatprep.subr.mxu0 0.0
  %435 = vmatpush2.msra.mxu0 0.0
  %436 = vmatprep.subr.mxu0 0.0
  %437 = vmatpush2.msra.mxu0 0.0
  %438 = vmatprep.subr.mxu0 0.0
  %439 = vmatpush2.msra.mxu0 0.0
  %440 = vmatprep.subr.mxu0 0.0
  %441 = vmatpush2.msra.mxu0 0.0
  %442 = vmatprep.subr.mxu0 0.0
  %443 = vmatpush2.msra.mxu0 0.0
  %444 = vmatprep.mubr.f32.mxu0 0.0
  %445 = vmatmul.mubr.f32.gmra.mxu0 %v369
  %v446 = vpop.f32.mrf.mxu0
  %v447 = vadd.f32 %v249, %v446
  %v448 = vpop.f32.mrf.mxu0
  %v449 = vadd.f32 %v251, %v448
  %450 = vmatprep.mubr.f32.mxu0 0.0
  %451 = vmatmul.mubr.f32.gmra.mxu0 %v372
  %v452 = vpop.f32.mrf.mxu0
  %v453 = vadd.f32 %v255, %v452
  %v454 = vpop.f32.mrf.mxu0
  %v455 = vadd.f32 %v257, %v454
  %456 = vmatprep.mubr.f32.mxu0 0.0
  %457 = vmatmul.mubr.f32.gmra.mxu0 %v375
  %v458 = vpop.f32.mrf.mxu0
  %v459 = vadd.f32 %v261, %v458
  %v460 = vpop.f32.mrf.mxu0
  %v461 = vadd.f32 %v263, %v460
  %462 = vmatprep.mubr.f32.mxu0 0.0
  %463 = vmatmul.mubr.f32.gmra.mxu0 %v378
  %v464 = vpop.f32.mrf.mxu0
  %v465 = vadd.f32 %v267, %v464
  %v466 = vpop.f32.mrf.mxu0
  %v467 = vadd.f32 %v269, %v466
  %468 = vdwg.mxu0
  %469 = vmatprep.subr.mxu0 0.0
  %470 = vmatpush1.msra.mxu0 0.0
  %471 = vmatprep.subr.mxu0 0.0
  %472 = vmatpush1.msra.mxu0 0.0
  %473 = vmatprep.subr.mxu0 0.0
  %474 = vmatpush1.msra.mxu0 0.0
  %475 = vmatprep.subr.mxu0 0.0
  %476 = vmatpush1.msra.mxu0 0.0
  %477 = vmatprep.subr.mxu0 0.0
  %478 = vmatpush1.msra.mxu0 0.0
  %479 = vmatprep.subr.mxu0 0.0
  %480 = vmatpush1.msra.mxu0 0.0
  %481 = vmatprep.subr.mxu0 0.0
  %482 = vmatpush1.msra.mxu0 0.0
  %483 = vmatprep.subr.mxu0 0.0
  %484 = vmatpush1.msra.mxu0 0.0
  %485 = vmatprep.subr.mxu0 0.0
  %486 = vmatpush1.msra.mxu0 0.0
  %487 = vmatprep.subr.mxu0 0.0
  %488 = vmatpush1.msra.mxu0 0.0
  %489 = vmatprep.subr.mxu0 0.0
  %490 = vmatpush1.msra.mxu0 0.0
  %491 = vmatprep.subr.mxu0 0.0
  %492 = vmatpush1.msra.mxu0 0.0
  %493 = vmatprep.subr.mxu0 0.0
  %494 = vmatpush1.msra.mxu0 0.0
  %495 = vmatprep.subr.mxu0 0.0
  %496 = vmatpush1.msra.mxu0 0.0
  %497 = vmatprep.subr.mxu0 0.0
  %498 = vmatpush1.msra.mxu0 0.0
  %499 = vmatprep.subr.mxu0 %v367
  %500 = vmatpush1.msra.mxu0 %v366
  %501 = vmatprep.subr.mxu0 0.0
  %502 = vmatpush2.msra.mxu0 0.0
  %503 = vmatprep.subr.mxu0 0.0
  %504 = vmatpush2.msra.mxu0 0.0
  %505 = vmatprep.subr.mxu0 0.0
  %506 = vmatpush2.msra.mxu0 0.0
  %507 = vmatprep.subr.mxu0 0.0
  %508 = vmatpush2.msra.mxu0 0.0
  %509 = vmatprep.subr.mxu0 0.0
  %510 = vmatpush2.msra.mxu0 0.0
  %511 = vmatprep.subr.mxu0 0.0
  %512 = vmatpush2.msra.mxu0 0.0
  %513 = vmatprep.subr.mxu0 0.0
  %514 = vmatpush2.msra.mxu0 0.0
  %515 = vmatprep.subr.mxu0 0.0
  %516 = vmatpush2.msra.mxu0 0.0
  %517 = vmatprep.subr.mxu0 0.0
  %518 = vmatpush2.msra.mxu0 0.0
  %519 = vmatprep.subr.mxu0 0.0
  %520 = vmatpush2.msra.mxu0 0.0
  %521 = vmatprep.subr.mxu0 0.0
  %522 = vmatpush2.msra.mxu0 0.0
  %523 = vmatprep.subr.mxu0 0.0
  %524 = vmatpush2.msra.mxu0 0.0
  %525 = vmatprep.subr.mxu0 0.0
  %526 = vmatpush2.msra.mxu0 0.0
  %527 = vmatprep.subr.mxu0 0.0
  %528 = vmatpush2.msra.mxu0 0.0
  %529 = vmatprep.subr.mxu0 0.0
  %530 = vmatpush2.msra.mxu0 0.0
  %531 = vmatprep.subr.mxu0 0.0
  %532 = vmatpush2.msra.mxu0 0.0
  %533 = vmatprep.mubr.f32.mxu0 0.0
  %534 = vmatmul.mubr.f32.gmra.mxu0 %v369
  %v535 = vpop.f32.mrf.mxu0
  %v536 = vadd.f32 %v338, %v535
  %v537 = vpop.f32.mrf.mxu0
  %v538 = vadd.f32 %v340, %v537
  %539 = vmatprep.mubr.f32.mxu0 0.0
  %540 = vmatmul.mubr.f32.gmra.mxu0 %v372
  %v541 = vpop.f32.mrf.mxu0
  %v542 = vadd.f32 %v344, %v541
  %v543 = vpop.f32.mrf.mxu0
  %v544 = vadd.f32 %v346, %v543
  %545 = vmatprep.mubr.f32.mxu0 0.0
  %546 = vmatmul.mubr.f32.gmra.mxu0 %v375
  %v547 = vpop.f32.mrf.mxu0
  %v548 = vadd.f32 %v350, %v547
  %v549 = vpop.f32.mrf.mxu0
  %v550 = vadd.f32 %v352, %v549
  %551 = vmatprep.mubr.f32.mxu0 0.0
  %552 = vmatmul.mubr.f32.gmra.mxu0 %v378
  %v553 = vpop.f32.mrf.mxu0
  %v554 = vadd.f32 %v356, %v553
  %v555 = vpop.f32.mrf.mxu0
  %v556 = vadd.f32 %v358, %v555
  %557 = vdwg.mxu0
  %v558 = vld [vmem:[%s7] sm:$0xff]
  %v559 = vld [vmem:[%s7 + $0x8] sm:$0xff]
  %v560 = vld [vmem:[%s7 + $0x10] sm:$0xff]
  %v561 = vld [vmem:[%s7 + $0x18] sm:$0xff]
  %563 = vset.pattern.permute.xlu0 0
  %564 = vperm.xlu0 %563, %v558
  %v565 = vpop.permute.xlu0 %564
  %568 = vset.pattern.permute.xlu0 0
  %569 = vperm.xlu0 %568, %v559
  %v570 = vpop.permute.xlu0 %569
  %573 = vset.pattern.permute.xlu0 0
  %574 = vperm.xlu0 %573, %v560
  %v575 = vpop.permute.xlu0 %574
  %578 = vset.pattern.permute.xlu0 0
  %579 = vperm.xlu0 %578, %v561
  %v580 = vpop.permute.xlu0 %579
  %v582 = vadd.f32 %v447, %v565
  %v583 = vadd.f32 %v449, %v565
  %v584 = vadd.f32 %v536, %v565
  %v585 = vadd.f32 %v538, %v565
  %v586 = vadd.f32 %v453, %v570
  %v587 = vadd.f32 %v455, %v570
  %v588 = vadd.f32 %v542, %v570
  %v589 = vadd.f32 %v544, %v570
  %v590 = vadd.f32 %v459, %v575
  %v591 = vadd.f32 %v461, %v575
  %v592 = vadd.f32 %v548, %v575
  %v593 = vadd.f32 %v550, %v575
  %v594 = vadd.f32 %v465, %v580
  %v595 = vadd.f32 %v467, %v580
  %v596 = vadd.f32 %v554, %v580
  %v597 = vadd.f32 %v556, %v580
  %v598 = vmax.f32 %v582, 0.0
  %v599 = vmax.f32 %v583, 0.0
  %v600 = vmax.f32 %v584, 0.0
  %v601 = vmax.f32 %v585, 0.0
  %v602 = vmax.f32 %v586, 0.0
  %v603 = vmax.f32 %v587, 0.0
  %v604 = vmax.f32 %v588, 0.0
  %v605 = vmax.f32 %v589, 0.0
  %v606 = vmax.f32 %v590, 0.0
  %v607 = vmax.f32 %v591, 0.0
  %v608 = vmax.f32 %v592, 0.0
  %v609 = vmax.f32 %v593, 0.0
  %v610 = vmax.f32 %v594, 0.0
  %v611 = vmax.f32 %v595, 0.0
  %v612 = vmax.f32 %v596, 0.0
  %v613 = vmax.f32 %v597, 0.0
  %v614 = vld [vmem:[%s8] sm:$0xff]
  %v615 = vld [vmem:[%s8 + $0x8] sm:$0xff]
  %v616 = vld [vmem:[%s8 + $0x10] sm:$0xff]
  %v617 = vld [vmem:[%s8 + $0x18] sm:$0xff]
  %v618 = vld [vmem:[%s9] sm:$0xff]
  %v619 = vld [vmem:[%s9 + $0x8] sm:$0xff]
  %v620 = vld [vmem:[%s9 + $0x10] sm:$0xff]
  %v621 = vld [vmem:[%s9 + $0x18] sm:$0xff]
  %623 = vset.pattern.permute.xlu0 0
  %624 = vperm.xlu0 %623, %v618
  %v625 = vpop.permute.xlu0 %624
  %628 = vset.pattern.permute.xlu0 0
  %629 = vperm.xlu0 %628, %v619
  %v630 = vpop.permute.xlu0 %629
  %633 = vset.pattern.permute.xlu0 0
  %634 = vperm.xlu0 %633, %v620
  %v635 = vpop.permute.xlu0 %634
  %638 = vset.pattern.permute.xlu0 0
  %639 = vperm.xlu0 %638, %v621
  %v640 = vpop.permute.xlu0 %639
  %v643 = vsel %vm67, %v614, 0
  %v646 = vsel %vm67, %v615, 0
  %v649 = vsel %vm67, %v616, 0
  %v652 = vsel %vm67, %v617, 0
  %654 = vmatprep.subr.mxu0 0.0
  %655 = vmatpush1.msra.mxu0 0.0
  %656 = vmatprep.subr.mxu0 0.0
  %657 = vmatpush1.msra.mxu0 0.0
  %658 = vmatprep.subr.mxu0 0.0
  %659 = vmatpush1.msra.mxu0 0.0
  %660 = vmatprep.subr.mxu0 0.0
  %661 = vmatpush1.msra.mxu0 0.0
  %662 = vmatprep.subr.mxu0 0.0
  %663 = vmatpush1.msra.mxu0 0.0
  %664 = vmatprep.subr.mxu0 0.0
  %665 = vmatpush1.msra.mxu0 0.0
  %666 = vmatprep.subr.mxu0 0.0
  %667 = vmatpush1.msra.mxu0 0.0
  %668 = vmatprep.subr.mxu0 0.0
  %669 = vmatpush1.msra.mxu0 0.0
  %670 = vmatprep.subr.mxu0 0.0
  %671 = vmatpush1.msra.mxu0 0.0
  %672 = vmatprep.subr.mxu0 0.0
  %673 = vmatpush1.msra.mxu0 0.0
  %674 = vmatprep.subr.mxu0 0.0
  %675 = vmatpush1.msra.mxu0 0.0
  %676 = vmatprep.subr.mxu0 0.0
  %677 = vmatpush1.msra.mxu0 0.0
  %678 = vmatprep.subr.mxu0 %v611
  %679 = vmatpush1.msra.mxu0 %v610
  %680 = vmatprep.subr.mxu0 %v607
  %681 = vmatpush1.msra.mxu0 %v606
  %682 = vmatprep.subr.mxu0 %v603
  %683 = vmatpush1.msra.mxu0 %v602
  %684 = vmatprep.subr.mxu0 %v599
  %685 = vmatpush1.msra.mxu0 %v598
  %686 = vmatprep.subr.mxu0 0.0
  %687 = vmatpush2.msra.mxu0 0.0
  %688 = vmatprep.subr.mxu0 0.0
  %689 = vmatpush2.msra.mxu0 0.0
  %690 = vmatprep.subr.mxu0 0.0
  %691 = vmatpush2.msra.mxu0 0.0
  %692 = vmatprep.subr.mxu0 0.0
  %693 = vmatpush2.msra.mxu0 0.0
  %694 = vmatprep.subr.mxu0 0.0
  %695 = vmatpush2.msra.mxu0 0.0
  %696 = vmatprep.subr.mxu0 0.0
  %697 = vmatpush2.msra.mxu0 0.0
  %698 = vmatprep.subr.mxu0 0.0
  %699 = vmatpush2.msra.mxu0 0.0
  %700 = vmatprep.subr.mxu0 0.0
  %701 = vmatpush2.msra.mxu0 0.0
  %702 = vmatprep.subr.mxu0 0.0
  %703 = vmatpush2.msra.mxu0 0.0
  %704 = vmatprep.subr.mxu0 0.0
  %705 = vmatpush2.msra.mxu0 0.0
  %706 = vmatprep.subr.mxu0 0.0
  %707 = vmatpush2.msra.mxu0 0.0
  %708 = vmatprep.subr.mxu0 0.0
  %709 = vmatpush2.msra.mxu0 0.0
  %710 = vmatprep.subr.mxu0 0.0
  %711 = vmatpush2.msra.mxu0 0.0
  %712 = vmatprep.subr.mxu0 0.0
  %713 = vmatpush2.msra.mxu0 0.0
  %714 = vmatprep.subr.mxu0 0.0
  %715 = vmatpush2.msra.mxu0 0.0
  %716 = vmatprep.subr.mxu0 0.0
  %717 = vmatpush2.msra.mxu0 0.0
  %718 = vmatprep.mubr.f32.mxu0 0.0
  %719 = vmatmul.mubr.f32.gmra.mxu0 %v643
  %v720 = vpop.f32.mrf.mxu0
  %v721 = vadd.f32 %v625, %v720
  %v722 = vpop.f32.mrf.mxu0
  %v723 = vadd.f32 %v625, %v722
  %724 = vmatprep.mubr.f32.mxu0 0.0
  %725 = vmatmul.mubr.f32.gmra.mxu0 %v646
  %v726 = vpop.f32.mrf.mxu0
  %v727 = vadd.f32 %v630, %v726
  %v728 = vpop.f32.mrf.mxu0
  %v729 = vadd.f32 %v630, %v728
  %730 = vmatprep.mubr.f32.mxu0 0.0
  %731 = vmatmul.mubr.f32.gmra.mxu0 %v649
  %v732 = vpop.f32.mrf.mxu0
  %v733 = vadd.f32 %v635, %v732
  %v734 = vpop.f32.mrf.mxu0
  %v735 = vadd.f32 %v635, %v734
  %736 = vmatprep.mubr.f32.mxu0 0.0
  %737 = vmatmul.mubr.f32.gmra.mxu0 %v652
  %v738 = vpop.f32.mrf.mxu0
  %v739 = vadd.f32 %v640, %v738
  %v740 = vpop.f32.mrf.mxu0
  %v741 = vadd.f32 %v640, %v740
  %742 = vdwg.mxu0
  %743 = vmatprep.subr.mxu0 0.0
  %744 = vmatpush1.msra.mxu0 0.0
  %745 = vmatprep.subr.mxu0 0.0
  %746 = vmatpush1.msra.mxu0 0.0
  %747 = vmatprep.subr.mxu0 0.0
  %748 = vmatpush1.msra.mxu0 0.0
  %749 = vmatprep.subr.mxu0 0.0
  %750 = vmatpush1.msra.mxu0 0.0
  %751 = vmatprep.subr.mxu0 0.0
  %752 = vmatpush1.msra.mxu0 0.0
  %753 = vmatprep.subr.mxu0 0.0
  %754 = vmatpush1.msra.mxu0 0.0
  %755 = vmatprep.subr.mxu0 0.0
  %756 = vmatpush1.msra.mxu0 0.0
  %757 = vmatprep.subr.mxu0 0.0
  %758 = vmatpush1.msra.mxu0 0.0
  %759 = vmatprep.subr.mxu0 0.0
  %760 = vmatpush1.msra.mxu0 0.0
  %761 = vmatprep.subr.mxu0 0.0
  %762 = vmatpush1.msra.mxu0 0.0
  %763 = vmatprep.subr.mxu0 0.0
  %764 = vmatpush1.msra.mxu0 0.0
  %765 = vmatprep.subr.mxu0 0.0
  %766 = vmatpush1.msra.mxu0 0.0
  %767 = vmatprep.subr.mxu0 %v613
  %768 = vmatpush1.msra.mxu0 %v612
  %769 = vmatprep.subr.mxu0 %v609
  %770 = vmatpush1.msra.mxu0 %v608
  %771 = vmatprep.subr.mxu0 %v605
  %772 = vmatpush1.msra.mxu0 %v604
  %773 = vmatprep.subr.mxu0 %v601
  %774 = vmatpush1.msra.mxu0 %v600
  %775 = vmatprep.subr.mxu0 0.0
  %776 = vmatpush2.msra.mxu0 0.0
  %777 = vmatprep.subr.mxu0 0.0
  %778 = vmatpush2.msra.mxu0 0.0
  %779 = vmatprep.subr.mxu0 0.0
  %780 = vmatpush2.msra.mxu0 0.0
  %781 = vmatprep.subr.mxu0 0.0
  %782 = vmatpush2.msra.mxu0 0.0
  %783 = vmatprep.subr.mxu0 0.0
  %784 = vmatpush2.msra.mxu0 0.0
  %785 = vmatprep.subr.mxu0 0.0
  %786 = vmatpush2.msra.mxu0 0.0
  %787 = vmatprep.subr.mxu0 0.0
  %788 = vmatpush2.msra.mxu0 0.0
  %789 = vmatprep.subr.mxu0 0.0
  %790 = vmatpush2.msra.mxu0 0.0
  %791 = vmatprep.subr.mxu0 0.0
  %792 = vmatpush2.msra.mxu0 0.0
  %793 = vmatprep.subr.mxu0 0.0
  %794 = vmatpush2.msra.mxu0 0.0
  %795 = vmatprep.subr.mxu0 0.0
  %796 = vmatpush2.msra.mxu0 0.0
  %797 = vmatprep.subr.mxu0 0.0
  %798 = vmatpush2.msra.mxu0 0.0
  %799 = vmatprep.subr.mxu0 0.0
  %800 = vmatpush2.msra.mxu0 0.0
  %801 = vmatprep.subr.mxu0 0.0
  %802 = vmatpush2.msra.mxu0 0.0
  %803 = vmatprep.subr.mxu0 0.0
  %804 = vmatpush2.msra.mxu0 0.0
  %805 = vmatprep.subr.mxu0 0.0
  %806 = vmatpush2.msra.mxu0 0.0
  %807 = vmatprep.mubr.f32.mxu0 0.0
  %808 = vmatmul.mubr.f32.gmra.mxu0 %v643
  %v809 = vpop.f32.mrf.mxu0
  %v810 = vadd.f32 %v625, %v809
  %v811 = vpop.f32.mrf.mxu0
  %v812 = vadd.f32 %v625, %v811
  %813 = vmatprep.mubr.f32.mxu0 0.0
  %814 = vmatmul.mubr.f32.gmra.mxu0 %v646
  %v815 = vpop.f32.mrf.mxu0
  %v816 = vadd.f32 %v630, %v815
  %v817 = vpop.f32.mrf.mxu0
  %v818 = vadd.f32 %v630, %v817
  %819 = vmatprep.mubr.f32.mxu0 0.0
  %820 = vmatmul.mubr.f32.gmra.mxu0 %v649
  %v821 = vpop.f32.mrf.mxu0
  %v822 = vadd.f32 %v635, %v821
  %v823 = vpop.f32.mrf.mxu0
  %v824 = vadd.f32 %v635, %v823
  %825 = vmatprep.mubr.f32.mxu0 0.0
  %826 = vmatmul.mubr.f32.gmra.mxu0 %v652
  %v827 = vpop.f32.mrf.mxu0
  %v828 = vadd.f32 %v640, %v827
  %v829 = vpop.f32.mrf.mxu0
  %v830 = vadd.f32 %v640, %v829
  %831 = vdwg.mxu0
  %v832 = vmax.f32 %v721, 0.0
  %v833 = vmax.f32 %v723, 0.0
  %v834 = vmax.f32 %v810, 0.0
  %v835 = vmax.f32 %v812, 0.0
  %v836 = vmax.f32 %v727, 0.0
  %v837 = vmax.f32 %v729, 0.0
  %v838 = vmax.f32 %v816, 0.0
  %v839 = vmax.f32 %v818, 0.0
  %v840 = vmax.f32 %v733, 0.0
  %v841 = vmax.f32 %v735, 0.0
  %v842 = vmax.f32 %v822, 0.0
  %v843 = vmax.f32 %v824, 0.0
  %v844 = vmax.f32 %v739, 0.0
  %v845 = vmax.f32 %v741, 0.0
  %v846 = vmax.f32 %v828, 0.0
  %v847 = vmax.f32 %v830, 0.0
  %v848 = vld [vmem:[%s10] sm:$0x3]
  %v849 = vld [vmem:[%s11] sm:$0x3]
  %851 = vset.pattern.permute.xlu0 0
  %852 = vperm.xlu0 %851, %v849
  %v853 = vpop.permute.xlu0 %852
  %v856 = vsel %vm67, %v848, 0
  %858 = vmatprep.subr.mxu0 0.0
  %859 = vmatpush1.msra.mxu0 0.0
  %860 = vmatprep.subr.mxu0 0.0
  %861 = vmatpush1.msra.mxu0 0.0
  %862 = vmatprep.subr.mxu0 0.0
  %863 = vmatpush1.msra.mxu0 0.0
  %864 = vmatprep.subr.mxu0 0.0
  %865 = vmatpush1.msra.mxu0 0.0
  %866 = vmatprep.subr.mxu0 0.0
  %867 = vmatpush1.msra.mxu0 0.0
  %868 = vmatprep.subr.mxu0 0.0
  %869 = vmatpush1.msra.mxu0 0.0
  %870 = vmatprep.subr.mxu0 0.0
  %871 = vmatpush1.msra.mxu0 0.0
  %872 = vmatprep.subr.mxu0 0.0
  %873 = vmatpush1.msra.mxu0 0.0
  %874 = vmatprep.subr.mxu0 0.0
  %875 = vmatpush1.msra.mxu0 0.0
  %876 = vmatprep.subr.mxu0 0.0
  %877 = vmatpush1.msra.mxu0 0.0
  %878 = vmatprep.subr.mxu0 0.0
  %879 = vmatpush1.msra.mxu0 0.0
  %880 = vmatprep.subr.mxu0 0.0
  %881 = vmatpush1.msra.mxu0 0.0
  %882 = vmatprep.subr.mxu0 %v845
  %883 = vmatpush1.msra.mxu0 %v844
  %884 = vmatprep.subr.mxu0 %v841
  %885 = vmatpush1.msra.mxu0 %v840
  %886 = vmatprep.subr.mxu0 %v837
  %887 = vmatpush1.msra.mxu0 %v836
  %888 = vmatprep.subr.mxu0 %v833
  %889 = vmatpush1.msra.mxu0 %v832
  %890 = vmatprep.subr.mxu0 0.0
  %891 = vmatpush2.msra.mxu0 0.0
  %892 = vmatprep.subr.mxu0 0.0
  %893 = vmatpush2.msra.mxu0 0.0
  %894 = vmatprep.subr.mxu0 0.0
  %895 = vmatpush2.msra.mxu0 0.0
  %896 = vmatprep.subr.mxu0 0.0
  %897 = vmatpush2.msra.mxu0 0.0
  %898 = vmatprep.subr.mxu0 0.0
  %899 = vmatpush2.msra.mxu0 0.0
  %900 = vmatprep.subr.mxu0 0.0
  %901 = vmatpush2.msra.mxu0 0.0
  %902 = vmatprep.subr.mxu0 0.0
  %903 = vmatpush2.msra.mxu0 0.0
  %904 = vmatprep.subr.mxu0 0.0
  %905 = vmatpush2.msra.mxu0 0.0
  %906 = vmatprep.subr.mxu0 0.0
  %907 = vmatpush2.msra.mxu0 0.0
  %908 = vmatprep.subr.mxu0 0.0
  %909 = vmatpush2.msra.mxu0 0.0
  %910 = vmatprep.subr.mxu0 0.0
  %911 = vmatpush2.msra.mxu0 0.0
  %912 = vmatprep.subr.mxu0 0.0
  %913 = vmatpush2.msra.mxu0 0.0
  %914 = vmatprep.subr.mxu0 0.0
  %915 = vmatpush2.msra.mxu0 0.0
  %916 = vmatprep.subr.mxu0 0.0
  %917 = vmatpush2.msra.mxu0 0.0
  %918 = vmatprep.subr.mxu0 0.0
  %919 = vmatpush2.msra.mxu0 0.0
  %920 = vmatprep.subr.mxu0 0.0
  %921 = vmatpush2.msra.mxu0 0.0
  %922 = vmatprep.mubr.f32.mxu0 0.0
  %923 = vmatmul.mubr.f32.gmra.mxu0 %v856
  %v924 = vpop.f32.mrf.mxu0
  %v925 = vadd.f32 %v853, %v924
  %v926 = vpop.f32.mrf.mxu0
  %v927 = vadd.f32 %v853, %v926
  %928 = vdwg.mxu0
  %929 = vmatprep.subr.mxu0 0.0
  %930 = vmatpush1.msra.mxu0 0.0
  %931 = vmatprep.subr.mxu0 0.0
  %932 = vmatpush1.msra.mxu0 0.0
  %933 = vmatprep.subr.mxu0 0.0
  %934 = vmatpush1.msra.mxu0 0.0
  %935 = vmatprep.subr.mxu0 0.0
  %936 = vmatpush1.msra.mxu0 0.0
  %937 = vmatprep.subr.mxu0 0.0
  %938 = vmatpush1.msra.mxu0 0.0
  %939 = vmatprep.subr.mxu0 0.0
  %940 = vmatpush1.msra.mxu0 0.0
  %941 = vmatprep.subr.mxu0 0.0
  %942 = vmatpush1.msra.mxu0 0.0
  %943 = vmatprep.subr.mxu0 0.0
  %944 = vmatpush1.msra.mxu0 0.0
  %945 = vmatprep.subr.mxu0 0.0
  %946 = vmatpush1.msra.mxu0 0.0
  %947 = vmatprep.subr.mxu0 0.0
  %948 = vmatpush1.msra.mxu0 0.0
  %949 = vmatprep.subr.mxu0 0.0
  %950 = vmatpush1.msra.mxu0 0.0
  %951 = vmatprep.subr.mxu0 0.0
  %952 = vmatpush1.msra.mxu0 0.0
  %953 = vmatprep.subr.mxu0 %v847
  %954 = vmatpush1.msra.mxu0 %v846
  %955 = vmatprep.subr.mxu0 %v843
  %956 = vmatpush1.msra.mxu0 %v842
  %957 = vmatprep.subr.mxu0 %v839
  %958 = vmatpush1.msra.mxu0 %v838
  %959 = vmatprep.subr.mxu0 %v835
  %960 = vmatpush1.msra.mxu0 %v834
  %961 = vmatprep.subr.mxu0 0.0
  %962 = vmatpush2.msra.mxu0 0.0
  %963 = vmatprep.subr.mxu0 0.0
  %964 = vmatpush2.msra.mxu0 0.0
  %965 = vmatprep.subr.mxu0 0.0
  %966 = vmatpush2.msra.mxu0 0.0
  %967 = vmatprep.subr.mxu0 0.0
  %968 = vmatpush2.msra.mxu0 0.0
  %969 = vmatprep.subr.mxu0 0.0
  %970 = vmatpush2.msra.mxu0 0.0
  %971 = vmatprep.subr.mxu0 0.0
  %972 = vmatpush2.msra.mxu0 0.0
  %973 = vmatprep.subr.mxu0 0.0
  %974 = vmatpush2.msra.mxu0 0.0
  %975 = vmatprep.subr.mxu0 0.0
  %976 = vmatpush2.msra.mxu0 0.0
  %977 = vmatprep.subr.mxu0 0.0
  %978 = vmatpush2.msra.mxu0 0.0
  %979 = vmatprep.subr.mxu0 0.0
  %980 = vmatpush2.msra.mxu0 0.0
  %981 = vmatprep.subr.mxu0 0.0
  %982 = vmatpush2.msra.mxu0 0.0
  %983 = vmatprep.subr.mxu0 0.0
  %984 = vmatpush2.msra.mxu0 0.0
  %985 = vmatprep.subr.mxu0 0.0
  %986 = vmatpush2.msra.mxu0 0.0
  %987 = vmatprep.subr.mxu0 0.0
  %988 = vmatpush2.msra.mxu0 0.0
  %989 = vmatprep.subr.mxu0 0.0
  %990 = vmatpush2.msra.mxu0 0.0
  %991 = vmatprep.subr.mxu0 0.0
  %992 = vmatpush2.msra.mxu0 0.0
  %993 = vmatprep.mubr.f32.mxu0 0.0
  %994 = vmatmul.mubr.f32.gmra.mxu0 %v856
  %v995 = vpop.f32.mrf.mxu0
  %v996 = vadd.f32 %v853, %v995
  %v997 = vpop.f32.mrf.mxu0
  %v998 = vadd.f32 %v853, %v997
  %999 = vdwg.mxu0
  %vm1000 = vcmp.gt.f32.partialorder %v925, 20.0
  %vm1001 = vcmp.gt.f32.partialorder %v927, 20.0
  %vm1002 = vcmp.gt.f32.partialorder %v996, 20.0
  %vm1003 = vcmp.gt.f32.partialorder %v998, 20.0
  %v1004 = vmin.f32 %v925, 20.0
  %v1005 = vmin.f32 %v927, 20.0
  %v1006 = vmin.f32 %v996, 20.0
  %v1007 = vmin.f32 %v998, 20.0
  %v1008 = vmul.f32 %v1004, 1.442695
  %v1009 = vpow.pop %v1008
  %v1010 = vmul.f32 %v1005, 1.442695
  %v1011 = vpow.pop %v1010
  %v1012 = vmul.f32 %v1006, 1.442695
  %v1013 = vpow.pop %v1012
  %v1014 = vmul.f32 %v1007, 1.442695
  %v1015 = vpow.pop %v1014
  %v1016 = vadd.f32 %v1009, 1.0
  %v1017 = vadd.f32 %v1011, 1.0
  %v1018 = vadd.f32 %v1013, 1.0
  %v1019 = vadd.f32 %v1015, 1.0
  %v1020 = vlog2.pop %v1016
  %v1021 = vmul.f32 %v1020, 0.6931472
  %v1022 = vlog2.pop %v1017
  %v1023 = vmul.f32 %v1022, 0.6931472
  %v1024 = vlog2.pop %v1018
  %v1025 = vmul.f32 %v1024, 0.6931472
  %v1026 = vlog2.pop %v1019
  %v1027 = vmul.f32 %v1026, 0.6931472
  %v1028 = vsel %vm1000, %v925, %v1021
  %v1029 = vsel %vm1001, %v927, %v1023
  %v1030 = vsel %vm1002, %v996, %v1025
  %v1031 = vsel %vm1003, %v998, %v1027
  %v1036 = vcombine.low %v925, %v927
  %v1037 = vcombine.low %v996, %v998
  %v1039 = vunpack.c.l.s4 1966171168
  %v1040 = vunpack.c.0.s8 %v1039
  %v1041 = vlaneseq
  %v1042 = vshrl.u32 %v1041, 7
  %v1043 = vsub.s32 %v1040, %v1042
  %v1044 = vrot.slane %v1036, %v1043
  %v1046 = vunpack.c.l.s4 1966171168
  %v1047 = vunpack.c.0.s8 %v1046
  %v1048 = vlaneseq
  %v1049 = vshrl.u32 %v1048, 7
  %v1050 = vsub.s32 %v1047, %v1049
  %v1051 = vrot.slane %v1037, %v1050
  %v1052 = vcombine.low %v1044, %v1051
  %v1054 = vunpack.c.l.s4 1966171168
  %v1055 = vunpack.c.0.s8 %v1054
  %v1056 = vlaneseq
  %v1057 = vshrl.u32 %v1056, 7
  %v1058 = vsub.s32 %v1055, %v1057
  %v1059 = vrot.slane %v1052, %v1058
  %v1061 = vlaneseq
  %vm1062 = vcmp.ge.s32.totalorder %v1061, 0
  %vm1063 = vcmp.lt.s32.totalorder %v1061, 512
  %vm1064 = vmand %vm1062, %vm1063
  %1065 = vst.msk [vmem:[%s12] sm:$0xf] %vm1064, %v1059
  %v1066 = vmul.f32 %v1028, 0.9
  %v1067 = vmul.f32 %v1029, 0.9
  %v1068 = vmul.f32 %v1030, 0.9
  %v1069 = vmul.f32 %v1031, 0.9
  %v1070 = vadd.f32 %v1066, 0.1
  %v1071 = vadd.f32 %v1067, 0.1
  %v1072 = vadd.f32 %v1068, 0.1
  %v1073 = vadd.f32 %v1069, 0.1
  %v1078 = vcombine.low %v1070, %v1071
  %v1079 = vcombine.low %v1072, %v1073
  %v1081 = vunpack.c.l.s4 1966171168
  %v1082 = vunpack.c.0.s8 %v1081
  %v1083 = vlaneseq
  %v1084 = vshrl.u32 %v1083, 7
  %v1085 = vsub.s32 %v1082, %v1084
  %v1086 = vrot.slane %v1078, %v1085
  %v1088 = vunpack.c.l.s4 1966171168
  %v1089 = vunpack.c.0.s8 %v1088
  %v1090 = vlaneseq
  %v1091 = vshrl.u32 %v1090, 7
  %v1092 = vsub.s32 %v1089, %v1091
  %v1093 = vrot.slane %v1079, %v1092
  %v1094 = vcombine.high %v1086, %v1093
  %v1096 = vunpack.c.l.s4 1966171168
  %v1097 = vunpack.c.0.s8 %v1096
  %v1098 = vlaneseq
  %v1099 = vshrl.u32 %v1098, 7
  %v1100 = vsub.s32 %v1097, %v1099
  %v1101 = vrot.slane %v1094, %v1100
  %1103 = vst.msk [vmem:[%s13] sm:$0xf] %vm1064, %v1101
  // Predicated region
  $region50: #{img_neural_process_forward.3} parent=0 // pred_check
    _
  $region51: #{img_neural_process_forward.3} parent=0 // pred_check_branch
    %1105 = sbr.rel (0) target = $region53
  $region52: #{img_neural_process_forward.3} parent=0 // pred_region
    _
  $region53: #{img_neural_process_forward.3} parent=0 // pred_fallthru
    _
  // Predicated region
  $region54: #{img_neural_process_forward.3} parent=0 // pred_check
    _
  $region55: #{img_neural_process_forward.3} parent=0 // pred_check_branch
    %1107 = sbr.rel (0) target = $region57
  $region56: #{img_neural_process_forward.3} parent=0 // pred_region
    _
  $region57: #{img_neural_process_forward.3} parent=0 // pred_fallthru
    _
  // Predicated region
  $region58: #{img_neural_process_forward.3} parent=0 // pred_check
    _
  $region59: #{img_neural_process_forward.3} parent=0 // pred_check_branch
    %1109 = sbr.rel (0) target = $region61
  $region60: #{img_neural_process_forward.3} parent=0 // pred_region
    _
  $region61: #{img_neural_process_forward.3} parent=0 // pred_fallthru
    _
  // Predicated region
  $region62: #{img_neural_process_forward.3} parent=0 // pred_check
    _
  $region63: #{img_neural_process_forward.3} parent=0 // pred_check_branch
    %1111 = sbr.rel (0) target = $region65
  $region64: #{img_neural_process_forward.3} parent=0 // pred_region
    _
  $region65: #{img_neural_process_forward.3} parent=0 // pred_fallthru
    _

// kernel: img_neural_process_forward.2
$region0: #{img_neural_process_forward.2}
  #allocation0 [shape = 'u32[]', space=smem, size = 0x4, offset = 0x4, fixed_abs, tag = 'smem constant byte address 0x4 - core index']
  #allocation1 [shape = 'u32[144,128]{1,0:T(1,128)}', space=vmem, size = 0x12000, scoped, tag = 'internal scratch']
  %s0 = inlined_call_operand.vmem [shape: f32[8,768], index: 0, kind: input, shape index: {}]
  %s1 = inlined_call_operand.hbm [shape: f32[768,4], index: 1, kind: input, shape index: {}]
  %s2 = inlined_call_operand.hbm [shape: f32[32,8], index: 2, kind: input, shape index: {}]
  %s3 = inlined_call_operand.hbm [shape: f32[32,1], index: 3, kind: input, shape index: {}]
  %s4 = inlined_call_operand.hbm [shape: f32[32,32], index: 4, kind: input, shape index: {}]
  %s5 = inlined_call_operand.hbm [shape: f32[32,1], index: 5, kind: input, shape index: {}]
  %s6 = inlined_call_operand.hbm [shape: f32[32,32], index: 6, kind: input, shape index: {}]
  %s7 = inlined_call_operand.hbm [shape: f32[32,1], index: 7, kind: input, shape index: {}]
  %s8 = inlined_call_operand.hbm [shape: f32[32,32], index: 8, kind: input, shape index: {}]
  %s9 = inlined_call_operand.vmem [shape: f32[32,1], index: 9, kind: input, shape index: {}]
  %s10 = inlined_call_operand.vmem [shape: f32[32,32], index: 10, kind: input, shape index: {}]
  %s11 = inlined_call_operand.vmem [shape: f32[32,1], index: 11, kind: input, shape index: {}]
  %s12 = inlined_call_operand.vmem [shape: f32[32,32], index: 12, kind: input, shape index: {}]
  %s13 = inlined_call_operand.vmem [shape: f32[32,1], index: 13, kind: input, shape index: {}]
  %s14 = inlined_call_operand.vmem [shape: f32[32,4], index: 14, kind: output, shape index: {0}]
  %s15 = inlined_call_operand.vmem [shape: f32[32,4], index: 15, kind: output, shape index: {1}]
  %16 = xla_tuple %s14, %s15
  %s17 = sld [smem:[#allocation0]]
  $region106: #{img_neural_process_forward.2} parent=0
    _
  %s19 = ssub.s32 1, %s17
  %s20 = scalar_select 0, %s19, %s17
  $region1: #{img_neural_process_forward.2} parent=0
    #allocation2 [shape = 'u8[393216]{0}', space=vmem, size = 0x60000, scoped, tag = 'input window, operand 1, single buffered']
    #allocation3 [shape = 's32[1]{0}', space=sflag, size = 0x4, scoped, tag = 'scoped memory for img_neural_process_forward.2']
    #allocation4 [shape = 'u8[16384]{0}', space=vmem, size = 0x4000, scoped, tag = 'input window, operand 2, single buffered']
    #allocation5 [shape = 's32[1]{0}', space=sflag, size = 0x4, scoped, tag = 'scoped memory for img_neural_process_forward.2']
    #allocation6 [shape = 'u8[16384]{0}', space=vmem, size = 0x4000, scoped, tag = 'input window, operand 3, single buffered']
    #allocation7 [shape = 'u8[16384]{0}', space=vmem, size = 0x4000, scoped, tag = 'input window, operand 4, single buffered']
    #allocation8 [shape = 's32[1]{0}', space=sflag, size = 0x4, scoped, tag = 'scoped memory for img_neural_process_forward.2']
    #allocation9 [shape = 'u8[16384]{0}', space=vmem, size = 0x4000, scoped, tag = 'input window, operand 5, single buffered']
    #allocation10 [shape = 'u8[16384]{0}', space=vmem, size = 0x4000, scoped, tag = 'input window, operand 6, single buffered']
    #allocation11 [shape = 's32[1]{0}', space=sflag, size = 0x4, scoped, tag = 'scoped memory for img_neural_process_forward.2']
    #allocation12 [shape = 'u8[16384]{0}', space=vmem, size = 0x4000, scoped, tag = 'input window, operand 7, single buffered']
    #allocation13 [shape = 'u8[16384]{0}', space=vmem, size = 0x4000, scoped, tag = 'input window, operand 8, single buffered']
    #allocation14 [shape = 's32[1]{0}', space=sflag, size = 0x4, scoped, tag = 'scoped memory for img_neural_process_forward.2']
    %21 = vsyncpa [#allocation3], 0
    %22 = vsyncpa [#allocation5], 0
    %23 = vsyncpa [#allocation8], 0
    %24 = vsyncpa [#allocation11], 0
    %25 = vsyncpa [#allocation14], 0
    // Predicated region
    $region2: #{img_neural_process_forward.2} parent=1 // pred_check
      _
    $region3: #{img_neural_process_forward.2} parent=1 // pred_check_branch
      %27 = sbr.rel (0) target = $region5
    $region4: #{img_neural_process_forward.2} parent=1 // pred_region
      _
    $region5: #{img_neural_process_forward.2} parent=1 // pred_fallthru
      _
    // Predicated region
    $region6: #{img_neural_process_forward.2} parent=1 // pred_check
      _
    $region7: #{img_neural_process_forward.2} parent=1 // pred_check_branch
      %29 = sbr.rel (0) target = $region9
    $region8: #{img_neural_process_forward.2} parent=1 // pred_region
      %s31 = ssub.s32 12288, 12288
      %32 = vsyncadd [#allocation3], %s31
      %s33 = sshll.u32 [#allocation2], 4
      %s34 = int_to_ptr.vmem [resolvable:$true] %s33
      %39 = dma.hbm_to_vmem [thread:$0]  %s1, 12288, %s34, [#allocation3], 128, 128, 8
    $region9: #{img_neural_process_forward.2} parent=1 // pred_fallthru
      _
    // Predicated region
    $region10: #{img_neural_process_forward.2} parent=1 // pred_check
      _
    $region11: #{img_neural_process_forward.2} parent=1 // pred_check_branch
      %41 = sbr.rel (0) target = $region13
    $region12: #{img_neural_process_forward.2} parent=1 // pred_region
      %s43 = ssub.s32 512, 512
      %44 = vsyncadd [#allocation5], %s43
      %s45 = sshll.u32 [#allocation4], 4
      %s46 = int_to_ptr.vmem [resolvable:$true] %s45
      %51 = dma.hbm_to_vmem [thread:$0]  %s2, 512, %s46, [#allocation5], 128, 128, 8
    $region13: #{img_neural_process_forward.2} parent=1 // pred_fallthru
      _
    // Predicated region
    $region14: #{img_neural_process_forward.2} parent=1 // pred_check
      _
    $region15: #{img_neural_process_forward.2} parent=1 // pred_check_branch
      %53 = sbr.rel (0) target = $region17
    $region16: #{img_neural_process_forward.2} parent=1 // pred_region
      %s55 = ssub.s32 512, 512
      %56 = vsyncadd [#allocation5], %s55
      %s57 = sshll.u32 [#allocation6], 4
      %s58 = int_to_ptr.vmem [resolvable:$true] %s57
      %63 = dma.hbm_to_vmem [thread:$0]  %s3, 512, %s58, [#allocation5], 128, 128, 8
    $region17: #{img_neural_process_forward.2} parent=1 // pred_fallthru
      _
    // Predicated region
    $region18: #{img_neural_process_forward.2} parent=1 // pred_check
      _
    $region19: #{img_neural_process_forward.2} parent=1 // pred_check_branch
      %65 = sbr.rel (0) target = $region21
    $region20: #{img_neural_process_forward.2} parent=1 // pred_region
      %s67 = ssub.s32 512, 512
      %68 = vsyncadd [#allocation8], %s67
      %s69 = sshll.u32 [#allocation7], 4
      %s70 = int_to_ptr.vmem [resolvable:$true] %s69
      %75 = dma.hbm_to_vmem [thread:$0]  %s4, 512, %s70, [#allocation8], 128, 128, 8
    $region21: #{img_neural_process_forward.2} parent=1 // pred_fallthru
      _
    // Predicated region
    $region22: #{img_neural_process_forward.2} parent=1 // pred_check
      _
    $region23: #{img_neural_process_forward.2} parent=1 // pred_check_branch
      %77 = sbr.rel (0) target = $region25
    $region24: #{img_neural_process_forward.2} parent=1 // pred_region
      %s79 = ssub.s32 512, 512
      %80 = vsyncadd [#allocation8], %s79
      %s81 = sshll.u32 [#allocation9], 4
      %s82 = int_to_ptr.vmem [resolvable:$true] %s81
      %87 = dma.hbm_to_vmem [thread:$0]  %s5, 512, %s82, [#allocation8], 128, 128, 8
    $region25: #{img_neural_process_forward.2} parent=1 // pred_fallthru
      _
    // Predicated region
    $region26: #{img_neural_process_forward.2} parent=1 // pred_check
      _
    $region27: #{img_neural_process_forward.2} parent=1 // pred_check_branch
      %89 = sbr.rel (0) target = $region29
    $region28: #{img_neural_process_forward.2} parent=1 // pred_region
      %s91 = ssub.s32 512, 512
      %92 = vsyncadd [#allocation11], %s91
      %s93 = sshll.u32 [#allocation10], 4
      %s94 = int_to_ptr.vmem [resolvable:$true] %s93
      %99 = dma.hbm_to_vmem [thread:$0]  %s6, 512, %s94, [#allocation11], 128, 128, 8
    $region29: #{img_neural_process_forward.2} parent=1 // pred_fallthru
      _
    // Predicated region
    $region30: #{img_neural_process_forward.2} parent=1 // pred_check
      _
    $region31: #{img_neural_process_forward.2} parent=1 // pred_check_branch
      %101 = sbr.rel (0) target = $region33
    $region32: #{img_neural_process_forward.2} parent=1 // pred_region
      %s103 = ssub.s32 512, 512
      %104 = vsyncadd [#allocation11], %s103
      %s105 = sshll.u32 [#allocation12], 4
      %s106 = int_to_ptr.vmem [resolvable:$true] %s105
      %111 = dma.hbm_to_vmem [thread:$0]  %s7, 512, %s106, [#allocation11], 128, 128, 8
    $region33: #{img_neural_process_forward.2} parent=1 // pred_fallthru
      _
    // Predicated region
    $region34: #{img_neural_process_forward.2} parent=1 // pred_check
      _
    $region35: #{img_neural_process_forward.2} parent=1 // pred_check_branch
      %113 = sbr.rel (0) target = $region37
    $region36: #{img_neural_process_forward.2} parent=1 // pred_region
      %s115 = ssub.s32 512, 512
      %116 = vsyncadd [#allocation14], %s115
      %s117 = sshll.u32 [#allocation13], 4
      %s118 = int_to_ptr.vmem [resolvable:$true] %s117
      %123 = dma.hbm_to_vmem [thread:$0]  %s8, 512, %s118, [#allocation14], 128, 128, 8
    $region37: #{img_neural_process_forward.2} parent=1 // pred_fallthru
      _
    // Predicated region
    $region38: #{img_neural_process_forward.2} parent=1 // pred_check
      _
    $region39: #{img_neural_process_forward.2} parent=1 // pred_check_branch
      %125 = sbr.rel (0) target = $region41
    $region40: #{img_neural_process_forward.2} parent=1 // pred_region
      _
    $region41: #{img_neural_process_forward.2} parent=1 // pred_fallthru
      _
    // Predicated region
    $region42: #{img_neural_process_forward.2} parent=1 // pred_check
      _
    $region43: #{img_neural_process_forward.2} parent=1 // pred_check_branch
      %127 = sbr.rel (0) target = $region45
    $region44: #{img_neural_process_forward.2} parent=1 // pred_region
      _
    $region45: #{img_neural_process_forward.2} parent=1 // pred_fallthru
      _
    // Predicated region
    $region46: #{img_neural_process_forward.2} parent=1 // pred_check
      _
    $region47: #{img_neural_process_forward.2} parent=1 // pred_check_branch
      %129 = sbr.rel (0) target = $region49
    $region48: #{img_neural_process_forward.2} parent=1 // pred_region
      _
    $region49: #{img_neural_process_forward.2} parent=1 // pred_fallthru
      _
    // Predicated region
    $region50: #{img_neural_process_forward.2} parent=1 // pred_check
      _
    $region51: #{img_neural_process_forward.2} parent=1 // pred_check_branch
      %131 = sbr.rel (0) target = $region53
    $region52: #{img_neural_process_forward.2} parent=1 // pred_region
      _
    $region53: #{img_neural_process_forward.2} parent=1 // pred_fallthru
      _
    // Predicated region
    $region54: #{img_neural_process_forward.2} parent=1 // pred_check
      _
    $region55: #{img_neural_process_forward.2} parent=1 // pred_check_branch
      %133 = sbr.rel (0) target = $region57
    $region56: #{img_neural_process_forward.2} parent=1 // pred_region
      _
    $region57: #{img_neural_process_forward.2} parent=1 // pred_fallthru
      _
    // Predicated region
    $region58: #{img_neural_process_forward.2} parent=1 // pred_check
      _
    $region59: #{img_neural_process_forward.2} parent=1 // pred_check_branch
      %135 = sbr.rel (0) target = $region61
    $region60: #{img_neural_process_forward.2} parent=1 // pred_region
      %136 = dma.done [#allocation3], 12288
    $region61: #{img_neural_process_forward.2} parent=1 // pred_fallthru
      _
    // Predicated region
    $region62: #{img_neural_process_forward.2} parent=1 // pred_check
      _
    $region63: #{img_neural_process_forward.2} parent=1 // pred_check_branch
      %138 = sbr.rel (0) target = $region65
    $region64: #{img_neural_process_forward.2} parent=1 // pred_region
      %139 = dma.done [#allocation5], 512
    $region65: #{img_neural_process_forward.2} parent=1 // pred_fallthru
      _
    // Predicated region
    $region66: #{img_neural_process_forward.2} parent=1 // pred_check
      _
    $region67: #{img_neural_process_forward.2} parent=1 // pred_check_branch
      %141 = sbr.rel (0) target = $region69
    $region68: #{img_neural_process_forward.2} parent=1 // pred_region
      %142 = dma.done [#allocation5], 512
    $region69: #{img_neural_process_forward.2} parent=1 // pred_fallthru
      _
    // Predicated region
    $region70: #{img_neural_process_forward.2} parent=1 // pred_check
      _
    $region71: #{img_neural_process_forward.2} parent=1 // pred_check_branch
      %144 = sbr.rel (0) target = $region73
    $region72: #{img_neural_process_forward.2} parent=1 // pred_region
      %145 = dma.done [#allocation8], 512
    $region73: #{img_neural_process_forward.2} parent=1 // pred_fallthru
      _
    // Predicated region
    $region74: #{img_neural_process_forward.2} parent=1 // pred_check
      _
    $region75: #{img_neural_process_forward.2} parent=1 // pred_check_branch
      %147 = sbr.rel (0) target = $region77
    $region76: #{img_neural_process_forward.2} parent=1 // pred_region
      %148 = dma.done [#allocation8], 512
    $region77: #{img_neural_process_forward.2} parent=1 // pred_fallthru
      _
    // Predicated region
    $region78: #{img_neural_process_forward.2} parent=1 // pred_check
      _
    $region79: #{img_neural_process_forward.2} parent=1 // pred_check_branch
      %150 = sbr.rel (0) target = $region81
    $region80: #{img_neural_process_forward.2} parent=1 // pred_region
      %151 = dma.done [#allocation11], 512
    $region81: #{img_neural_process_forward.2} parent=1 // pred_fallthru
      _
    // Predicated region
    $region82: #{img_neural_process_forward.2} parent=1 // pred_check
      _
    $region83: #{img_neural_process_forward.2} parent=1 // pred_check_branch
      %153 = sbr.rel (0) target = $region85
    $region84: #{img_neural_process_forward.2} parent=1 // pred_region
      %154 = dma.done [#allocation11], 512
    $region85: #{img_neural_process_forward.2} parent=1 // pred_fallthru
      _
    // Predicated region
    $region86: #{img_neural_process_forward.2} parent=1 // pred_check
      _
    $region87: #{img_neural_process_forward.2} parent=1 // pred_check_branch
      %156 = sbr.rel (0) target = $region89
    $region88: #{img_neural_process_forward.2} parent=1 // pred_region
      %157 = dma.done [#allocation14], 512
    $region89: #{img_neural_process_forward.2} parent=1 // pred_fallthru
      _
    %v158 = vld [vmem:[%s0] sm:$0xff]
    %v159 = vld [vmem:[%s0 + $0x8] sm:$0xff]
    %v160 = vld [vmem:[%s0 + $0x10] sm:$0xff]
    %v161 = vld [vmem:[%s0 + $0x18] sm:$0xff]
    %v162 = vld [vmem:[%s0 + $0x20] sm:$0xff]
    %v163 = vld [vmem:[%s0 + $0x28] sm:$0xff]
    %v164 = vld [vmem:[#allocation4] sm:$0xff]
    %v165 = vld [vmem:[#allocation4 + $0x8] sm:$0xff]
    %v166 = vld [vmem:[#allocation4 + $0x10] sm:$0xff]
    %v167 = vld [vmem:[#allocation4 + $0x18] sm:$0xff]
    %v168 = vld [vmem:[#allocation6] sm:$0xff]
    %v169 = vld [vmem:[#allocation6 + $0x8] sm:$0xff]
    %v170 = vld [vmem:[#allocation6 + $0x10] sm:$0xff]
    %v171 = vld [vmem:[#allocation6 + $0x18] sm:$0xff]
    %173 = vset.pattern.permute.xlu0 0
    %174 = vperm.xlu0 %173, %v168
    %v175 = vpop.permute.xlu0 %174
    %178 = vset.pattern.permute.xlu0 0
    %179 = vperm.xlu0 %178, %v169
    %v180 = vpop.permute.xlu0 %179
    %183 = vset.pattern.permute.xlu0 0
    %184 = vperm.xlu0 %183, %v170
    %v185 = vpop.permute.xlu0 %184
    %188 = vset.pattern.permute.xlu0 0
    %189 = vperm.xlu0 %188, %v171
    %v190 = vpop.permute.xlu0 %189
    %vm192 = vcmask 64512
    %v194 = vsel %vm192, %v164, 0
    %v197 = vsel %vm192, %v165, 0
    %v200 = vsel %vm192, %v166, 0
    %v203 = vsel %vm192, %v167, 0
    %205 = vmatprep.subr.mxu0 0.0
    %206 = vmatpush1.msra.mxu0 0.0
    %207 = vmatprep.subr.mxu0 0.0
    %208 = vmatpush1.msra.mxu0 0.0
    %209 = vmatprep.subr.mxu0 0.0
    %210 = vmatpush1.msra.mxu0 0.0
    %211 = vmatprep.subr.mxu0 0.0
    %212 = vmatpush1.msra.mxu0 0.0
    %213 = vmatprep.subr.mxu0 0.0
    %214 = vmatpush1.msra.mxu0 0.0
    %215 = vmatprep.subr.mxu0 0.0
    %216 = vmatpush1.msra.mxu0 0.0
    %217 = vmatprep.subr.mxu0 0.0
    %218 = vmatpush1.msra.mxu0 0.0
    %219 = vmatprep.subr.mxu0 0.0
    %220 = vmatpush1.msra.mxu0 0.0
    %221 = vmatprep.subr.mxu0 0.0
    %222 = vmatpush1.msra.mxu0 0.0
    %223 = vmatprep.subr.mxu0 0.0
    %224 = vmatpush1.msra.mxu0 0.0
    %225 = vmatprep.subr.mxu0 0.0
    %226 = vmatpush1.msra.mxu0 0.0
    %227 = vmatprep.subr.mxu0 0.0
    %228 = vmatpush1.msra.mxu0 0.0
    %229 = vmatprep.subr.mxu0 0.0
    %230 = vmatpush1.msra.mxu0 0.0
    %231 = vmatprep.subr.mxu0 0.0
    %232 = vmatpush1.msra.mxu0 0.0
    %233 = vmatprep.subr.mxu0 0.0
    %234 = vmatpush1.msra.mxu0 0.0
    %235 = vmatprep.subr.mxu0 %v159
    %236 = vmatpush1.msra.mxu0 %v158
    %237 = vmatprep.subr.mxu0 0.0
    %238 = vmatpush2.msra.mxu0 0.0
    %239 = vmatprep.subr.mxu0 0.0
    %240 = vmatpush2.msra.mxu0 0.0
    %241 = vmatprep.subr.mxu0 0.0
    %242 = vmatpush2.msra.mxu0 0.0
    %243 = vmatprep.subr.mxu0 0.0
    %244 = vmatpush2.msra.mxu0 0.0
    %245 = vmatprep.subr.mxu0 0.0
    %246 = vmatpush2.msra.mxu0 0.0
    %247 = vmatprep.subr.mxu0 0.0
    %248 = vmatpush2.msra.mxu0 0.0
    %249 = vmatprep.subr.mxu0 0.0
    %250 = vmatpush2.msra.mxu0 0.0
    %251 = vmatprep.subr.mxu0 0.0
    %252 = vmatpush2.msra.mxu0 0.0
    %253 = vmatprep.subr.mxu0 0.0
    %254 = vmatpush2.msra.mxu0 0.0
    %255 = vmatprep.subr.mxu0 0.0
    %256 = vmatpush2.msra.mxu0 0.0
    %257 = vmatprep.subr.mxu0 0.0
    %258 = vmatpush2.msra.mxu0 0.0
    %259 = vmatprep.subr.mxu0 0.0
    %260 = vmatpush2.msra.mxu0 0.0
    %261 = vmatprep.subr.mxu0 0.0
    %262 = vmatpush2.msra.mxu0 0.0
    %263 = vmatprep.subr.mxu0 0.0
    %264 = vmatpush2.msra.mxu0 0.0
    %265 = vmatprep.subr.mxu0 0.0
    %266 = vmatpush2.msra.mxu0 0.0
    %267 = vmatprep.subr.mxu0 0.0
    %268 = vmatpush2.msra.mxu0 0.0
    %269 = vmatprep.mubr.f32.mxu0 0.0
    %270 = vmatmul.mubr.f32.gmra.mxu0 %v194
    %v271 = vpop.f32.mrf.mxu0
    %v272 = vadd.f32 %v175, %v271
    %v273 = vpop.f32.mrf.mxu0
    %v274 = vadd.f32 %v175, %v273
    %275 = vmatprep.mubr.f32.mxu0 0.0
    %276 = vmatmul.mubr.f32.gmra.mxu0 %v197
    %v277 = vpop.f32.mrf.mxu0
    %v278 = vadd.f32 %v180, %v277
    %v279 = vpop.f32.mrf.mxu0
    %v280 = vadd.f32 %v180, %v279
    %281 = vmatprep.mubr.f32.mxu0 0.0
    %282 = vmatmul.mubr.f32.gmra.mxu0 %v200
    %v283 = vpop.f32.mrf.mxu0
    %v284 = vadd.f32 %v185, %v283
    %v285 = vpop.f32.mrf.mxu0
    %v286 = vadd.f32 %v185, %v285
    %287 = vmatprep.mubr.f32.mxu0 0.0
    %288 = vmatmul.mubr.f32.gmra.mxu0 %v203
    %v289 = vpop.f32.mrf.mxu0
    %v290 = vadd.f32 %v190, %v289
    %v291 = vpop.f32.mrf.mxu0
    %v292 = vadd.f32 %v190, %v291
    %293 = vdwg.mxu0
    %294 = vmatprep.subr.mxu0 0.0
    %295 = vmatpush1.msra.mxu0 0.0
    %296 = vmatprep.subr.mxu0 0.0
    %297 = vmatpush1.msra.mxu0 0.0
    %298 = vmatprep.subr.mxu0 0.0
    %299 = vmatpush1.msra.mxu0 0.0
    %300 = vmatprep.subr.mxu0 0.0
    %301 = vmatpush1.msra.mxu0 0.0
    %302 = vmatprep.subr.mxu0 0.0
    %303 = vmatpush1.msra.mxu0 0.0
    %304 = vmatprep.subr.mxu0 0.0
    %305 = vmatpush1.msra.mxu0 0.0
    %306 = vmatprep.subr.mxu0 0.0
    %307 = vmatpush1.msra.mxu0 0.0
    %308 = vmatprep.subr.mxu0 0.0
    %309 = vmatpush1.msra.mxu0 0.0
    %310 = vmatprep.subr.mxu0 0.0
    %311 = vmatpush1.msra.mxu0 0.0
    %312 = vmatprep.subr.mxu0 0.0
    %313 = vmatpush1.msra.mxu0 0.0
    %314 = vmatprep.subr.mxu0 0.0
    %315 = vmatpush1.msra.mxu0 0.0
    %316 = vmatprep.subr.mxu0 0.0
    %317 = vmatpush1.msra.mxu0 0.0
    %318 = vmatprep.subr.mxu0 0.0
    %319 = vmatpush1.msra.mxu0 0.0
    %320 = vmatprep.subr.mxu0 0.0
    %321 = vmatpush1.msra.mxu0 0.0
    %322 = vmatprep.subr.mxu0 0.0
    %323 = vmatpush1.msra.mxu0 0.0
    %324 = vmatprep.subr.mxu0 %v161
    %325 = vmatpush1.msra.mxu0 %v160
    %326 = vmatprep.subr.mxu0 0.0
    %327 = vmatpush2.msra.mxu0 0.0
    %328 = vmatprep.subr.mxu0 0.0
    %329 = vmatpush2.msra.mxu0 0.0
    %330 = vmatprep.subr.mxu0 0.0
    %331 = vmatpush2.msra.mxu0 0.0
    %332 = vmatprep.subr.mxu0 0.0
    %333 = vmatpush2.msra.mxu0 0.0
    %334 = vmatprep.subr.mxu0 0.0
    %335 = vmatpush2.msra.mxu0 0.0
    %336 = vmatprep.subr.mxu0 0.0
    %337 = vmatpush2.msra.mxu0 0.0
    %338 = vmatprep.subr.mxu0 0.0
    %339 = vmatpush2.msra.mxu0 0.0
    %340 = vmatprep.subr.mxu0 0.0
    %341 = vmatpush2.msra.mxu0 0.0
    %342 = vmatprep.subr.mxu0 0.0
    %343 = vmatpush2.msra.mxu0 0.0
    %344 = vmatprep.subr.mxu0 0.0
    %345 = vmatpush2.msra.mxu0 0.0
    %346 = vmatprep.subr.mxu0 0.0
    %347 = vmatpush2.msra.mxu0 0.0
    %348 = vmatprep.subr.mxu0 0.0
    %349 = vmatpush2.msra.mxu0 0.0
    %350 = vmatprep.subr.mxu0 0.0
    %351 = vmatpush2.msra.mxu0 0.0
    %352 = vmatprep.subr.mxu0 0.0
    %353 = vmatpush2.msra.mxu0 0.0
    %354 = vmatprep.subr.mxu0 0.0
    %355 = vmatpush2.msra.mxu0 0.0
    %356 = vmatprep.subr.mxu0 0.0
    %357 = vmatpush2.msra.mxu0 0.0
    %358 = vmatprep.mubr.f32.mxu0 0.0
    %359 = vmatmul.mubr.f32.gmra.mxu0 %v194
    %v360 = vpop.f32.mrf.mxu0
    %v361 = vadd.f32 %v175, %v360
    %v362 = vpop.f32.mrf.mxu0
    %v363 = vadd.f32 %v175, %v362
    %364 = vmatprep.mubr.f32.mxu0 0.0
    %365 = vmatmul.mubr.f32.gmra.mxu0 %v197
    %v366 = vpop.f32.mrf.mxu0
    %v367 = vadd.f32 %v180, %v366
    %v368 = vpop.f32.mrf.mxu0
    %v369 = vadd.f32 %v180, %v368
    %370 = vmatprep.mubr.f32.mxu0 0.0
    %371 = vmatmul.mubr.f32.gmra.mxu0 %v200
    %v372 = vpop.f32.mrf.mxu0
    %v373 = vadd.f32 %v185, %v372
    %v374 = vpop.f32.mrf.mxu0
    %v375 = vadd.f32 %v185, %v374
    %376 = vmatprep.mubr.f32.mxu0 0.0
    %377 = vmatmul.mubr.f32.gmra.mxu0 %v203
    %v378 = vpop.f32.mrf.mxu0
    %v379 = vadd.f32 %v190, %v378
    %v380 = vpop.f32.mrf.mxu0
    %v381 = vadd.f32 %v190, %v380
    %382 = vdwg.mxu0
    %383 = vmatprep.subr.mxu0 0.0
    %384 = vmatpush1.msra.mxu0 0.0
    %385 = vmatprep.subr.mxu0 0.0
    %386 = vmatpush1.msra.mxu0 0.0
    %387 = vmatprep.subr.mxu0 0.0
    %388 = vmatpush1.msra.mxu0 0.0
    %389 = vmatprep.subr.mxu0 0.0
    %390 = vmatpush1.msra.mxu0 0.0
    %391 = vmatprep.subr.mxu0 0.0
    %392 = vmatpush1.msra.mxu0 0.0
    %393 = vmatprep.subr.mxu0 0.0
    %394 = vmatpush1.msra.mxu0 0.0
    %395 = vmatprep.subr.mxu0 0.0
    %396 = vmatpush1.msra.mxu0 0.0
    %397 = vmatprep.subr.mxu0 0.0
    %398 = vmatpush1.msra.mxu0 0.0
    %399 = vmatprep.subr.mxu0 0.0
    %400 = vmatpush1.msra.mxu0 0.0
    %401 = vmatprep.subr.mxu0 0.0
    %402 = vmatpush1.msra.mxu0 0.0
    %403 = vmatprep.subr.mxu0 0.0
    %404 = vmatpush1.msra.mxu0 0.0
    %405 = vmatprep.subr.mxu0 0.0
    %406 = vmatpush1.msra.mxu0 0.0
    %407 = vmatprep.subr.mxu0 0.0
    %408 = vmatpush1.msra.mxu0 0.0
    %409 = vmatprep.subr.mxu0 0.0
    %410 = vmatpush1.msra.mxu0 0.0
    %411 = vmatprep.subr.mxu0 0.0
    %412 = vmatpush1.msra.mxu0 0.0
    %413 = vmatprep.subr.mxu0 %v163
    %414 = vmatpush1.msra.mxu0 %v162
    %415 = vmatprep.subr.mxu0 0.0
    %416 = vmatpush2.msra.mxu0 0.0
    %417 = vmatprep.subr.mxu0 0.0
    %418 = vmatpush2.msra.mxu0 0.0
    %419 = vmatprep.subr.mxu0 0.0
    %420 = vmatpush2.msra.mxu0 0.0
    %421 = vmatprep.subr.mxu0 0.0
    %422 = vmatpush2.msra.mxu0 0.0
    %423 = vmatprep.subr.mxu0 0.0
    %424 = vmatpush2.msra.mxu0 0.0
    %425 = vmatprep.subr.mxu0 0.0
    %426 = vmatpush2.msra.mxu0 0.0
    %427 = vmatprep.subr.mxu0 0.0
    %428 = vmatpush2.msra.mxu0 0.0
    %429 = vmatprep.subr.mxu0 0.0
    %430 = vmatpush2.msra.mxu0 0.0
    %431 = vmatprep.subr.mxu0 0.0
    %432 = vmatpush2.msra.mxu0 0.0
    %433 = vmatprep.subr.mxu0 0.0
    %434 = vmatpush2.msra.mxu0 0.0
    %435 = vmatprep.subr.mxu0 0.0
    %436 = vmatpush2.msra.mxu0 0.0
    %437 = vmatprep.subr.mxu0 0.0
    %438 = vmatpush2.msra.mxu0 0.0
    %439 = vmatprep.subr.mxu0 0.0
    %440 = vmatpush2.msra.mxu0 0.0
    %441 = vmatprep.subr.mxu0 0.0
    %442 = vmatpush2.msra.mxu0 0.0
    %443 = vmatprep.subr.mxu0 0.0
    %444 = vmatpush2.msra.mxu0 0.0
    %445 = vmatprep.subr.mxu0 0.0
    %446 = vmatpush2.msra.mxu0 0.0
    %447 = vmatprep.mubr.f32.mxu0 0.0
    %448 = vmatmul.mubr.f32.gmra.mxu0 %v194
    %v449 = vpop.f32.mrf.mxu0
    %v450 = vadd.f32 %v175, %v449
    %v451 = vpop.f32.mrf.mxu0
    %v452 = vadd.f32 %v175, %v451
    %453 = vmatprep.mubr.f32.mxu0 0.0
    %454 = vmatmul.mubr.f32.gmra.mxu0 %v197
    %v455 = vpop.f32.mrf.mxu0
    %v456 = vadd.f32 %v180, %v455
    %v457 = vpop.f32.mrf.mxu0
    %v458 = vadd.f32 %v180, %v457
    %459 = vmatprep.mubr.f32.mxu0 0.0
    %460 = vmatmul.mubr.f32.gmra.mxu0 %v200
    %v461 = vpop.f32.mrf.mxu0
    %v462 = vadd.f32 %v185, %v461
    %v463 = vpop.f32.mrf.mxu0
    %v464 = vadd.f32 %v185, %v463
    %465 = vmatprep.mubr.f32.mxu0 0.0
    %466 = vmatmul.mubr.f32.gmra.mxu0 %v203
    %v467 = vpop.f32.mrf.mxu0
    %v468 = vadd.f32 %v190, %v467
    %v469 = vpop.f32.mrf.mxu0
    %v470 = vadd.f32 %v190, %v469
    %471 = vdwg.mxu0
    %v472 = vmax.f32 %v272, 0.0
    %v473 = vmax.f32 %v274, 0.0
    %v474 = vmax.f32 %v361, 0.0
    %v475 = vmax.f32 %v363, 0.0
    %v476 = vmax.f32 %v450, 0.0
    %v477 = vmax.f32 %v452, 0.0
    %v478 = vmax.f32 %v278, 0.0
    %v479 = vmax.f32 %v280, 0.0
    %v480 = vmax.f32 %v367, 0.0
    %v481 = vmax.f32 %v369, 0.0
    %v482 = vmax.f32 %v456, 0.0
    %v483 = vmax.f32 %v458, 0.0
    %v484 = vmax.f32 %v284, 0.0
    %v485 = vmax.f32 %v286, 0.0
    %v486 = vmax.f32 %v373, 0.0
    %v487 = vmax.f32 %v375, 0.0
    %v488 = vmax.f32 %v462, 0.0
    %v489 = vmax.f32 %v464, 0.0
    %v490 = vmax.f32 %v290, 0.0
    %v491 = vmax.f32 %v292, 0.0
    %v492 = vmax.f32 %v379, 0.0
    %v493 = vmax.f32 %v381, 0.0
    %v494 = vmax.f32 %v468, 0.0
    %v495 = vmax.f32 %v470, 0.0
    %v496 = vld [vmem:[#allocation7] sm:$0xff]
    %v497 = vld [vmem:[#allocation7 + $0x8] sm:$0xff]
    %v498 = vld [vmem:[#allocation7 + $0x10] sm:$0xff]
    %v499 = vld [vmem:[#allocation7 + $0x18] sm:$0xff]
    %v500 = vld [vmem:[#allocation9] sm:$0xff]
    %v501 = vld [vmem:[#allocation9 + $0x8] sm:$0xff]
    %v502 = vld [vmem:[#allocation9 + $0x10] sm:$0xff]
    %v503 = vld [vmem:[#allocation9 + $0x18] sm:$0xff]
    %505 = vset.pattern.permute.xlu0 0
    %506 = vperm.xlu0 %505, %v500
    %v507 = vpop.permute.xlu0 %506
    %510 = vset.pattern.permute.xlu0 0
    %511 = vperm.xlu0 %510, %v501
    %v512 = vpop.permute.xlu0 %511
    %515 = vset.pattern.permute.xlu0 0
    %516 = vperm.xlu0 %515, %v502
    %v517 = vpop.permute.xlu0 %516
    %520 = vset.pattern.permute.xlu0 0
    %521 = vperm.xlu0 %520, %v503
    %v522 = vpop.permute.xlu0 %521
    %vm524 = vcmask 261120
    %v526 = vsel %vm524, %v496, 0
    %v529 = vsel %vm524, %v497, 0
    %v532 = vsel %vm524, %v498, 0
    %v535 = vsel %vm524, %v499, 0
    %537 = vmatprep.subr.mxu0 0.0
    %538 = vmatpush1.msra.mxu0 0.0
    %539 = vmatprep.subr.mxu0 0.0
    %540 = vmatpush1.msra.mxu0 0.0
    %541 = vmatprep.subr.mxu0 0.0
    %542 = vmatpush1.msra.mxu0 0.0
    %543 = vmatprep.subr.mxu0 0.0
    %544 = vmatpush1.msra.mxu0 0.0
    %545 = vmatprep.subr.mxu0 0.0
    %546 = vmatpush1.msra.mxu0 0.0
    %547 = vmatprep.subr.mxu0 0.0
    %548 = vmatpush1.msra.mxu0 0.0
    %549 = vmatprep.subr.mxu0 0.0
    %550 = vmatpush1.msra.mxu0 0.0
    %551 = vmatprep.subr.mxu0 0.0
    %552 = vmatpush1.msra.mxu0 0.0
    %553 = vmatprep.subr.mxu0 0.0
    %554 = vmatpush1.msra.mxu0 0.0
    %555 = vmatprep.subr.mxu0 0.0
    %556 = vmatpush1.msra.mxu0 0.0
    %557 = vmatprep.subr.mxu0 0.0
    %558 = vmatpush1.msra.mxu0 0.0
    %559 = vmatprep.subr.mxu0 0.0
    %560 = vmatpush1.msra.mxu0 0.0
    %561 = vmatprep.subr.mxu0 %v491
    %562 = vmatpush1.msra.mxu0 %v490
    %563 = vmatprep.subr.mxu0 %v485
    %564 = vmatpush1.msra.mxu0 %v484
    %565 = vmatprep.subr.mxu0 %v479
    %566 = vmatpush1.msra.mxu0 %v478
    %567 = vmatprep.subr.mxu0 %v473
    %568 = vmatpush1.msra.mxu0 %v472
    %569 = vmatprep.subr.mxu0 0.0
    %570 = vmatpush2.msra.mxu0 0.0
    %571 = vmatprep.subr.mxu0 0.0
    %572 = vmatpush2.msra.mxu0 0.0
    %573 = vmatprep.subr.mxu0 0.0
    %574 = vmatpush2.msra.mxu0 0.0
    %575 = vmatprep.subr.mxu0 0.0
    %576 = vmatpush2.msra.mxu0 0.0
    %577 = vmatprep.subr.mxu0 0.0
    %578 = vmatpush2.msra.mxu0 0.0
    %579 = vmatprep.subr.mxu0 0.0
    %580 = vmatpush2.msra.mxu0 0.0
    %581 = vmatprep.subr.mxu0 0.0
    %582 = vmatpush2.msra.mxu0 0.0
    %583 = vmatprep.subr.mxu0 0.0
    %584 = vmatpush2.msra.mxu0 0.0
    %585 = vmatprep.subr.mxu0 0.0
    %586 = vmatpush2.msra.mxu0 0.0
    %587 = vmatprep.subr.mxu0 0.0
    %588 = vmatpush2.msra.mxu0 0.0
    %589 = vmatprep.subr.mxu0 0.0
    %590 = vmatpush2.msra.mxu0 0.0
    %591 = vmatprep.subr.mxu0 0.0
    %592 = vmatpush2.msra.mxu0 0.0
    %593 = vmatprep.subr.mxu0 0.0
    %594 = vmatpush2.msra.mxu0 0.0
    %595 = vmatprep.subr.mxu0 0.0
    %596 = vmatpush2.msra.mxu0 0.0
    %597 = vmatprep.subr.mxu0 0.0
    %598 = vmatpush2.msra.mxu0 0.0
    %599 = vmatprep.subr.mxu0 0.0
    %600 = vmatpush2.msra.mxu0 0.0
    %601 = vmatprep.mubr.f32.mxu0 0.0
    %602 = vmatmul.mubr.f32.gmra.mxu0 %v526
    %v603 = vpop.f32.mrf.mxu0
    %v604 = vadd.f32 %v507, %v603
    %v605 = vpop.f32.mrf.mxu0
    %v606 = vadd.f32 %v507, %v605
    %607 = vmatprep.mubr.f32.mxu0 0.0
    %608 = vmatmul.mubr.f32.gmra.mxu0 %v529
    %v609 = vpop.f32.mrf.mxu0
    %v610 = vadd.f32 %v512, %v609
    %v611 = vpop.f32.mrf.mxu0
    %v612 = vadd.f32 %v512, %v611
    %613 = vmatprep.mubr.f32.mxu0 0.0
    %614 = vmatmul.mubr.f32.gmra.mxu0 %v532
    %v615 = vpop.f32.mrf.mxu0
    %v616 = vadd.f32 %v517, %v615
    %v617 = vpop.f32.mrf.mxu0
    %v618 = vadd.f32 %v517, %v617
    %619 = vmatprep.mubr.f32.mxu0 0.0
    %620 = vmatmul.mubr.f32.gmra.mxu0 %v535
    %v621 = vpop.f32.mrf.mxu0
    %v622 = vadd.f32 %v522, %v621
    %v623 = vpop.f32.mrf.mxu0
    %v624 = vadd.f32 %v522, %v623
    %625 = vdwg.mxu0
    %626 = vmatprep.subr.mxu0 0.0
    %627 = vmatpush1.msra.mxu0 0.0
    %628 = vmatprep.subr.mxu0 0.0
    %629 = vmatpush1.msra.mxu0 0.0
    %630 = vmatprep.subr.mxu0 0.0
    %631 = vmatpush1.msra.mxu0 0.0
    %632 = vmatprep.subr.mxu0 0.0
    %633 = vmatpush1.msra.mxu0 0.0
    %634 = vmatprep.subr.mxu0 0.0
    %635 = vmatpush1.msra.mxu0 0.0
    %636 = vmatprep.subr.mxu0 0.0
    %637 = vmatpush1.msra.mxu0 0.0
    %638 = vmatprep.subr.mxu0 0.0
    %639 = vmatpush1.msra.mxu0 0.0
    %640 = vmatprep.subr.mxu0 0.0
    %641 = vmatpush1.msra.mxu0 0.0
    %642 = vmatprep.subr.mxu0 0.0
    %643 = vmatpush1.msra.mxu0 0.0
    %644 = vmatprep.subr.mxu0 0.0
    %645 = vmatpush1.msra.mxu0 0.0
    %646 = vmatprep.subr.mxu0 0.0
    %647 = vmatpush1.msra.mxu0 0.0
    %648 = vmatprep.subr.mxu0 0.0
    %649 = vmatpush1.msra.mxu0 0.0
    %650 = vmatprep.subr.mxu0 %v493
    %651 = vmatpush1.msra.mxu0 %v492
    %652 = vmatprep.subr.mxu0 %v487
    %653 = vmatpush1.msra.mxu0 %v486
    %654 = vmatprep.subr.mxu0 %v481
    %655 = vmatpush1.msra.mxu0 %v480
    %656 = vmatprep.subr.mxu0 %v475
    %657 = vmatpush1.msra.mxu0 %v474
    %658 = vmatprep.subr.mxu0 0.0
    %659 = vmatpush2.msra.mxu0 0.0
    %660 = vmatprep.subr.mxu0 0.0
    %661 = vmatpush2.msra.mxu0 0.0
    %662 = vmatprep.subr.mxu0 0.0
    %663 = vmatpush2.msra.mxu0 0.0
    %664 = vmatprep.subr.mxu0 0.0
    %665 = vmatpush2.msra.mxu0 0.0
    %666 = vmatprep.subr.mxu0 0.0
    %667 = vmatpush2.msra.mxu0 0.0
    %668 = vmatprep.subr.mxu0 0.0
    %669 = vmatpush2.msra.mxu0 0.0
    %670 = vmatprep.subr.mxu0 0.0
    %671 = vmatpush2.msra.mxu0 0.0
    %672 = vmatprep.subr.mxu0 0.0
    %673 = vmatpush2.msra.mxu0 0.0
    %674 = vmatprep.subr.mxu0 0.0
    %675 = vmatpush2.msra.mxu0 0.0
    %676 = vmatprep.subr.mxu0 0.0
    %677 = vmatpush2.msra.mxu0 0.0
    %678 = vmatprep.subr.mxu0 0.0
    %679 = vmatpush2.msra.mxu0 0.0
    %680 = vmatprep.subr.mxu0 0.0
    %681 = vmatpush2.msra.mxu0 0.0
    %682 = vmatprep.subr.mxu0 0.0
    %683 = vmatpush2.msra.mxu0 0.0
    %684 = vmatprep.subr.mxu0 0.0
    %685 = vmatpush2.msra.mxu0 0.0
    %686 = vmatprep.subr.mxu0 0.0
    %687 = vmatpush2.msra.mxu0 0.0
    %688 = vmatprep.subr.mxu0 0.0
    %689 = vmatpush2.msra.mxu0 0.0
    %690 = vmatprep.mubr.f32.mxu0 0.0
    %691 = vmatmul.mubr.f32.gmra.mxu0 %v526
    %v692 = vpop.f32.mrf.mxu0
    %v693 = vadd.f32 %v507, %v692
    %v694 = vpop.f32.mrf.mxu0
    %v695 = vadd.f32 %v507, %v694
    %696 = vmatprep.mubr.f32.mxu0 0.0
    %697 = vmatmul.mubr.f32.gmra.mxu0 %v529
    %v698 = vpop.f32.mrf.mxu0
    %v699 = vadd.f32 %v512, %v698
    %v700 = vpop.f32.mrf.mxu0
    %v701 = vadd.f32 %v512, %v700
    %702 = vmatprep.mubr.f32.mxu0 0.0
    %703 = vmatmul.mubr.f32.gmra.mxu0 %v532
    %v704 = vpop.f32.mrf.mxu0
    %v705 = vadd.f32 %v517, %v704
    %v706 = vpop.f32.mrf.mxu0
    %v707 = vadd.f32 %v517, %v706
    %708 = vmatprep.mubr.f32.mxu0 0.0
    %709 = vmatmul.mubr.f32.gmra.mxu0 %v535
    %v710 = vpop.f32.mrf.mxu0
    %v711 = vadd.f32 %v522, %v710
    %v712 = vpop.f32.mrf.mxu0
    %v713 = vadd.f32 %v522, %v712
    %714 = vdwg.mxu0
    %715 = vmatprep.subr.mxu0 0.0
    %716 = vmatpush1.msra.mxu0 0.0
    %717 = vmatprep.subr.mxu0 0.0
    %718 = vmatpush1.msra.mxu0 0.0
    %719 = vmatprep.subr.mxu0 0.0
    %720 = vmatpush1.msra.mxu0 0.0
    %721 = vmatprep.subr.mxu0 0.0
    %722 = vmatpush1.msra.mxu0 0.0
    %723 = vmatprep.subr.mxu0 0.0
    %724 = vmatpush1.msra.mxu0 0.0
    %725 = vmatprep.subr.mxu0 0.0
    %726 = vmatpush1.msra.mxu0 0.0
    %727 = vmatprep.subr.mxu0 0.0
    %728 = vmatpush1.msra.mxu0 0.0
    %729 = vmatprep.subr.mxu0 0.0
    %730 = vmatpush1.msra.mxu0 0.0
    %731 = vmatprep.subr.mxu0 0.0
    %732 = vmatpush1.msra.mxu0 0.0
    %733 = vmatprep.subr.mxu0 0.0
    %734 = vmatpush1.msra.mxu0 0.0
    %735 = vmatprep.subr.mxu0 0.0
    %736 = vmatpush1.msra.mxu0 0.0
    %737 = vmatprep.subr.mxu0 0.0
    %738 = vmatpush1.msra.mxu0 0.0
    %739 = vmatprep.subr.mxu0 %v495
    %740 = vmatpush1.msra.mxu0 %v494
    %741 = vmatprep.subr.mxu0 %v489
    %742 = vmatpush1.msra.mxu0 %v488
    %743 = vmatprep.subr.mxu0 %v483
    %744 = vmatpush1.msra.mxu0 %v482
    %745 = vmatprep.subr.mxu0 %v477
    %746 = vmatpush1.msra.mxu0 %v476
    %747 = vmatprep.subr.mxu0 0.0
    %748 = vmatpush2.msra.mxu0 0.0
    %749 = vmatprep.subr.mxu0 0.0
    %750 = vmatpush2.msra.mxu0 0.0
    %751 = vmatprep.subr.mxu0 0.0
    %752 = vmatpush2.msra.mxu0 0.0
    %753 = vmatprep.subr.mxu0 0.0
    %754 = vmatpush2.msra.mxu0 0.0
    %755 = vmatprep.subr.mxu0 0.0
    %756 = vmatpush2.msra.mxu0 0.0
    %757 = vmatprep.subr.mxu0 0.0
    %758 = vmatpush2.msra.mxu0 0.0
    %759 = vmatprep.subr.mxu0 0.0
    %760 = vmatpush2.msra.mxu0 0.0
    %761 = vmatprep.subr.mxu0 0.0
    %762 = vmatpush2.msra.mxu0 0.0
    %763 = vmatprep.subr.mxu0 0.0
    %764 = vmatpush2.msra.mxu0 0.0
    %765 = vmatprep.subr.mxu0 0.0
    %766 = vmatpush2.msra.mxu0 0.0
    %767 = vmatprep.subr.mxu0 0.0
    %768 = vmatpush2.msra.mxu0 0.0
    %769 = vmatprep.subr.mxu0 0.0
    %770 = vmatpush2.msra.mxu0 0.0
    %771 = vmatprep.subr.mxu0 0.0
    %772 = vmatpush2.msra.mxu0 0.0
    %773 = vmatprep.subr.mxu0 0.0
    %774 = vmatpush2.msra.mxu0 0.0
    %775 = vmatprep.subr.mxu0 0.0
    %776 = vmatpush2.msra.mxu0 0.0
    %777 = vmatprep.subr.mxu0 0.0
    %778 = vmatpush2.msra.mxu0 0.0
    %779 = vmatprep.mubr.f32.mxu0 0.0
    %780 = vmatmul.mubr.f32.gmra.mxu0 %v526
    %v781 = vpop.f32.mrf.mxu0
    %v782 = vadd.f32 %v507, %v781
    %v783 = vpop.f32.mrf.mxu0
    %v784 = vadd.f32 %v507, %v783
    %785 = vmatprep.mubr.f32.mxu0 0.0
    %786 = vmatmul.mubr.f32.gmra.mxu0 %v529
    %v787 = vpop.f32.mrf.mxu0
    %v788 = vadd.f32 %v512, %v787
    %v789 = vpop.f32.mrf.mxu0
    %v790 = vadd.f32 %v512, %v789
    %791 = vmatprep.mubr.f32.mxu0 0.0
    %792 = vmatmul.mubr.f32.gmra.mxu0 %v532
    %v793 = vpop.f32.mrf.mxu0
    %v794 = vadd.f32 %v517, %v793
    %v795 = vpop.f32.mrf.mxu0
    %v796 = vadd.f32 %v517, %v795
    %797 = vmatprep.mubr.f32.mxu0 0.0
    %798 = vmatmul.mubr.f32.gmra.mxu0 %v535
    %v799 = vpop.f32.mrf.mxu0
    %v800 = vadd.f32 %v522, %v799
    %v801 = vpop.f32.mrf.mxu0
    %v802 = vadd.f32 %v522, %v801
    %803 = vdwg.mxu0
    %v804 = vmax.f32 %v604, 0.0
    %v805 = vmax.f32 %v606, 0.0
    %v806 = vmax.f32 %v693, 0.0
    %v807 = vmax.f32 %v695, 0.0
    %v808 = vmax.f32 %v782, 0.0
    %v809 = vmax.f32 %v784, 0.0
    %v810 = vmax.f32 %v610, 0.0
    %v811 = vmax.f32 %v612, 0.0
    %v812 = vmax.f32 %v699, 0.0
    %v813 = vmax.f32 %v701, 0.0
    %v814 = vmax.f32 %v788, 0.0
    %v815 = vmax.f32 %v790, 0.0
    %v816 = vmax.f32 %v616, 0.0
    %v817 = vmax.f32 %v618, 0.0
    %v818 = vmax.f32 %v705, 0.0
    %v819 = vmax.f32 %v707, 0.0
    %v820 = vmax.f32 %v794, 0.0
    %v821 = vmax.f32 %v796, 0.0
    %v822 = vmax.f32 %v622, 0.0
    %v823 = vmax.f32 %v624, 0.0
    %v824 = vmax.f32 %v711, 0.0
    %v825 = vmax.f32 %v713, 0.0
    %v826 = vmax.f32 %v800, 0.0
    %v827 = vmax.f32 %v802, 0.0
    %v828 = vld [vmem:[#allocation10] sm:$0xff]
    %v829 = vld [vmem:[#allocation10 + $0x8] sm:$0xff]
    %v830 = vld [vmem:[#allocation10 + $0x10] sm:$0xff]
    %v831 = vld [vmem:[#allocation10 + $0x18] sm:$0xff]
    %v832 = vld [vmem:[#allocation12] sm:$0xff]
    %v833 = vld [vmem:[#allocation12 + $0x8] sm:$0xff]
    %v834 = vld [vmem:[#allocation12 + $0x10] sm:$0xff]
    %v835 = vld [vmem:[#allocation12 + $0x18] sm:$0xff]
    %837 = vset.pattern.permute.xlu0 0
    %838 = vperm.xlu0 %837, %v832
    %v839 = vpop.permute.xlu0 %838
    %842 = vset.pattern.permute.xlu0 0
    %843 = vperm.xlu0 %842, %v833
    %v844 = vpop.permute.xlu0 %843
    %847 = vset.pattern.permute.xlu0 0
    %848 = vperm.xlu0 %847, %v834
    %v849 = vpop.permute.xlu0 %848
    %852 = vset.pattern.permute.xlu0 0
    %853 = vperm.xlu0 %852, %v835
    %v854 = vpop.permute.xlu0 %853
    %v857 = vsel %vm524, %v828, 0
    %v860 = vsel %vm524, %v829, 0
    %v863 = vsel %vm524, %v830, 0
    %v866 = vsel %vm524, %v831, 0
    %868 = vmatprep.subr.mxu0 0.0
    %869 = vmatpush1.msra.mxu0 0.0
    %870 = vmatprep.subr.mxu0 0.0
    %871 = vmatpush1.msra.mxu0 0.0
    %872 = vmatprep.subr.mxu0 0.0
    %873 = vmatpush1.msra.mxu0 0.0
    %874 = vmatprep.subr.mxu0 0.0
    %875 = vmatpush1.msra.mxu0 0.0
    %876 = vmatprep.subr.mxu0 0.0
    %877 = vmatpush1.msra.mxu0 0.0
    %878 = vmatprep.subr.mxu0 0.0
    %879 = vmatpush1.msra.mxu0 0.0
    %880 = vmatprep.subr.mxu0 0.0
    %881 = vmatpush1.msra.mxu0 0.0
    %882 = vmatprep.subr.mxu0 0.0
    %883 = vmatpush1.msra.mxu0 0.0
    %884 = vmatprep.subr.mxu0 0.0
    %885 = vmatpush1.msra.mxu0 0.0
    %886 = vmatprep.subr.mxu0 0.0
    %887 = vmatpush1.msra.mxu0 0.0
    %888 = vmatprep.subr.mxu0 0.0
    %889 = vmatpush1.msra.mxu0 0.0
    %890 = vmatprep.subr.mxu0 0.0
    %891 = vmatpush1.msra.mxu0 0.0
    %892 = vmatprep.subr.mxu0 %v823
    %893 = vmatpush1.msra.mxu0 %v822
    %894 = vmatprep.subr.mxu0 %v817
    %895 = vmatpush1.msra.mxu0 %v816
    %896 = vmatprep.subr.mxu0 %v811
    %897 = vmatpush1.msra.mxu0 %v810
    %898 = vmatprep.subr.mxu0 %v805
    %899 = vmatpush1.msra.mxu0 %v804
    %900 = vmatprep.subr.mxu0 0.0
    %901 = vmatpush2.msra.mxu0 0.0
    %902 = vmatprep.subr.mxu0 0.0
    %903 = vmatpush2.msra.mxu0 0.0
    %904 = vmatprep.subr.mxu0 0.0
    %905 = vmatpush2.msra.mxu0 0.0
    %906 = vmatprep.subr.mxu0 0.0
    %907 = vmatpush2.msra.mxu0 0.0
    %908 = vmatprep.subr.mxu0 0.0
    %909 = vmatpush2.msra.mxu0 0.0
    %910 = vmatprep.subr.mxu0 0.0
    %911 = vmatpush2.msra.mxu0 0.0
    %912 = vmatprep.subr.mxu0 0.0
    %913 = vmatpush2.msra.mxu0 0.0
    %914 = vmatprep.subr.mxu0 0.0
    %915 = vmatpush2.msra.mxu0 0.0
    %916 = vmatprep.subr.mxu0 0.0
    %917 = vmatpush2.msra.mxu0 0.0
    %918 = vmatprep.subr.mxu0 0.0
    %919 = vmatpush2.msra.mxu0 0.0
    %920 = vmatprep.subr.mxu0 0.0
    %921 = vmatpush2.msra.mxu0 0.0
    %922 = vmatprep.subr.mxu0 0.0
    %923 = vmatpush2.msra.mxu0 0.0
    %924 = vmatprep.subr.mxu0 0.0
    %925 = vmatpush2.msra.mxu0 0.0
    %926 = vmatprep.subr.mxu0 0.0
    %927 = vmatpush2.msra.mxu0 0.0
    %928 = vmatprep.subr.mxu0 0.0
    %929 = vmatpush2.msra.mxu0 0.0
    %930 = vmatprep.subr.mxu0 0.0
    %931 = vmatpush2.msra.mxu0 0.0
    %932 = vmatprep.mubr.f32.mxu0 0.0
    %933 = vmatmul.mubr.f32.gmra.mxu0 %v857
    %v934 = vpop.f32.mrf.mxu0
    %v935 = vadd.f32 %v839, %v934
    %v936 = vpop.f32.mrf.mxu0
    %v937 = vadd.f32 %v839, %v936
    %938 = vmatprep.mubr.f32.mxu0 0.0
    %939 = vmatmul.mubr.f32.gmra.mxu0 %v860
    %v940 = vpop.f32.mrf.mxu0
    %v941 = vadd.f32 %v844, %v940
    %v942 = vpop.f32.mrf.mxu0
    %v943 = vadd.f32 %v844, %v942
    %944 = vmatprep.mubr.f32.mxu0 0.0
    %945 = vmatmul.mubr.f32.gmra.mxu0 %v863
    %v946 = vpop.f32.mrf.mxu0
    %v947 = vadd.f32 %v849, %v946
    %v948 = vpop.f32.mrf.mxu0
    %v949 = vadd.f32 %v849, %v948
    %950 = vmatprep.mubr.f32.mxu0 0.0
    %951 = vmatmul.mubr.f32.gmra.mxu0 %v866
    %v952 = vpop.f32.mrf.mxu0
    %v953 = vadd.f32 %v854, %v952
    %v954 = vpop.f32.mrf.mxu0
    %v955 = vadd.f32 %v854, %v954
    %956 = vdwg.mxu0
    %957 = vmatprep.subr.mxu0 0.0
    %958 = vmatpush1.msra.mxu0 0.0
    %959 = vmatprep.subr.mxu0 0.0
    %960 = vmatpush1.msra.mxu0 0.0
    %961 = vmatprep.subr.mxu0 0.0
    %962 = vmatpush1.msra.mxu0 0.0
    %963 = vmatprep.subr.mxu0 0.0
    %964 = vmatpush1.msra.mxu0 0.0
    %965 = vmatprep.subr.mxu0 0.0
    %966 = vmatpush1.msra.mxu0 0.0
    %967 = vmatprep.subr.mxu0 0.0
    %968 = vmatpush1.msra.mxu0 0.0
    %969 = vmatprep.subr.mxu0 0.0
    %970 = vmatpush1.msra.mxu0 0.0
    %971 = vmatprep.subr.mxu0 0.0
    %972 = vmatpush1.msra.mxu0 0.0
    %973 = vmatprep.subr.mxu0 0.0
    %974 = vmatpush1.msra.mxu0 0.0
    %975 = vmatprep.subr.mxu0 0.0
    %976 = vmatpush1.msra.mxu0 0.0
    %977 = vmatprep.subr.mxu0 0.0
    %978 = vmatpush1.msra.mxu0 0.0
    %979 = vmatprep.subr.mxu0 0.0
    %980 = vmatpush1.msra.mxu0 0.0
    %981 = vmatprep.subr.mxu0 %v825
    %982 = vmatpush1.msra.mxu0 %v824
    %983 = vmatprep.subr.mxu0 %v819
    %984 = vmatpush1.msra.mxu0 %v818
    %985 = vmatprep.subr.mxu0 %v813
    %986 = vmatpush1.msra.mxu0 %v812
    %987 = vmatprep.subr.mxu0 %v807
    %988 = vmatpush1.msra.mxu0 %v806
    %989 = vmatprep.subr.mxu0 0.0
    %990 = vmatpush2.msra.mxu0 0.0
    %991 = vmatprep.subr.mxu0 0.0
    %992 = vmatpush2.msra.mxu0 0.0
    %993 = vmatprep.subr.mxu0 0.0
    %994 = vmatpush2.msra.mxu0 0.0
    %995 = vmatprep.subr.mxu0 0.0
    %996 = vmatpush2.msra.mxu0 0.0
    %997 = vmatprep.subr.mxu0 0.0
    %998 = vmatpush2.msra.mxu0 0.0
    %999 = vmatprep.subr.mxu0 0.0
    %1000 = vmatpush2.msra.mxu0 0.0
    %1001 = vmatprep.subr.mxu0 0.0
    %1002 = vmatpush2.msra.mxu0 0.0
    %1003 = vmatprep.subr.mxu0 0.0
    %1004 = vmatpush2.msra.mxu0 0.0
    %1005 = vmatprep.subr.mxu0 0.0
    %1006 = vmatpush2.msra.mxu0 0.0
    %1007 = vmatprep.subr.mxu0 0.0
    %1008 = vmatpush2.msra.mxu0 0.0
    %1009 = vmatprep.subr.mxu0 0.0
    %1010 = vmatpush2.msra.mxu0 0.0
    %1011 = vmatprep.subr.mxu0 0.0
    %1012 = vmatpush2.msra.mxu0 0.0
    %1013 = vmatprep.subr.mxu0 0.0
    %1014 = vmatpush2.msra.mxu0 0.0
    %1015 = vmatprep.subr.mxu0 0.0
    %1016 = vmatpush2.msra.mxu0 0.0
    %1017 = vmatprep.subr.mxu0 0.0
    %1018 = vmatpush2.msra.mxu0 0.0
    %1019 = vmatprep.subr.mxu0 0.0
    %1020 = vmatpush2.msra.mxu0 0.0
    %1021 = vmatprep.mubr.f32.mxu0 0.0
    %1022 = vmatmul.mubr.f32.gmra.mxu0 %v857
    %v1023 = vpop.f32.mrf.mxu0
    %v1024 = vadd.f32 %v839, %v1023
    %v1025 = vpop.f32.mrf.mxu0
    %v1026 = vadd.f32 %v839, %v1025
    %1027 = vmatprep.mubr.f32.mxu0 0.0
    %1028 = vmatmul.mubr.f32.gmra.mxu0 %v860
    %v1029 = vpop.f32.mrf.mxu0
    %v1030 = vadd.f32 %v844, %v1029
    %v1031 = vpop.f32.mrf.mxu0
    %v1032 = vadd.f32 %v844, %v1031
    %1033 = vmatprep.mubr.f32.mxu0 0.0
    %1034 = vmatmul.mubr.f32.gmra.mxu0 %v863
    %v1035 = vpop.f32.mrf.mxu0
    %v1036 = vadd.f32 %v849, %v1035
    %v1037 = vpop.f32.mrf.mxu0
    %v1038 = vadd.f32 %v849, %v1037
    %1039 = vmatprep.mubr.f32.mxu0 0.0
    %1040 = vmatmul.mubr.f32.gmra.mxu0 %v866
    %v1041 = vpop.f32.mrf.mxu0
    %v1042 = vadd.f32 %v854, %v1041
    %v1043 = vpop.f32.mrf.mxu0
    %v1044 = vadd.f32 %v854, %v1043
    %1045 = vdwg.mxu0
    %1046 = vmatprep.subr.mxu0 0.0
    %1047 = vmatpush1.msra.mxu0 0.0
    %1048 = vmatprep.subr.mxu0 0.0
    %1049 = vmatpush1.msra.mxu0 0.0
    %1050 = vmatprep.subr.mxu0 0.0
    %1051 = vmatpush1.msra.mxu0 0.0
    %1052 = vmatprep.subr.mxu0 0.0
    %1053 = vmatpush1.msra.mxu0 0.0
    %1054 = vmatprep.subr.mxu0 0.0
    %1055 = vmatpush1.msra.mxu0 0.0
    %1056 = vmatprep.subr.mxu0 0.0
    %1057 = vmatpush1.msra.mxu0 0.0
    %1058 = vmatprep.subr.mxu0 0.0
    %1059 = vmatpush1.msra.mxu0 0.0
    %1060 = vmatprep.subr.mxu0 0.0
    %1061 = vmatpush1.msra.mxu0 0.0
    %1062 = vmatprep.subr.mxu0 0.0
    %1063 = vmatpush1.msra.mxu0 0.0
    %1064 = vmatprep.subr.mxu0 0.0
    %1065 = vmatpush1.msra.mxu0 0.0
    %1066 = vmatprep.subr.mxu0 0.0
    %1067 = vmatpush1.msra.mxu0 0.0
    %1068 = vmatprep.subr.mxu0 0.0
    %1069 = vmatpush1.msra.mxu0 0.0
    %1070 = vmatprep.subr.mxu0 %v827
    %1071 = vmatpush1.msra.mxu0 %v826
    %1072 = vmatprep.subr.mxu0 %v821
    %1073 = vmatpush1.msra.mxu0 %v820
    %1074 = vmatprep.subr.mxu0 %v815
    %1075 = vmatpush1.msra.mxu0 %v814
    %1076 = vmatprep.subr.mxu0 %v809
    %1077 = vmatpush1.msra.mxu0 %v808
    %1078 = vmatprep.subr.mxu0 0.0
    %1079 = vmatpush2.msra.mxu0 0.0
    %1080 = vmatprep.subr.mxu0 0.0
    %1081 = vmatpush2.msra.mxu0 0.0
    %1082 = vmatprep.subr.mxu0 0.0
    %1083 = vmatpush2.msra.mxu0 0.0
    %1084 = vmatprep.subr.mxu0 0.0
    %1085 = vmatpush2.msra.mxu0 0.0
    %1086 = vmatprep.subr.mxu0 0.0
    %1087 = vmatpush2.msra.mxu0 0.0
    %1088 = vmatprep.subr.mxu0 0.0
    %1089 = vmatpush2.msra.mxu0 0.0
    %1090 = vmatprep.subr.mxu0 0.0
    %1091 = vmatpush2.msra.mxu0 0.0
    %1092 = vmatprep.subr.mxu0 0.0
    %1093 = vmatpush2.msra.mxu0 0.0
    %1094 = vmatprep.subr.mxu0 0.0
    %1095 = vmatpush2.msra.mxu0 0.0
    %1096 = vmatprep.subr.mxu0 0.0
    %1097 = vmatpush2.msra.mxu0 0.0
    %1098 = vmatprep.subr.mxu0 0.0
    %1099 = vmatpush2.msra.mxu0 0.0
    %1100 = vmatprep.subr.mxu0 0.0
    %1101 = vmatpush2.msra.mxu0 0.0
    %1102 = vmatprep.subr.mxu0 0.0
    %1103 = vmatpush2.msra.mxu0 0.0
    %1104 = vmatprep.subr.mxu0 0.0
    %1105 = vmatpush2.msra.mxu0 0.0
    %1106 = vmatprep.subr.mxu0 0.0
    %1107 = vmatpush2.msra.mxu0 0.0
    %1108 = vmatprep.subr.mxu0 0.0
    %1109 = vmatpush2.msra.mxu0 0.0
    %1110 = vmatprep.mubr.f32.mxu0 0.0
    %1111 = vmatmul.mubr.f32.gmra.mxu0 %v857
    %v1112 = vpop.f32.mrf.mxu0
    %v1113 = vadd.f32 %v839, %v1112
    %v1114 = vpop.f32.mrf.mxu0
    %v1115 = vadd.f32 %v839, %v1114
    %1116 = vmatprep.mubr.f32.mxu0 0.0
    %1117 = vmatmul.mubr.f32.gmra.mxu0 %v860
    %v1118 = vpop.f32.mrf.mxu0
    %v1119 = vadd.f32 %v844, %v1118
    %v1120 = vpop.f32.mrf.mxu0
    %v1121 = vadd.f32 %v844, %v1120
    %1122 = vmatprep.mubr.f32.mxu0 0.0
    %1123 = vmatmul.mubr.f32.gmra.mxu0 %v863
    %v1124 = vpop.f32.mrf.mxu0
    %v1125 = vadd.f32 %v849, %v1124
    %v1126 = vpop.f32.mrf.mxu0
    %v1127 = vadd.f32 %v849, %v1126
    %1128 = vmatprep.mubr.f32.mxu0 0.0
    %1129 = vmatmul.mubr.f32.gmra.mxu0 %v866
    %v1130 = vpop.f32.mrf.mxu0
    %v1131 = vadd.f32 %v854, %v1130
    %v1132 = vpop.f32.mrf.mxu0
    %v1133 = vadd.f32 %v854, %v1132
    %1134 = vdwg.mxu0
    %v1135 = vld [vmem:[#allocation2] sm:$0xff]
    %v1136 = vld [vmem:[#allocation2 + $0x8] sm:$0xff]
    %v1137 = vld [vmem:[#allocation2 + $0x10] sm:$0xff]
    %v1138 = vld [vmem:[#allocation2 + $0x18] sm:$0xff]
    %v1139 = vld [vmem:[#allocation2 + $0x20] sm:$0xff]
    %v1140 = vld [vmem:[#allocation2 + $0x28] sm:$0xff]
    %v1141 = vld [vmem:[#allocation2 + $0x30] sm:$0xff]
    %v1142 = vld [vmem:[#allocation2 + $0x38] sm:$0xff]
    %v1143 = vld [vmem:[#allocation2 + $0x40] sm:$0xff]
    %v1144 = vld [vmem:[#allocation2 + $0x48] sm:$0xff]
    %v1145 = vld [vmem:[#allocation2 + $0x50] sm:$0xff]
    %v1146 = vld [vmem:[#allocation2 + $0x58] sm:$0xff]
    %v1147 = vld [vmem:[#allocation2 + $0x60] sm:$0xff]
    %v1148 = vld [vmem:[#allocation2 + $0x68] sm:$0xff]
    %v1149 = vld [vmem:[#allocation2 + $0x70] sm:$0xff]
    %v1150 = vld [vmem:[#allocation2 + $0x78] sm:$0xff]
    %v1151 = vld [vmem:[#allocation2 + $0x80] sm:$0xff]
    %v1152 = vld [vmem:[#allocation2 + $0x88] sm:$0xff]
    %v1153 = vld [vmem:[#allocation2 + $0x90] sm:$0xff]
    %v1154 = vld [vmem:[#allocation2 + $0x98] sm:$0xff]
    %v1155 = vld [vmem:[#allocation2 + $0xa0] sm:$0xff]
    %v1156 = vld [vmem:[#allocation2 + $0xa8] sm:$0xff]
    %v1157 = vld [vmem:[#allocation2 + $0xb0] sm:$0xff]
    %v1158 = vld [vmem:[#allocation2 + $0xb8] sm:$0xff]
    %v1159 = vld [vmem:[#allocation2 + $0xc0] sm:$0xff]
    %v1160 = vld [vmem:[#allocation2 + $0xc8] sm:$0xff]
    %v1161 = vld [vmem:[#allocation2 + $0xd0] sm:$0xff]
    %v1162 = vld [vmem:[#allocation2 + $0xd8] sm:$0xff]
    %v1163 = vld [vmem:[#allocation2 + $0xe0] sm:$0xff]
    %v1164 = vld [vmem:[#allocation2 + $0xe8] sm:$0xff]
    %v1165 = vld [vmem:[#allocation2 + $0xf0] sm:$0xff]
    %v1166 = vld [vmem:[#allocation2 + $0xf8] sm:$0xff]
    %v1167 = vld [vmem:[#allocation2 + $0x100] sm:$0xff]
    %v1168 = vld [vmem:[#allocation2 + $0x108] sm:$0xff]
    %v1169 = vld [vmem:[#allocation2 + $0x110] sm:$0xff]
    %v1170 = vld [vmem:[#allocation2 + $0x118] sm:$0xff]
    %v1171 = vld [vmem:[#allocation2 + $0x120] sm:$0xff]
    %v1172 = vld [vmem:[#allocation2 + $0x128] sm:$0xff]
    %v1173 = vld [vmem:[#allocation2 + $0x130] sm:$0xff]
    %v1174 = vld [vmem:[#allocation2 + $0x138] sm:$0xff]
    %v1175 = vld [vmem:[#allocation2 + $0x140] sm:$0xff]
    %v1176 = vld [vmem:[#allocation2 + $0x148] sm:$0xff]
    %v1177 = vld [vmem:[#allocation2 + $0x150] sm:$0xff]
    %v1178 = vld [vmem:[#allocation2 + $0x158] sm:$0xff]
    %v1179 = vld [vmem:[#allocation2 + $0x160] sm:$0xff]
    %v1180 = vld [vmem:[#allocation2 + $0x168] sm:$0xff]
    %v1181 = vld [vmem:[#allocation2 + $0x170] sm:$0xff]
    %v1182 = vld [vmem:[#allocation2 + $0x178] sm:$0xff]
    %v1183 = vld [vmem:[#allocation2 + $0x180] sm:$0xff]
    %v1184 = vld [vmem:[#allocation2 + $0x188] sm:$0xff]
    %v1185 = vld [vmem:[#allocation2 + $0x190] sm:$0xff]
    %v1186 = vld [vmem:[#allocation2 + $0x198] sm:$0xff]
    %v1187 = vld [vmem:[#allocation2 + $0x1a0] sm:$0xff]
    %v1188 = vld [vmem:[#allocation2 + $0x1a8] sm:$0xff]
    %v1189 = vld [vmem:[#allocation2 + $0x1b0] sm:$0xff]
    %v1190 = vld [vmem:[#allocation2 + $0x1b8] sm:$0xff]
    %v1191 = vld [vmem:[#allocation2 + $0x1c0] sm:$0xff]
    %v1192 = vld [vmem:[#allocation2 + $0x1c8] sm:$0xff]
    %v1193 = vld [vmem:[#allocation2 + $0x1d0] sm:$0xff]
    %v1194 = vld [vmem:[#allocation2 + $0x1d8] sm:$0xff]
    %v1195 = vld [vmem:[#allocation2 + $0x1e0] sm:$0xff]
    %v1196 = vld [vmem:[#allocation2 + $0x1e8] sm:$0xff]
    %v1197 = vld [vmem:[#allocation2 + $0x1f0] sm:$0xff]
    %v1198 = vld [vmem:[#allocation2 + $0x1f8] sm:$0xff]
    %v1199 = vld [vmem:[#allocation2 + $0x200] sm:$0xff]
    %v1200 = vld [vmem:[#allocation2 + $0x208] sm:$0xff]
    %v1201 = vld [vmem:[#allocation2 + $0x210] sm:$0xff]
    %v1202 = vld [vmem:[#allocation2 + $0x218] sm:$0xff]
    %v1203 = vld [vmem:[#allocation2 + $0x220] sm:$0xff]
    %v1204 = vld [vmem:[#allocation2 + $0x228] sm:$0xff]
    %v1205 = vld [vmem:[#allocation2 + $0x230] sm:$0xff]
    %v1206 = vld [vmem:[#allocation2 + $0x238] sm:$0xff]
    %v1207 = vld [vmem:[#allocation2 + $0x240] sm:$0xff]
    %v1208 = vld [vmem:[#allocation2 + $0x248] sm:$0xff]
    %v1209 = vld [vmem:[#allocation2 + $0x250] sm:$0xff]
    %v1210 = vld [vmem:[#allocation2 + $0x258] sm:$0xff]
    %v1211 = vld [vmem:[#allocation2 + $0x260] sm:$0xff]
    %v1212 = vld [vmem:[#allocation2 + $0x268] sm:$0xff]
    %v1213 = vld [vmem:[#allocation2 + $0x270] sm:$0xff]
    %v1214 = vld [vmem:[#allocation2 + $0x278] sm:$0xff]
    %v1215 = vld [vmem:[#allocation2 + $0x280] sm:$0xff]
    %v1216 = vld [vmem:[#allocation2 + $0x288] sm:$0xff]
    %v1217 = vld [vmem:[#allocation2 + $0x290] sm:$0xff]
    %v1218 = vld [vmem:[#allocation2 + $0x298] sm:$0xff]
    %v1219 = vld [vmem:[#allocation2 + $0x2a0] sm:$0xff]
    %v1220 = vld [vmem:[#allocation2 + $0x2a8] sm:$0xff]
    %v1221 = vld [vmem:[#allocation2 + $0x2b0] sm:$0xff]
    %v1222 = vld [vmem:[#allocation2 + $0x2b8] sm:$0xff]
    %v1223 = vld [vmem:[#allocation2 + $0x2c0] sm:$0xff]
    %v1224 = vld [vmem:[#allocation2 + $0x2c8] sm:$0xff]
    %v1225 = vld [vmem:[#allocation2 + $0x2d0] sm:$0xff]
    %v1226 = vld [vmem:[#allocation2 + $0x2d8] sm:$0xff]
    %v1227 = vld [vmem:[#allocation2 + $0x2e0] sm:$0xff]
    %v1228 = vld [vmem:[#allocation2 + $0x2e8] sm:$0xff]
    %v1229 = vld [vmem:[#allocation2 + $0x2f0] sm:$0xff]
    %v1230 = vld [vmem:[#allocation2 + $0x2f8] sm:$0xff]
    %1231 = vmatprep.subr.mxu0 0.0
    %1232 = vmatpush1.msra.mxu0 %v1150
    %1233 = vmatprep.subr.mxu0 0.0
    %1234 = vmatpush1.msra.mxu0 %v1149
    %1235 = vmatprep.subr.mxu0 0.0
    %1236 = vmatpush1.msra.mxu0 %v1148
    %1237 = vmatprep.subr.mxu0 0.0
    %1238 = vmatpush1.msra.mxu0 %v1147
    %1239 = vmatprep.subr.mxu0 0.0
    %1240 = vmatpush1.msra.mxu0 %v1146
    %1241 = vmatprep.subr.mxu0 0.0
    %1242 = vmatpush1.msra.mxu0 %v1145
    %1243 = vmatprep.subr.mxu0 0.0
    %1244 = vmatpush1.msra.mxu0 %v1144
    %1245 = vmatprep.subr.mxu0 0.0
    %1246 = vmatpush1.msra.mxu0 %v1143
    %1247 = vmatprep.subr.mxu0 0.0
    %1248 = vmatpush1.msra.mxu0 %v1142
    %1249 = vmatprep.subr.mxu0 0.0
    %1250 = vmatpush1.msra.mxu0 %v1141
    %1251 = vmatprep.subr.mxu0 0.0
    %1252 = vmatpush1.msra.mxu0 %v1140
    %1253 = vmatprep.subr.mxu0 0.0
    %1254 = vmatpush1.msra.mxu0 %v1139
    %1255 = vmatprep.subr.mxu0 0.0
    %1256 = vmatpush1.msra.mxu0 %v1138
    %1257 = vmatprep.subr.mxu0 0.0
    %1258 = vmatpush1.msra.mxu0 %v1137
    %1259 = vmatprep.subr.mxu0 0.0
    %1260 = vmatpush1.msra.mxu0 %v1136
    %1261 = vmatprep.subr.mxu0 0.0
    %1262 = vmatpush1.msra.mxu0 %v1135
    %1263 = vmatprep.subr.mxu0 0.0
    %1264 = vmatpush2.msra.mxu0 %v1166
    %1265 = vmatprep.subr.mxu0 0.0
    %1266 = vmatpush2.msra.mxu0 %v1165
    %1267 = vmatprep.subr.mxu0 0.0
    %1268 = vmatpush2.msra.mxu0 %v1164
    %1269 = vmatprep.subr.mxu0 0.0
    %1270 = vmatpush2.msra.mxu0 %v1163
    %1271 = vmatprep.subr.mxu0 0.0
    %1272 = vmatpush2.msra.mxu0 %v1162
    %1273 = vmatprep.subr.mxu0 0.0
    %1274 = vmatpush2.msra.mxu0 %v1161
    %1275 = vmatprep.subr.mxu0 0.0
    %1276 = vmatpush2.msra.mxu0 %v1160
    %1277 = vmatprep.subr.mxu0 0.0
    %1278 = vmatpush2.msra.mxu0 %v1159
    %1279 = vmatprep.subr.mxu0 0.0
    %1280 = vmatpush2.msra.mxu0 %v1158
    %1281 = vmatprep.subr.mxu0 0.0
    %1282 = vmatpush2.msra.mxu0 %v1157
    %1283 = vmatprep.subr.mxu0 0.0
    %1284 = vmatpush2.msra.mxu0 %v1156
    %1285 = vmatprep.subr.mxu0 0.0
    %1286 = vmatpush2.msra.mxu0 %v1155
    %1287 = vmatprep.subr.mxu0 0.0
    %1288 = vmatpush2.msra.mxu0 %v1154
    %1289 = vmatprep.subr.mxu0 0.0
    %1290 = vmatpush2.msra.mxu0 %v1153
    %1291 = vmatprep.subr.mxu0 0.0
    %1292 = vmatpush2.msra.mxu0 %v1152
    %1293 = vmatprep.subr.mxu0 0.0
    %1294 = vmatpush2.msra.mxu0 %v1151
    %1295 = vmatprep.mubr.f32.mxu0 %v937
    %1296 = vmatmul.mubr.f32.gmra.mxu0 %v935
    %v1297 = vpop.f32.mrf.mxu0
    %v1298 = vadd.f32 0.0, %v1297
    %v1299 = vpop.f32.mrf.mxu0
    %1300 = vmatprep.mubr.f32.mxu0 %v943
    %1301 = vmatmul.mubr.f32.gmra.mxu0 %v941
    %v1302 = vpop.f32.mrf.mxu0
    %v1303 = vadd.f32 0.0, %v1302
    %v1304 = vpop.f32.mrf.mxu0
    %1305 = vmatprep.mubr.f32.mxu0 %v949
    %1306 = vmatmul.mubr.f32.gmra.mxu0 %v947
    %v1307 = vpop.f32.mrf.mxu0
    %v1308 = vadd.f32 0.0, %v1307
    %v1309 = vpop.f32.mrf.mxu0
    %1310 = vmatprep.mubr.f32.mxu0 %v955
    %1311 = vmatmul.mubr.f32.gmra.mxu0 %v953
    %v1312 = vpop.f32.mrf.mxu0
    %v1313 = vadd.f32 0.0, %v1312
    %v1314 = vpop.f32.mrf.mxu0
    %1315 = vdwg.mxu0
    %1316 = vmatprep.subr.mxu0 0.0
    %1317 = vmatpush1.msra.mxu0 %v1182
    %1318 = vmatprep.subr.mxu0 0.0
    %1319 = vmatpush1.msra.mxu0 %v1181
    %1320 = vmatprep.subr.mxu0 0.0
    %1321 = vmatpush1.msra.mxu0 %v1180
    %1322 = vmatprep.subr.mxu0 0.0
    %1323 = vmatpush1.msra.mxu0 %v1179
    %1324 = vmatprep.subr.mxu0 0.0
    %1325 = vmatpush1.msra.mxu0 %v1178
    %1326 = vmatprep.subr.mxu0 0.0
    %1327 = vmatpush1.msra.mxu0 %v1177
    %1328 = vmatprep.subr.mxu0 0.0
    %1329 = vmatpush1.msra.mxu0 %v1176
    %1330 = vmatprep.subr.mxu0 0.0
    %1331 = vmatpush1.msra.mxu0 %v1175
    %1332 = vmatprep.subr.mxu0 0.0
    %1333 = vmatpush1.msra.mxu0 %v1174
    %1334 = vmatprep.subr.mxu0 0.0
    %1335 = vmatpush1.msra.mxu0 %v1173
    %1336 = vmatprep.subr.mxu0 0.0
    %1337 = vmatpush1.msra.mxu0 %v1172
    %1338 = vmatprep.subr.mxu0 0.0
    %1339 = vmatpush1.msra.mxu0 %v1171
    %1340 = vmatprep.subr.mxu0 0.0
    %1341 = vmatpush1.msra.mxu0 %v1170
    %1342 = vmatprep.subr.mxu0 0.0
    %1343 = vmatpush1.msra.mxu0 %v1169
    %1344 = vmatprep.subr.mxu0 0.0
    %1345 = vmatpush1.msra.mxu0 %v1168
    %1346 = vmatprep.subr.mxu0 0.0
    %1347 = vmatpush1.msra.mxu0 %v1167
    %1348 = vmatprep.subr.mxu0 0.0
    %1349 = vmatpush2.msra.mxu0 %v1198
    %1350 = vmatprep.subr.mxu0 0.0
    %1351 = vmatpush2.msra.mxu0 %v1197
    %1352 = vmatprep.subr.mxu0 0.0
    %1353 = vmatpush2.msra.mxu0 %v1196
    %1354 = vmatprep.subr.mxu0 0.0
    %1355 = vmatpush2.msra.mxu0 %v1195
    %1356 = vmatprep.subr.mxu0 0.0
    %1357 = vmatpush2.msra.mxu0 %v1194
    %1358 = vmatprep.subr.mxu0 0.0
    %1359 = vmatpush2.msra.mxu0 %v1193
    %1360 = vmatprep.subr.mxu0 0.0
    %1361 = vmatpush2.msra.mxu0 %v1192
    %1362 = vmatprep.subr.mxu0 0.0
    %1363 = vmatpush2.msra.mxu0 %v1191
    %1364 = vmatprep.subr.mxu0 0.0
    %1365 = vmatpush2.msra.mxu0 %v1190
    %1366 = vmatprep.subr.mxu0 0.0
    %1367 = vmatpush2.msra.mxu0 %v1189
    %1368 = vmatprep.subr.mxu0 0.0
    %1369 = vmatpush2.msra.mxu0 %v1188
    %1370 = vmatprep.subr.mxu0 0.0
    %1371 = vmatpush2.msra.mxu0 %v1187
    %1372 = vmatprep.subr.mxu0 0.0
    %1373 = vmatpush2.msra.mxu0 %v1186
    %1374 = vmatprep.subr.mxu0 0.0
    %1375 = vmatpush2.msra.mxu0 %v1185
    %1376 = vmatprep.subr.mxu0 0.0
    %1377 = vmatpush2.msra.mxu0 %v1184
    %1378 = vmatprep.subr.mxu0 0.0
    %1379 = vmatpush2.msra.mxu0 %v1183
    %1380 = vmatprep.mubr.f32.mxu0 %v1026
    %1381 = vmatmul.mubr.f32.gmra.mxu0 %v1024
    %v1382 = vpop.f32.mrf.mxu0
    %v1383 = vadd.f32 %v1298, %v1382
    %v1384 = vpop.f32.mrf.mxu0
    %1385 = vmatprep.mubr.f32.mxu0 %v1032
    %1386 = vmatmul.mubr.f32.gmra.mxu0 %v1030
    %v1387 = vpop.f32.mrf.mxu0
    %v1388 = vadd.f32 %v1303, %v1387
    %v1389 = vpop.f32.mrf.mxu0
    %1390 = vmatprep.mubr.f32.mxu0 %v1038
    %1391 = vmatmul.mubr.f32.gmra.mxu0 %v1036
    %v1392 = vpop.f32.mrf.mxu0
    %v1393 = vadd.f32 %v1308, %v1392
    %v1394 = vpop.f32.mrf.mxu0
    %1395 = vmatprep.mubr.f32.mxu0 %v1044
    %1396 = vmatmul.mubr.f32.gmra.mxu0 %v1042
    %v1397 = vpop.f32.mrf.mxu0
    %v1398 = vadd.f32 %v1313, %v1397
    %v1399 = vpop.f32.mrf.mxu0
    %1400 = vdwg.mxu0
    %1401 = vmatprep.subr.mxu0 0.0
    %1402 = vmatpush1.msra.mxu0 %v1214
    %1403 = vmatprep.subr.mxu0 0.0
    %1404 = vmatpush1.msra.mxu0 %v1213
    %1405 = vmatprep.subr.mxu0 0.0
    %1406 = vmatpush1.msra.mxu0 %v1212
    %1407 = vmatprep.subr.mxu0 0.0
    %1408 = vmatpush1.msra.mxu0 %v1211
    %1409 = vmatprep.subr.mxu0 0.0
    %1410 = vmatpush1.msra.mxu0 %v1210
    %1411 = vmatprep.subr.mxu0 0.0
    %1412 = vmatpush1.msra.mxu0 %v1209
    %1413 = vmatprep.subr.mxu0 0.0
    %1414 = vmatpush1.msra.mxu0 %v1208
    %1415 = vmatprep.subr.mxu0 0.0
    %1416 = vmatpush1.msra.mxu0 %v1207
    %1417 = vmatprep.subr.mxu0 0.0
    %1418 = vmatpush1.msra.mxu0 %v1206
    %1419 = vmatprep.subr.mxu0 0.0
    %1420 = vmatpush1.msra.mxu0 %v1205
    %1421 = vmatprep.subr.mxu0 0.0
    %1422 = vmatpush1.msra.mxu0 %v1204
    %1423 = vmatprep.subr.mxu0 0.0
    %1424 = vmatpush1.msra.mxu0 %v1203
    %1425 = vmatprep.subr.mxu0 0.0
    %1426 = vmatpush1.msra.mxu0 %v1202
    %1427 = vmatprep.subr.mxu0 0.0
    %1428 = vmatpush1.msra.mxu0 %v1201
    %1429 = vmatprep.subr.mxu0 0.0
    %1430 = vmatpush1.msra.mxu0 %v1200
    %1431 = vmatprep.subr.mxu0 0.0
    %1432 = vmatpush1.msra.mxu0 %v1199
    %1433 = vmatprep.subr.mxu0 0.0
    %1434 = vmatpush2.msra.mxu0 %v1230
    %1435 = vmatprep.subr.mxu0 0.0
    %1436 = vmatpush2.msra.mxu0 %v1229
    %1437 = vmatprep.subr.mxu0 0.0
    %1438 = vmatpush2.msra.mxu0 %v1228
    %1439 = vmatprep.subr.mxu0 0.0
    %1440 = vmatpush2.msra.mxu0 %v1227
    %1441 = vmatprep.subr.mxu0 0.0
    %1442 = vmatpush2.msra.mxu0 %v1226
    %1443 = vmatprep.subr.mxu0 0.0
    %1444 = vmatpush2.msra.mxu0 %v1225
    %1445 = vmatprep.subr.mxu0 0.0
    %1446 = vmatpush2.msra.mxu0 %v1224
    %1447 = vmatprep.subr.mxu0 0.0
    %1448 = vmatpush2.msra.mxu0 %v1223
    %1449 = vmatprep.subr.mxu0 0.0
    %1450 = vmatpush2.msra.mxu0 %v1222
    %1451 = vmatprep.subr.mxu0 0.0
    %1452 = vmatpush2.msra.mxu0 %v1221
    %1453 = vmatprep.subr.mxu0 0.0
    %1454 = vmatpush2.msra.mxu0 %v1220
    %1455 = vmatprep.subr.mxu0 0.0
    %1456 = vmatpush2.msra.mxu0 %v1219
    %1457 = vmatprep.subr.mxu0 0.0
    %1458 = vmatpush2.msra.mxu0 %v1218
    %1459 = vmatprep.subr.mxu0 0.0
    %1460 = vmatpush2.msra.mxu0 %v1217
    %1461 = vmatprep.subr.mxu0 0.0
    %1462 = vmatpush2.msra.mxu0 %v1216
    %1463 = vmatprep.subr.mxu0 0.0
    %1464 = vmatpush2.msra.mxu0 %v1215
    %1465 = vmatprep.mubr.f32.mxu0 %v1115
    %1466 = vmatmul.mubr.f32.gmra.mxu0 %v1113
    %v1467 = vpop.f32.mrf.mxu0
    %v1468 = vadd.f32 %v1383, %v1467
    %v1469 = vpop.f32.mrf.mxu0
    %1470 = vmatprep.mubr.f32.mxu0 %v1121
    %1471 = vmatmul.mubr.f32.gmra.mxu0 %v1119
    %v1472 = vpop.f32.mrf.mxu0
    %v1473 = vadd.f32 %v1388, %v1472
    %v1474 = vpop.f32.mrf.mxu0
    %1475 = vmatprep.mubr.f32.mxu0 %v1127
    %1476 = vmatmul.mubr.f32.gmra.mxu0 %v1125
    %v1477 = vpop.f32.mrf.mxu0
    %v1478 = vadd.f32 %v1393, %v1477
    %v1479 = vpop.f32.mrf.mxu0
    %1480 = vmatprep.mubr.f32.mxu0 %v1133
    %1481 = vmatmul.mubr.f32.gmra.mxu0 %v1131
    %v1482 = vpop.f32.mrf.mxu0
    %v1483 = vadd.f32 %v1398, %v1482
    %v1484 = vpop.f32.mrf.mxu0
    %1485 = vdwg.mxu0
    %v1486 = vld [vmem:[#allocation13] sm:$0xff]
    %v1487 = vld [vmem:[#allocation13 + $0x8] sm:$0xff]
    %v1488 = vld [vmem:[#allocation13 + $0x10] sm:$0xff]
    %v1489 = vld [vmem:[#allocation13 + $0x18] sm:$0xff]
    %v1490 = vld [vmem:[%s9] sm:$0xff]
    %v1491 = vld [vmem:[%s9 + $0x8] sm:$0xff]
    %v1492 = vld [vmem:[%s9 + $0x10] sm:$0xff]
    %v1493 = vld [vmem:[%s9 + $0x18] sm:$0xff]
    %1495 = vset.pattern.permute.xlu0 0
    %1496 = vperm.xlu0 %1495, %v1490
    %v1497 = vpop.permute.xlu0 %1496
    %1500 = vset.pattern.permute.xlu0 0
    %1501 = vperm.xlu0 %1500, %v1491
    %v1502 = vpop.permute.xlu0 %1501
    %1505 = vset.pattern.permute.xlu0 0
    %1506 = vperm.xlu0 %1505, %v1492
    %v1507 = vpop.permute.xlu0 %1506
    %1510 = vset.pattern.permute.xlu0 0
    %1511 = vperm.xlu0 %1510, %v1493
    %v1512 = vpop.permute.xlu0 %1511
    %v1515 = vsel %vm524, %v1486, 0
    %v1518 = vsel %vm524, %v1487, 0
    %v1521 = vsel %vm524, %v1488, 0
    %v1524 = vsel %vm524, %v1489, 0
    %1526 = vmatprep.subr.mxu0 0.0
    %1527 = vmatpush1.msra.mxu0 0.0
    %1528 = vmatprep.subr.mxu0 0.0
    %1529 = vmatpush1.msra.mxu0 0.0
    %1530 = vmatprep.subr.mxu0 0.0
    %1531 = vmatpush1.msra.mxu0 0.0
    %1532 = vmatprep.subr.mxu0 0.0
    %1533 = vmatpush1.msra.mxu0 0.0
    %1534 = vmatprep.subr.mxu0 0.0
    %1535 = vmatpush1.msra.mxu0 0.0
    %1536 = vmatprep.subr.mxu0 0.0
    %1537 = vmatpush1.msra.mxu0 0.0
    %1538 = vmatprep.subr.mxu0 0.0
    %1539 = vmatpush1.msra.mxu0 0.0
    %1540 = vmatprep.subr.mxu0 0.0
    %1541 = vmatpush1.msra.mxu0 0.0
    %1542 = vmatprep.subr.mxu0 0.0
    %1543 = vmatpush1.msra.mxu0 0.0
    %1544 = vmatprep.subr.mxu0 0.0
    %1545 = vmatpush1.msra.mxu0 0.0
    %1546 = vmatprep.subr.mxu0 0.0
    %1547 = vmatpush1.msra.mxu0 0.0
    %1548 = vmatprep.subr.mxu0 0.0
    %1549 = vmatpush1.msra.mxu0 0.0
    %1550 = vmatprep.subr.mxu0 0.0
    %1551 = vmatpush1.msra.mxu0 %v1483
    %1552 = vmatprep.subr.mxu0 0.0
    %1553 = vmatpush1.msra.mxu0 %v1478
    %1554 = vmatprep.subr.mxu0 0.0
    %1555 = vmatpush1.msra.mxu0 %v1473
    %1556 = vmatprep.subr.mxu0 0.0
    %1557 = vmatpush1.msra.mxu0 %v1468
    %1558 = vmatprep.subr.mxu0 0.0
    %1559 = vmatpush2.msra.mxu0 0.0
    %1560 = vmatprep.subr.mxu0 0.0
    %1561 = vmatpush2.msra.mxu0 0.0
    %1562 = vmatprep.subr.mxu0 0.0
    %1563 = vmatpush2.msra.mxu0 0.0
    %1564 = vmatprep.subr.mxu0 0.0
    %1565 = vmatpush2.msra.mxu0 0.0
    %1566 = vmatprep.subr.mxu0 0.0
    %1567 = vmatpush2.msra.mxu0 0.0
    %1568 = vmatprep.subr.mxu0 0.0
    %1569 = vmatpush2.msra.mxu0 0.0
    %1570 = vmatprep.subr.mxu0 0.0
    %1571 = vmatpush2.msra.mxu0 0.0
    %1572 = vmatprep.subr.mxu0 0.0
    %1573 = vmatpush2.msra.mxu0 0.0
    %1574 = vmatprep.subr.mxu0 0.0
    %1575 = vmatpush2.msra.mxu0 0.0
    %1576 = vmatprep.subr.mxu0 0.0
    %1577 = vmatpush2.msra.mxu0 0.0
    %1578 = vmatprep.subr.mxu0 0.0
    %1579 = vmatpush2.msra.mxu0 0.0
    %1580 = vmatprep.subr.mxu0 0.0
    %1581 = vmatpush2.msra.mxu0 0.0
    %1582 = vmatprep.subr.mxu0 0.0
    %1583 = vmatpush2.msra.mxu0 0.0
    %1584 = vmatprep.subr.mxu0 0.0
    %1585 = vmatpush2.msra.mxu0 0.0
    %1586 = vmatprep.subr.mxu0 0.0
    %1587 = vmatpush2.msra.mxu0 0.0
    %1588 = vmatprep.subr.mxu0 0.0
    %1589 = vmatpush2.msra.mxu0 0.0
    %1590 = vmatprep.mubr.f32.mxu0 0.0
    %1591 = vmatmul.mubr.f32.gmra.mxu0 %v1515
    %v1592 = vpop.f32.mrf.mxu0
    %v1593 = vadd.f32 %v1497, %v1592
    %v1594 = vpop.f32.mrf.mxu0
    %1595 = vmatprep.mubr.f32.mxu0 0.0
    %1596 = vmatmul.mubr.f32.gmra.mxu0 %v1518
    %v1597 = vpop.f32.mrf.mxu0
    %v1598 = vadd.f32 %v1502, %v1597
    %v1599 = vpop.f32.mrf.mxu0
    %1600 = vmatprep.mubr.f32.mxu0 0.0
    %1601 = vmatmul.mubr.f32.gmra.mxu0 %v1521
    %v1602 = vpop.f32.mrf.mxu0
    %v1603 = vadd.f32 %v1507, %v1602
    %v1604 = vpop.f32.mrf.mxu0
    %1605 = vmatprep.mubr.f32.mxu0 0.0
    %1606 = vmatmul.mubr.f32.gmra.mxu0 %v1524
    %v1607 = vpop.f32.mrf.mxu0
    %v1608 = vadd.f32 %v1512, %v1607
    %v1609 = vpop.f32.mrf.mxu0
    %1610 = vdwg.mxu0
    %v1611 = vmax.f32 %v1593, 0.0
    %v1612 = vmax.f32 %v1598, 0.0
    %v1613 = vmax.f32 %v1603, 0.0
    %v1614 = vmax.f32 %v1608, 0.0
    %v1615 = vld [vmem:[%s10] sm:$0xff]
    %v1616 = vld [vmem:[%s10 + $0x8] sm:$0xff]
    %v1617 = vld [vmem:[%s10 + $0x10] sm:$0xff]
    %v1618 = vld [vmem:[%s10 + $0x18] sm:$0xff]
    %v1619 = vld [vmem:[%s11] sm:$0xff]
    %v1620 = vld [vmem:[%s11 + $0x8] sm:$0xff]
    %v1621 = vld [vmem:[%s11 + $0x10] sm:$0xff]
    %v1622 = vld [vmem:[%s11 + $0x18] sm:$0xff]
    %1624 = vset.pattern.permute.xlu0 0
    %1625 = vperm.xlu0 %1624, %v1619
    %v1626 = vpop.permute.xlu0 %1625
    %1629 = vset.pattern.permute.xlu0 0
    %1630 = vperm.xlu0 %1629, %v1620
    %v1631 = vpop.permute.xlu0 %1630
    %1634 = vset.pattern.permute.xlu0 0
    %1635 = vperm.xlu0 %1634, %v1621
    %v1636 = vpop.permute.xlu0 %1635
    %1639 = vset.pattern.permute.xlu0 0
    %1640 = vperm.xlu0 %1639, %v1622
    %v1641 = vpop.permute.xlu0 %1640
    %v1644 = vsel %vm524, %v1615, 0
    %v1647 = vsel %vm524, %v1616, 0
    %v1650 = vsel %vm524, %v1617, 0
    %v1653 = vsel %vm524, %v1618, 0
    %1655 = vmatprep.subr.mxu0 0.0
    %1656 = vmatpush1.msra.mxu0 0.0
    %1657 = vmatprep.subr.mxu0 0.0
    %1658 = vmatpush1.msra.mxu0 0.0
    %1659 = vmatprep.subr.mxu0 0.0
    %1660 = vmatpush1.msra.mxu0 0.0
    %1661 = vmatprep.subr.mxu0 0.0
    %1662 = vmatpush1.msra.mxu0 0.0
    %1663 = vmatprep.subr.mxu0 0.0
    %1664 = vmatpush1.msra.mxu0 0.0
    %1665 = vmatprep.subr.mxu0 0.0
    %1666 = vmatpush1.msra.mxu0 0.0
    %1667 = vmatprep.subr.mxu0 0.0
    %1668 = vmatpush1.msra.mxu0 0.0
    %1669 = vmatprep.subr.mxu0 0.0
    %1670 = vmatpush1.msra.mxu0 0.0
    %1671 = vmatprep.subr.mxu0 0.0
    %1672 = vmatpush1.msra.mxu0 0.0
    %1673 = vmatprep.subr.mxu0 0.0
    %1674 = vmatpush1.msra.mxu0 0.0
    %1675 = vmatprep.subr.mxu0 0.0
    %1676 = vmatpush1.msra.mxu0 0.0
    %1677 = vmatprep.subr.mxu0 0.0
    %1678 = vmatpush1.msra.mxu0 0.0
    %1679 = vmatprep.subr.mxu0 0.0
    %1680 = vmatpush1.msra.mxu0 %v1614
    %1681 = vmatprep.subr.mxu0 0.0
    %1682 = vmatpush1.msra.mxu0 %v1613
    %1683 = vmatprep.subr.mxu0 0.0
    %1684 = vmatpush1.msra.mxu0 %v1612
    %1685 = vmatprep.subr.mxu0 0.0
    %1686 = vmatpush1.msra.mxu0 %v1611
    %1687 = vmatprep.subr.mxu0 0.0
    %1688 = vmatpush2.msra.mxu0 0.0
    %1689 = vmatprep.subr.mxu0 0.0
    %1690 = vmatpush2.msra.mxu0 0.0
    %1691 = vmatprep.subr.mxu0 0.0
    %1692 = vmatpush2.msra.mxu0 0.0
    %1693 = vmatprep.subr.mxu0 0.0
    %1694 = vmatpush2.msra.mxu0 0.0
    %1695 = vmatprep.subr.mxu0 0.0
    %1696 = vmatpush2.msra.mxu0 0.0
    %1697 = vmatprep.subr.mxu0 0.0
    %1698 = vmatpush2.msra.mxu0 0.0
    %1699 = vmatprep.subr.mxu0 0.0
    %1700 = vmatpush2.msra.mxu0 0.0
    %1701 = vmatprep.subr.mxu0 0.0
    %1702 = vmatpush2.msra.mxu0 0.0
    %1703 = vmatprep.subr.mxu0 0.0
    %1704 = vmatpush2.msra.mxu0 0.0
    %1705 = vmatprep.subr.mxu0 0.0
    %1706 = vmatpush2.msra.mxu0 0.0
    %1707 = vmatprep.subr.mxu0 0.0
    %1708 = vmatpush2.msra.mxu0 0.0
    %1709 = vmatprep.subr.mxu0 0.0
    %1710 = vmatpush2.msra.mxu0 0.0
    %1711 = vmatprep.subr.mxu0 0.0
    %1712 = vmatpush2.msra.mxu0 0.0
    %1713 = vmatprep.subr.mxu0 0.0
    %1714 = vmatpush2.msra.mxu0 0.0
    %1715 = vmatprep.subr.mxu0 0.0
    %1716 = vmatpush2.msra.mxu0 0.0
    %1717 = vmatprep.subr.mxu0 0.0
    %1718 = vmatpush2.msra.mxu0 0.0
    %1719 = vmatprep.mubr.f32.mxu0 0.0
    %1720 = vmatmul.mubr.f32.gmra.mxu0 %v1644
    %v1721 = vpop.f32.mrf.mxu0
    %v1722 = vadd.f32 %v1626, %v1721
    %v1723 = vpop.f32.mrf.mxu0
    %1724 = vmatprep.mubr.f32.mxu0 0.0
    %1725 = vmatmul.mubr.f32.gmra.mxu0 %v1647
    %v1726 = vpop.f32.mrf.mxu0
    %v1727 = vadd.f32 %v1631, %v1726
    %v1728 = vpop.f32.mrf.mxu0
    %1729 = vmatprep.mubr.f32.mxu0 0.0
    %1730 = vmatmul.mubr.f32.gmra.mxu0 %v1650
    %v1731 = vpop.f32.mrf.mxu0
    %v1732 = vadd.f32 %v1636, %v1731
    %v1733 = vpop.f32.mrf.mxu0
    %1734 = vmatprep.mubr.f32.mxu0 0.0
    %1735 = vmatmul.mubr.f32.gmra.mxu0 %v1653
    %v1736 = vpop.f32.mrf.mxu0
    %v1737 = vadd.f32 %v1641, %v1736
    %v1738 = vpop.f32.mrf.mxu0
    %1739 = vdwg.mxu0
    %v1740 = vld [vmem:[%s12] sm:$0xff]
    %v1741 = vld [vmem:[%s12 + $0x8] sm:$0xff]
    %v1742 = vld [vmem:[%s12 + $0x10] sm:$0xff]
    %v1743 = vld [vmem:[%s12 + $0x18] sm:$0xff]
    %v1744 = vld [vmem:[%s13] sm:$0xff]
    %v1745 = vld [vmem:[%s13 + $0x8] sm:$0xff]
    %v1746 = vld [vmem:[%s13 + $0x10] sm:$0xff]
    %v1747 = vld [vmem:[%s13 + $0x18] sm:$0xff]
    %1749 = vset.pattern.permute.xlu0 0
    %1750 = vperm.xlu0 %1749, %v1744
    %v1751 = vpop.permute.xlu0 %1750
    %1754 = vset.pattern.permute.xlu0 0
    %1755 = vperm.xlu0 %1754, %v1745
    %v1756 = vpop.permute.xlu0 %1755
    %1759 = vset.pattern.permute.xlu0 0
    %1760 = vperm.xlu0 %1759, %v1746
    %v1761 = vpop.permute.xlu0 %1760
    %1764 = vset.pattern.permute.xlu0 0
    %1765 = vperm.xlu0 %1764, %v1747
    %v1766 = vpop.permute.xlu0 %1765
    %v1769 = vsel %vm524, %v1740, 0
    %v1772 = vsel %vm524, %v1741, 0
    %v1775 = vsel %vm524, %v1742, 0
    %v1778 = vsel %vm524, %v1743, 0
    %1780 = vmatprep.subr.mxu0 0.0
    %1781 = vmatpush1.msra.mxu0 0.0
    %1782 = vmatprep.subr.mxu0 0.0
    %1783 = vmatpush1.msra.mxu0 0.0
    %1784 = vmatprep.subr.mxu0 0.0
    %1785 = vmatpush1.msra.mxu0 0.0
    %1786 = vmatprep.subr.mxu0 0.0
    %1787 = vmatpush1.msra.mxu0 0.0
    %1788 = vmatprep.subr.mxu0 0.0
    %1789 = vmatpush1.msra.mxu0 0.0
    %1790 = vmatprep.subr.mxu0 0.0
    %1791 = vmatpush1.msra.mxu0 0.0
    %1792 = vmatprep.subr.mxu0 0.0
    %1793 = vmatpush1.msra.mxu0 0.0
    %1794 = vmatprep.subr.mxu0 0.0
    %1795 = vmatpush1.msra.mxu0 0.0
    %1796 = vmatprep.subr.mxu0 0.0
    %1797 = vmatpush1.msra.mxu0 0.0
    %1798 = vmatprep.subr.mxu0 0.0
    %1799 = vmatpush1.msra.mxu0 0.0
    %1800 = vmatprep.subr.mxu0 0.0
    %1801 = vmatpush1.msra.mxu0 0.0
    %1802 = vmatprep.subr.mxu0 0.0
    %1803 = vmatpush1.msra.mxu0 0.0
    %1804 = vmatprep.subr.mxu0 0.0
    %1805 = vmatpush1.msra.mxu0 %v1614
    %1806 = vmatprep.subr.mxu0 0.0
    %1807 = vmatpush1.msra.mxu0 %v1613
    %1808 = vmatprep.subr.mxu0 0.0
    %1809 = vmatpush1.msra.mxu0 %v1612
    %1810 = vmatprep.subr.mxu0 0.0
    %1811 = vmatpush1.msra.mxu0 %v1611
    %1812 = vmatprep.subr.mxu0 0.0
    %1813 = vmatpush2.msra.mxu0 0.0
    %1814 = vmatprep.subr.mxu0 0.0
    %1815 = vmatpush2.msra.mxu0 0.0
    %1816 = vmatprep.subr.mxu0 0.0
    %1817 = vmatpush2.msra.mxu0 0.0
    %1818 = vmatprep.subr.mxu0 0.0
    %1819 = vmatpush2.msra.mxu0 0.0
    %1820 = vmatprep.subr.mxu0 0.0
    %1821 = vmatpush2.msra.mxu0 0.0
    %1822 = vmatprep.subr.mxu0 0.0
    %1823 = vmatpush2.msra.mxu0 0.0
    %1824 = vmatprep.subr.mxu0 0.0
    %1825 = vmatpush2.msra.mxu0 0.0
    %1826 = vmatprep.subr.mxu0 0.0
    %1827 = vmatpush2.msra.mxu0 0.0
    %1828 = vmatprep.subr.mxu0 0.0
    %1829 = vmatpush2.msra.mxu0 0.0
    %1830 = vmatprep.subr.mxu0 0.0
    %1831 = vmatpush2.msra.mxu0 0.0
    %1832 = vmatprep.subr.mxu0 0.0
    %1833 = vmatpush2.msra.mxu0 0.0
    %1834 = vmatprep.subr.mxu0 0.0
    %1835 = vmatpush2.msra.mxu0 0.0
    %1836 = vmatprep.subr.mxu0 0.0
    %1837 = vmatpush2.msra.mxu0 0.0
    %1838 = vmatprep.subr.mxu0 0.0
    %1839 = vmatpush2.msra.mxu0 0.0
    %1840 = vmatprep.subr.mxu0 0.0
    %1841 = vmatpush2.msra.mxu0 0.0
    %1842 = vmatprep.subr.mxu0 0.0
    %1843 = vmatpush2.msra.mxu0 0.0
    %1844 = vmatprep.mubr.f32.mxu0 0.0
    %1845 = vmatmul.mubr.f32.gmra.mxu0 %v1769
    %v1846 = vpop.f32.mrf.mxu0
    %v1847 = vadd.f32 %v1751, %v1846
    %v1848 = vpop.f32.mrf.mxu0
    %1849 = vmatprep.mubr.f32.mxu0 0.0
    %1850 = vmatmul.mubr.f32.gmra.mxu0 %v1772
    %v1851 = vpop.f32.mrf.mxu0
    %v1852 = vadd.f32 %v1756, %v1851
    %v1853 = vpop.f32.mrf.mxu0
    %1854 = vmatprep.mubr.f32.mxu0 0.0
    %1855 = vmatmul.mubr.f32.gmra.mxu0 %v1775
    %v1856 = vpop.f32.mrf.mxu0
    %v1857 = vadd.f32 %v1761, %v1856
    %v1858 = vpop.f32.mrf.mxu0
    %1859 = vmatprep.mubr.f32.mxu0 0.0
    %1860 = vmatmul.mubr.f32.gmra.mxu0 %v1778
    %v1861 = vpop.f32.mrf.mxu0
    %v1862 = vadd.f32 %v1766, %v1861
    %v1863 = vpop.f32.mrf.mxu0
    %1864 = vdwg.mxu0
    %v1865 = vsub.f32 0.0, %v1847
    %v1866 = vsub.f32 0.0, %v1852
    %v1867 = vsub.f32 0.0, %v1857
    %v1868 = vsub.f32 0.0, %v1862
    %v1869 = vmul.f32 %v1865, 1.442695
    %v1870 = vpow.pop %v1869
    %v1871 = vmul.f32 %v1866, 1.442695
    %v1872 = vpow.pop %v1871
    %v1873 = vmul.f32 %v1867, 1.442695
    %v1874 = vpow.pop %v1873
    %v1875 = vmul.f32 %v1868, 1.442695
    %v1876 = vpow.pop %v1875
    %v1877 = vadd.f32 %v1870, 1.0
    %v1878 = vadd.f32 %v1872, 1.0
    %v1879 = vadd.f32 %v1874, 1.0
    %v1880 = vadd.f32 %v1876, 1.0
    %v1881 = vrcp.pop %v1877
    %v1882 = vmul.f32 1.0, %v1881
    %v1883 = vrcp.pop %v1878
    %v1884 = vmul.f32 1.0, %v1883
    %v1885 = vrcp.pop %v1879
    %v1886 = vmul.f32 1.0, %v1885
    %v1887 = vrcp.pop %v1880
    %v1888 = vmul.f32 1.0, %v1887
    %vm1889 = vcmask 31744
    %1890 = vst.msk [vmem:[%s14] sm:$0xff] %vm1889, %v1722
    %1891 = vst.msk [vmem:[%s14 + $0x8] sm:$0xff] %vm1889, %v1727
    %1892 = vst.msk [vmem:[%s14 + $0x10] sm:$0xff] %vm1889, %v1732
    %1893 = vst.msk [vmem:[%s14 + $0x18] sm:$0xff] %vm1889, %v1737
    %v1894 = vmul.f32 %v1882, 0.9
    %v1895 = vmul.f32 %v1884, 0.9
    %v1896 = vmul.f32 %v1886, 0.9
    %v1897 = vmul.f32 %v1888, 0.9
    %v1898 = vadd.f32 %v1894, 0.1
    %v1899 = vadd.f32 %v1895, 0.1
    %v1900 = vadd.f32 %v1896, 0.1
    %v1901 = vadd.f32 %v1897, 0.1
    %1902 = vst.msk [vmem:[%s15] sm:$0xff] %vm1889, %v1898
    %1903 = vst.msk [vmem:[%s15 + $0x8] sm:$0xff] %vm1889, %v1899
    %1904 = vst.msk [vmem:[%s15 + $0x10] sm:$0xff] %vm1889, %v1900
    %1905 = vst.msk [vmem:[%s15 + $0x18] sm:$0xff] %vm1889, %v1901
    // Predicated region
    $region90: #{img_neural_process_forward.2} parent=1 // pred_check
      _
    $region91: #{img_neural_process_forward.2} parent=1 // pred_check_branch
      %1907 = sbr.rel (0) target = $region93
    $region92: #{img_neural_process_forward.2} parent=1 // pred_region
      _
    $region93: #{img_neural_process_forward.2} parent=1 // pred_fallthru
      _
    // Predicated region
    $region94: #{img_neural_process_forward.2} parent=1 // pred_check
      _
    $region95: #{img_neural_process_forward.2} parent=1 // pred_check_branch
      %1909 = sbr.rel (0) target = $region97
    $region96: #{img_neural_process_forward.2} parent=1 // pred_region
      _
    $region97: #{img_neural_process_forward.2} parent=1 // pred_fallthru
      _
    // Predicated region
    $region98: #{img_neural_process_forward.2} parent=1 // pred_check
      _
    $region99: #{img_neural_process_forward.2} parent=1 // pred_check_branch
      %1911 = sbr.rel (0) target = $region101
    $region100: #{img_neural_process_forward.2} parent=1 // pred_region
      _
    $region101: #{img_neural_process_forward.2} parent=1 // pred_fallthru
      _
    // Predicated region
    $region102: #{img_neural_process_forward.2} parent=1 // pred_check
      _
    $region103: #{img_neural_process_forward.2} parent=1 // pred_check_branch
      %1913 = sbr.rel (0) target = $region105
    $region104: #{img_neural_process_forward.2} parent=1 // pred_region
      _
    $region105: #{img_neural_process_forward.2} parent=1 // pred_fallthru
      _
    %1914 = vsyncpa [#allocation3], 1
    %1915 = vsyncpa [#allocation5], 1
    %1916 = vsyncpa [#allocation8], 1
    %1917 = vsyncpa [#allocation11], 1
    %1918 = vsyncpa [#allocation14], 1

</llo_original>
